<compile_context>
chip_gen: v7x
topology: tpu7x:2x2x1
jax: 0.10.0
libtpu: 0.0.40
codegen_flags: <defaults>
</compile_context>

<pallas_src>
import jax
import jax.numpy as jnp
from jax import lax
from jax.experimental import pallas as pl
from jax.experimental.pallas import tpu as pltpu

NODE_DIM = 2
EDGE_DIM = 16
HIDDEN = 64
HEADS = 4

# rows of the packed [16, 256] parameter-vector slab
_R_NODE_B, _R_NODE_LN_W, _R_NODE_LN_B = 0, 1, 2
_R_CONV1_B, _R_NORM1_W, _R_NORM1_B = 3, 4, 5
_R_CONV2_B, _R_NORM2_W, _R_NORM2_B = 6, 7, 8
_R_MLP_B1 = 9
_R_EDGE_W1, _R_EDGE_B1, _R_EDGE_B2, _R_EDGE_LN_W, _R_EDGE_LN_B = 10, 11, 12, 13, 14
_R_MLP_B2 = 15
_PVEC_ROWS = 16


def _leaky(x, slope):
    return jnp.where(x >= 0, x, slope * x)


def _layernorm(x, w, b, eps=1e-5):
    mu = jnp.mean(x, axis=-1, keepdims=True)
    var = jnp.mean((x - mu) ** 2, axis=-1, keepdims=True)
    return (x - mu) * lax.rsqrt(var + eps) * w + b


# ----------------- single fused kernel -----------------
def fused_tsp_gnn_kernel(row_e_ref, col_e_ref, col_n_ref, x_ref, ea_ref,
                         wn_ref, we2_ref, watt_e_ref,
                         wlin1_ref, wsd1_ref, wlin2_ref, wsd2_ref,
                         wm1_ref, wm2_ref, hsel_ref, pvec_ref,
                         out_ref):
    f32 = jnp.float32
    bf16 = jnp.bfloat16
    N = x_ref.shape[0]
    E = ea_ref.shape[0]

    # ---- unpack the [16,256] vector-parameter slab (static slices) ----
    pv = pvec_ref[...]
    node_b    = pv[_R_NODE_B:_R_NODE_B + 1, :HIDDEN]
    node_ln_w = pv[_R_NODE_LN_W:_R_NODE_LN_W + 1, :HIDDEN]
    node_ln_b = pv[_R_NODE_LN_B:_R_NODE_LN_B + 1, :HIDDEN]
    conv1_b   = pv[_R_CONV1_B:_R_CONV1_B + 1, :]
    norm1_w   = pv[_R_NORM1_W:_R_NORM1_W + 1, :]
    norm1_b   = pv[_R_NORM1_B:_R_NORM1_B + 1, :]
    conv2_b   = pv[_R_CONV2_B:_R_CONV2_B + 1, :HIDDEN]
    norm2_w   = pv[_R_NORM2_W:_R_NORM2_W + 1, :HIDDEN]
    norm2_b   = pv[_R_NORM2_B:_R_NORM2_B + 1, :HIDDEN]
    mlp_b1    = pv[_R_MLP_B1:_R_MLP_B1 + 1, :HIDDEN]
    edge_w1   = pv[_R_EDGE_W1:_R_EDGE_W1 + 1, :32]
    edge_b1   = pv[_R_EDGE_B1:_R_EDGE_B1 + 1, :32]
    edge_b2   = pv[_R_EDGE_B2:_R_EDGE_B2 + 1, :EDGE_DIM]
    edge_ln_w = pv[_R_EDGE_LN_W:_R_EDGE_LN_W + 1, :EDGE_DIM]
    edge_ln_b = pv[_R_EDGE_LN_B:_R_EDGE_LN_B + 1, :EDGE_DIM]
    mlp_b2    = pv[_R_MLP_B2:_R_MLP_B2 + 1, :1]

    # ---- incidence matrices built in VMEM from int32 indices (bf16 for MXU) ----
    iota_en = lax.broadcasted_iota(jnp.int32, (E, N), 1)
    row_oh_b = iota_en == row_e_ref[...]            # [E,N] bool one-hot(src)
    col_oh_b = iota_en == col_e_ref[...]            # [E,N] bool one-hot(dst)
    row_oh = row_oh_b.astype(bf16)                  # gather matmuls
    col_oh = col_oh_b.astype(bf16)
    iota_ne = lax.broadcasted_iota(jnp.int32, (N, E), 0)
    colT_b = iota_ne == col_n_ref[...]              # [N,E] bool dst membership
    colT = colT_b.astype(bf16)                      # scatter-add matmuls
    eye_b = (lax.broadcasted_iota(jnp.int32, (N, N), 0) ==
             lax.broadcasted_iota(jnp.int32, (N, N), 1))

    deg = jnp.sum(colT_b.astype(f32), axis=1, keepdims=True)   # [N,1] in-degree
    deg_inv = 1.0 / jnp.maximum(deg, 1.0)

    hsel = hsel_ref[...]                            # [HEADS, HEADS*HIDDEN] block-diag ones

    # ---- node encoder: Linear(2,64) -> LeakyReLU(0.2) -> LayerNorm ----
    x = x_ref[...]
    wn = wn_ref[...]
    h = x[:, 0:1] * wn[0:1, :] + x[:, 1:2] * wn[1:2, :] + node_b
    h = _layernorm(_leaky(h, 0.2), node_ln_w, node_ln_b)                     # [N,64]

    # ---- edge encoder: Linear(1,32) -> LeakyReLU(0.2) -> Linear(32,16) -> LayerNorm ----
    e1 = _leaky(ea_ref[...] * edge_w1 + edge_b1, 0.2)                        # [E,32]
    e_enc = jnp.dot(e1, we2_ref[...], preferred_element_type=f32) + edge_b2
    e_enc = _layernorm(e_enc, edge_ln_w, edge_ln_b)                          # [E,16]

    # edge-attention logits for BOTH convs in one matmul (att_edge folded into lin_edge)
    a_e_both = jnp.dot(e_enc, watt_e_ref[...], preferred_element_type=f32)   # [E, H1+H2]
    # self-loop edge attr = mean of incoming encoded attrs (fill_value='mean');
    # taking the mean on the logits is valid because lin_edge/att_edge are linear.
    a_e_self_both = jnp.dot(colT, a_e_both.astype(bf16),
                            preferred_element_type=f32) * deg_inv            # [N, H1+H2]

    def segment_max(alpha_e, alpha_s, heads):
        # Per-destination max over incoming edges (exact PyG segment-softmax
        # shift), done as `heads` 2-D masked maxes — no [N,E,H] intermediate.
        cols = []
        for hh in range(heads):
            masked = jnp.where(col_oh_b, alpha_e[:, hh:hh + 1],
                               jnp.float32(-1e30))                           # [E,N]
            m_row = jnp.max(masked, axis=0, keepdims=True)                   # [1,N]
            # [1,N] -> [N,1] without a transpose op: select the diagonal of the
            # sublane-broadcast and reduce over lanes (N is small).
            cols.append(jnp.sum(jnp.where(eye_b, m_row, 0.0),
                                axis=1, keepdims=True))                      # [N,1]
        m_seg = cols[0] if heads == 1 else jnp.concatenate(cols, axis=1)     # [N,H]
        return jnp.maximum(m_seg, alpha_s)

    def gat_layer(xin, a_e, a_e_self, wlin, wsd, bias, heads, C):
        """Head-batched GATConv (eval mode).  concat (conv1) and heads=1 mean
        (conv2) both reduce to returning the [N, heads*C] block as-is."""
        HC = heads * C
        xp = jnp.dot(xin, wlin, preferred_element_type=f32)                  # [N,HC]
        a_sd = jnp.dot(xin, wsd, preferred_element_type=f32)                 # [N,2H]
        a_s = a_sd[:, :heads]
        a_d = a_sd[:, heads:]

        # gathers to edges: bf16 one-hot matmuls, f32 accumulation
        x_src_e = jnp.dot(row_oh, xp.astype(bf16), preferred_element_type=f32)   # [E,HC]
        a_s_e = jnp.dot(row_oh, a_s.astype(bf16), preferred_element_type=f32)    # [E,H]
        a_d_e = jnp.dot(col_oh, a_d.astype(bf16), preferred_element_type=f32)    # [E,H]

        alpha_e = _leaky(a_s_e + a_d_e + a_e, 0.2)                           # [E,H]
        alpha_s = _leaky(a_s + a_d + a_e_self, 0.2)                          # [N,H] self-loop

        m_node = segment_max(alpha_e, alpha_s, heads)                        # [N,H]
        # round the shift to bf16 ONCE and use it on numerator and denominator
        # consistently -> the softmax itself stays exact.
        m_bf = m_node.astype(bf16)
        exp_s = jnp.exp(alpha_s - m_bf.astype(f32))                          # [N,H]
        m_e = jnp.dot(col_oh, m_bf, preferred_element_type=f32)              # [E,H]
        exp_e = jnp.exp(alpha_e - m_e)                                       # [E,H]

        if heads == 1:
            exp_e_w, exp_s_w = exp_e, exp_s
        else:
            # broadcast per-head scalars to per-feature width on the MXU (K=4, exact 0/1)
            exp_e_w = jnp.dot(exp_e, hsel, preferred_element_type=f32)       # [E,HC]
            exp_s_w = jnp.dot(exp_s, hsel, preferred_element_type=f32)       # [N,HC]

        # scatter-add: 128-lane-aligned message matmul + tiny denominator matmul
        scat_msg = jnp.dot(colT, (exp_e_w * x_src_e).astype(bf16),
                           preferred_element_type=f32)                       # [N,HC]
        scat_den = jnp.dot(colT, exp_e.astype(bf16),
                           preferred_element_type=f32)                       # [N,H]
        agg = scat_msg + exp_s_w * xp                                        # [N,HC]
        denom = scat_den + exp_s                                             # [N,H], >= ~1
        inv_d = pl.reciprocal(denom, approx=True)                            # EUP slot
        if heads == 1:
            inv_d_w = inv_d
        else:
            inv_d_w = jnp.dot(inv_d, hsel, preferred_element_type=f32)       # [N,HC]
        return agg * inv_d_w + bias

    # ---- conv1 (4 heads, concat) -> LeakyReLU(0.1) -> LayerNorm ----
    g1 = gat_layer(h, a_e_both[:, :HEADS], a_e_self_both[:, :HEADS],
                   wlin1_ref[...], wsd1_ref[...], conv1_b, HEADS, HIDDEN)
    h1 = _layernorm(_leaky(g1, 0.1), norm1_w, norm1_b)                       # [N,256]

    # ---- conv2 (1 head, mean == identity) -> LeakyReLU(0.1) -> LayerNorm ----
    g2 = gat_layer(h1, a_e_both[:, HEADS:], a_e_self_both[:, HEADS:],
                   wlin2_ref[...], wsd2_ref[...], conv2_b, 1, HIDDEN)
    h2 = _layernorm(_leaky(g2, 0.1), norm2_w, norm2_b)                       # [N,64]

    # ---- edge MLP, re-associated onto nodes:
    #   hmid = row_oh @ (h2 @ W1a) + col_oh @ (h2 @ W1b) + e_enc @ W1c + b1
    p_row = jnp.dot(h2, wm1_ref[0:HIDDEN, :], preferred_element_type=f32)             # [N,64]
    p_col = jnp.dot(h2, wm1_ref[HIDDEN:2 * HIDDEN, :], preferred_element_type=f32)    # [N,64]
    p_edge = jnp.dot(e_enc, wm1_ref[2 * HIDDEN:2 * HIDDEN + EDGE_DIM, :],
                     preferred_element_type=f32)                                       # [E,64]
    hmid = _leaky(jnp.dot(row_oh, p_row.astype(bf16), preferred_element_type=f32)
                  + jnp.dot(col_oh, p_col.astype(bf16), preferred_element_type=f32)
                  + p_edge + mlp_b1, 0.1)                                              # [E,64]
    # lane-dense output: Linear(64,1) zero-padded to 128 lanes; logits in column 0.
    out_ref[...] = jnp.dot(hmid, wm2_ref[...], preferred_element_type=f32) + mlp_b2


# ----------------- wrapper -----------------
def _head_block_diag(att):
    """att: [H, C] -> block-diag [H*C, H] so (W @ blk)[:, h] = W[:, hC:(h+1)C] @ att[h]."""
    heads, C = att.shape
    m = jnp.zeros((heads * C, heads), jnp.float32)
    for hh in range(heads):
        m = m.at[hh * C:(hh + 1) * C, hh].set(att[hh])
    return m


@jax.jit
def tsp_gnn_forward(x, edge_attr, edge_index, p):
    E = edge_index.shape[1]
    row_e = edge_index[0].astype(jnp.int32)[:, None]        # [E,1]
    col_e = edge_index[1].astype(jnp.int32)[:, None]        # [E,1]
    col_n = edge_index[1].astype(jnp.int32)[None, :]        # [1,E]
    ea = edge_attr[:, None].astype(jnp.float32)             # unsqueeze(1) -> [E,1]

    # fold attention vectors into small side matrices (kept separate from the
    # main projections so the big matmuls stay 128-lane aligned)
    wsd1 = jnp.concatenate(
        [p["conv1_lin_t"] @ _head_block_diag(p["conv1_att_src"]),
         p["conv1_lin_t"] @ _head_block_diag(p["conv1_att_dst"])], axis=1)   # [64, 8]
    wsd2 = jnp.concatenate(
        [p["conv2_lin_t"] @ _head_block_diag(p["conv2_att_src"]),
         p["conv2_lin_t"] @ _head_block_diag(p["conv2_att_dst"])], axis=1)   # [256, 2]
    watt_e = jnp.concatenate(
        [p["conv1_edge_t"] @ _head_block_diag(p["conv1_att_edge"]),
         p["conv2_edge_t"] @ _head_block_diag(p["conv2_att_edge"])], axis=1)  # [16, 5]

    # head-broadcast selector, hoisted out of the kernel's layer function
    hsel = jnp.repeat(jnp.eye(HEADS, dtype=jnp.float32), HIDDEN, axis=1)      # [4, 256]

    # lane-dense final linear: pad Linear(64,1) to 128 output lanes
    wm2_pad = jnp.zeros((HIDDEN, 128), jnp.float32).at[:, 0:1].set(p["mlp_w2_t"])

    # pack every [1,K] bias / LayerNorm vector into one slab (one DMA descriptor)
    def put(slab, r, v):
        v = v.reshape(-1)
        return slab.at[r, :v.shape[0]].set(v)

    pvec = jnp.zeros((_PVEC_ROWS, 256), jnp.float32)
    pvec = put(pvec, _R_NODE_B, p["node_b"])
    pvec = put(pvec, _R_NODE_LN_W, p["node_ln_w"])
    pvec = put(pvec, _R_NODE_LN_B, p["node_ln_b"])
    pvec = put(pvec, _R_CONV1_B, p["conv1_bias"])
    pvec = put(pvec, _R_NORM1_W, p["norm1_w"])
    pvec = put(pvec, _R_NORM1_B, p["norm1_b"])
    pvec = put(pvec, _R_CONV2_B, p["conv2_bias"])
    pvec = put(pvec, _R_NORM2_W, p["norm2_w"])
    pvec = put(pvec, _R_NORM2_B, p["norm2_b"])
    pvec = put(pvec, _R_MLP_B1, p["mlp_b1"])
    pvec = put(pvec, _R_EDGE_W1, p["edge_w1_t"])
    pvec = put(pvec, _R_EDGE_B1, p["edge_b1"])
    pvec = put(pvec, _R_EDGE_B2, p["edge_b2"])
    pvec = put(pvec, _R_EDGE_LN_W, p["edge_ln_w"])
    pvec = put(pvec, _R_EDGE_LN_B, p["edge_ln_b"])
    pvec = put(pvec, _R_MLP_B2, p["mlp_b2"])

    vm = pl.BlockSpec(memory_space=pltpu.MemorySpace.VMEM)
    out = pl.pallas_call(
        fused_tsp_gnn_kernel,
        out_shape=jax.ShapeDtypeStruct((E, 128), jnp.float32),
        in_specs=[vm] * 16,
        out_specs=vm,
    )(row_e, col_e, col_n, x.astype(jnp.float32), ea,
      p["node_w_t"], p["edge_w2_t"], watt_e,
      p["conv1_lin_t"], wsd1, p["conv2_lin_t"], wsd2,
      p["mlp_w1_t"], wm2_pad, hsel, pvec)

    return out[:, 0]                                          # .squeeze() -> [E]


# ----------------- deterministic parameter init -----------------
def build_params(key):
    keys = jax.random.split(key, 24)

    def w(k, shape, fan_in):
        return jax.random.normal(k, shape, jnp.float32) / jnp.sqrt(float(fan_in))

    p = {}
    # node encoder: Linear(2,64) + LayerNorm(64)
    p["node_w_t"] = w(keys[0], (NODE_DIM, HIDDEN), NODE_DIM)
    p["node_b"] = jnp.zeros((1, HIDDEN), jnp.float32)
    p["node_ln_w"] = jnp.ones((1, HIDDEN), jnp.float32)
    p["node_ln_b"] = jnp.zeros((1, HIDDEN), jnp.float32)
    # edge encoder: Linear(1,32) -> Linear(32,16) + LayerNorm(16)
    p["edge_w1_t"] = w(keys[1], (1, 32), 1)
    p["edge_b1"] = jnp.zeros((1, 32), jnp.float32)
    p["edge_w2_t"] = w(keys[2], (32, EDGE_DIM), 32)
    p["edge_b2"] = jnp.zeros((1, EDGE_DIM), jnp.float32)
    p["edge_ln_w"] = jnp.ones((1, EDGE_DIM), jnp.float32)
    p["edge_ln_b"] = jnp.zeros((1, EDGE_DIM), jnp.float32)
    # conv1: GATConv(64 -> 64, heads=4, concat=True, edge_dim=16)
    p["conv1_lin_t"] = w(keys[3], (HIDDEN, HEADS * HIDDEN), HIDDEN)
    p["conv1_att_src"] = 0.1 * jax.random.normal(keys[4], (HEADS, HIDDEN), jnp.float32)
    p["conv1_att_dst"] = 0.1 * jax.random.normal(keys[5], (HEADS, HIDDEN), jnp.float32)
    p["conv1_att_edge"] = 0.1 * jax.random.normal(keys[6], (HEADS, HIDDEN), jnp.float32)
    p["conv1_edge_t"] = w(keys[7], (EDGE_DIM, HEADS * HIDDEN), EDGE_DIM)
    p["conv1_bias"] = jnp.zeros((1, HEADS * HIDDEN), jnp.float32)
    p["norm1_w"] = jnp.ones((1, HEADS * HIDDEN), jnp.float32)
    p["norm1_b"] = jnp.zeros((1, HEADS * HIDDEN), jnp.float32)
    # conv2: GATConv(256 -> 64, heads=1, concat=False, edge_dim=16)
    p["conv2_lin_t"] = w(keys[8], (HEADS * HIDDEN, HIDDEN), HEADS * HIDDEN)
    p["conv2_att_src"] = 0.1 * jax.random.normal(keys[9], (1, HIDDEN), jnp.float32)
    p["conv2_att_dst"] = 0.1 * jax.random.normal(keys[10], (1, HIDDEN), jnp.float32)
    p["conv2_att_edge"] = 0.1 * jax.random.normal(keys[11], (1, HIDDEN), jnp.float32)
    p["conv2_edge_t"] = w(keys[12], (EDGE_DIM, HIDDEN), EDGE_DIM)
    p["conv2_bias"] = jnp.zeros((1, HIDDEN), jnp.float32)
    p["norm2_w"] = jnp.ones((1, HIDDEN), jnp.float32)
    p["norm2_b"] = jnp.zeros((1, HIDDEN), jnp.float32)
    # edge mlp: Linear(144,64) -> Linear(64,1)
    p["mlp_w1_t"] = w(keys[13], (2 * HIDDEN + EDGE_DIM, HIDDEN), 2 * HIDDEN + EDGE_DIM)
    p["mlp_b1"] = jnp.zeros((1, HIDDEN), jnp.float32)
    p["mlp_w2_t"] = w(keys[14], (HIDDEN, 1), HIDDEN)
    p["mlp_b2"] = jnp.zeros((1, 1), jnp.float32)
    return p


if __name__ == "__main__":
    key = jax.random.PRNGKey(0)
    k_coord, k_param = jax.random.split(key)

    # small TSP instance: 8 nodes, complete directed graph (no self loops)
    N = 8
    coords = jax.random.uniform(k_coord, (N, NODE_DIM), jnp.float32)   # data.x: [N, 2]
    rows, cols = [], []
    for i in range(N):
        for j in range(N):
            if i != j:
                rows.append(i)
                cols.append(j)
    edge_index = jnp.array([rows, cols], dtype=jnp.int32)              # [2, E], E = 56
    edge_attr = jnp.sqrt(jnp.sum(
        (coords[edge_index[0]] - coords[edge_index[1]]) ** 2, axis=1)) # [E] distances

    params = build_params(k_param)
    out = tsp_gnn_forward(coords, edge_attr, edge_index, params)
    out = jax.block_until_ready(out)
    assert out.shape == (edge_index.shape[1],)
    print("KERNEL_OK")
</pallas_src>

<mosaic_0001>
module attributes {stable_mosaic.version = 11 : i64} {
  func.func @fused_tsp_gnn_kernel(%arg0: memref<56x1xi32, #tpu.memory_space<vmem>>, %arg1: memref<56x1xi32, #tpu.memory_space<vmem>>, %arg2: memref<1x56xi32, #tpu.memory_space<vmem>>, %arg3: memref<8x2xf32, #tpu.memory_space<vmem>>, %arg4: memref<56x1xf32, #tpu.memory_space<vmem>>, %arg5: memref<2x64xf32, #tpu.memory_space<vmem>>, %arg6: memref<32x16xf32, #tpu.memory_space<vmem>>, %arg7: memref<16x5xf32, #tpu.memory_space<vmem>>, %arg8: memref<64x256xf32, #tpu.memory_space<vmem>>, %arg9: memref<64x8xf32, #tpu.memory_space<vmem>>, %arg10: memref<256x64xf32, #tpu.memory_space<vmem>>, %arg11: memref<256x2xf32, #tpu.memory_space<vmem>>, %arg12: memref<144x64xf32, #tpu.memory_space<vmem>>, %arg13: memref<64x128xf32, #tpu.memory_space<vmem>>, %arg14: memref<4x256xf32, #tpu.memory_space<vmem>>, %arg15: memref<16x256xf32, #tpu.memory_space<vmem>>, %arg16: memref<56x128xf32, #tpu.memory_space<vmem>>) attributes {dimension_semantics = [], scalar_prefetch = 0 : i64, scratch_operands = 0 : i64, tpu.core_type = #tpu.core_type<tc>} {
    %c0 = arith.constant 0 : index
    %c0_0 = arith.constant 0 : index
    %0 = vector.load %arg15[%c0, %c0_0] : memref<16x256xf32, #tpu.memory_space<vmem>>, vector<16x256xf32>
    %1 = vector.extract_strided_slice %0 {offsets = [0, 0], sizes = [1, 64], strides = [1, 1]} : vector<16x256xf32> to vector<1x64xf32>
    %2 = vector.extract_strided_slice %0 {offsets = [1, 0], sizes = [1, 64], strides = [1, 1]} : vector<16x256xf32> to vector<1x64xf32>
    %3 = vector.extract_strided_slice %0 {offsets = [2, 0], sizes = [1, 64], strides = [1, 1]} : vector<16x256xf32> to vector<1x64xf32>
    %4 = vector.extract_strided_slice %0 {offsets = [3, 0], sizes = [1, 256], strides = [1, 1]} : vector<16x256xf32> to vector<1x256xf32>
    %5 = vector.extract_strided_slice %0 {offsets = [4, 0], sizes = [1, 256], strides = [1, 1]} : vector<16x256xf32> to vector<1x256xf32>
    %6 = vector.extract_strided_slice %0 {offsets = [5, 0], sizes = [1, 256], strides = [1, 1]} : vector<16x256xf32> to vector<1x256xf32>
    %7 = vector.extract_strided_slice %0 {offsets = [6, 0], sizes = [1, 64], strides = [1, 1]} : vector<16x256xf32> to vector<1x64xf32>
    %8 = vector.extract_strided_slice %0 {offsets = [7, 0], sizes = [1, 64], strides = [1, 1]} : vector<16x256xf32> to vector<1x64xf32>
    %9 = vector.extract_strided_slice %0 {offsets = [8, 0], sizes = [1, 64], strides = [1, 1]} : vector<16x256xf32> to vector<1x64xf32>
    %10 = vector.extract_strided_slice %0 {offsets = [9, 0], sizes = [1, 64], strides = [1, 1]} : vector<16x256xf32> to vector<1x64xf32>
    %11 = vector.extract_strided_slice %0 {offsets = [10, 0], sizes = [1, 32], strides = [1, 1]} : vector<16x256xf32> to vector<1x32xf32>
    %12 = vector.extract_strided_slice %0 {offsets = [11, 0], sizes = [1, 32], strides = [1, 1]} : vector<16x256xf32> to vector<1x32xf32>
    %13 = vector.extract_strided_slice %0 {offsets = [12, 0], sizes = [1, 16], strides = [1, 1]} : vector<16x256xf32> to vector<1x16xf32>
    %14 = vector.extract_strided_slice %0 {offsets = [13, 0], sizes = [1, 16], strides = [1, 1]} : vector<16x256xf32> to vector<1x16xf32>
    %15 = vector.extract_strided_slice %0 {offsets = [14, 0], sizes = [1, 16], strides = [1, 1]} : vector<16x256xf32> to vector<1x16xf32>
    %16 = vector.extract_strided_slice %0 {offsets = [15, 0], sizes = [1, 1], strides = [1, 1]} : vector<16x256xf32> to vector<1x1xf32>
    %17 = tpu.iota {dimensions = array<i32: 1>} : vector<56x8xi32>
    %c0_1 = arith.constant 0 : index
    %c0_2 = arith.constant 0 : index
    %18 = vector.load %arg0[%c0_1, %c0_2] : memref<56x1xi32, #tpu.memory_space<vmem>>, vector<56x1xi32>
    %19 = vector.broadcast %18 : vector<56x1xi32> to vector<56x8xi32>
    %20 = arith.cmpi eq, %17, %19 : vector<56x8xi32>
    %c0_3 = arith.constant 0 : index
    %c0_4 = arith.constant 0 : index
    %21 = vector.load %arg1[%c0_3, %c0_4] : memref<56x1xi32, #tpu.memory_space<vmem>>, vector<56x1xi32>
    %22 = vector.broadcast %21 : vector<56x1xi32> to vector<56x8xi32>
    %23 = arith.cmpi eq, %17, %22 : vector<56x8xi32>
    %24 = arith.extui %20 : vector<56x8xi1> to vector<56x8xi32>
    %25 = arith.sitofp %24 : vector<56x8xi32> to vector<56x8xf32>
    %26 = arith.truncf %25 : vector<56x8xf32> to vector<56x8xbf16>
    %27 = arith.extui %23 : vector<56x8xi1> to vector<56x8xi32>
    %28 = arith.sitofp %27 : vector<56x8xi32> to vector<56x8xf32>
    %29 = arith.truncf %28 : vector<56x8xf32> to vector<56x8xbf16>
    %30 = tpu.iota {dimensions = array<i32: 0>} : vector<8x56xi32>
    %c0_5 = arith.constant 0 : index
    %c0_6 = arith.constant 0 : index
    %31 = vector.load %arg2[%c0_5, %c0_6] : memref<1x56xi32, #tpu.memory_space<vmem>>, vector<1x56xi32>
    %32 = vector.broadcast %31 : vector<1x56xi32> to vector<8x56xi32>
    %33 = arith.cmpi eq, %30, %32 : vector<8x56xi32>
    %34 = arith.extui %33 : vector<8x56xi1> to vector<8x56xi32>
    %35 = arith.sitofp %34 : vector<8x56xi32> to vector<8x56xf32>
    %36 = arith.truncf %35 : vector<8x56xf32> to vector<8x56xbf16>
    %37 = tpu.iota {dimensions = array<i32: 0>} : vector<8x8xi32>
    %38 = tpu.iota {dimensions = array<i32: 1>} : vector<8x8xi32>
    %39 = arith.cmpi eq, %37, %38 : vector<8x8xi32>
    %40 = arith.extui %33 : vector<8x56xi1> to vector<8x56xi32>
    %41 = arith.sitofp %40 : vector<8x56xi32> to vector<8x56xf32>
    %cst = arith.constant dense<0.000000e+00> : vector<8xf32>
    %42 = vector.multi_reduction <add>, %41, %cst [1] : vector<8x56xf32> to vector<8xf32>
    %43 = vector.shape_cast %42 : vector<8xf32> to vector<8x1xf32>
    %cst_7 = arith.constant 1.000000e+00 : f32
    %44 = vector.broadcast %cst_7 : f32 to vector<8x1xf32>
    %45 = arith.maximumf %43, %44 : vector<8x1xf32>
    %cst_8 = arith.constant 1.000000e+00 : f32
    %46 = vector.broadcast %cst_8 : f32 to vector<8x1xf32>
    %47 = arith.divf %46, %45 : vector<8x1xf32>
    %c0_9 = arith.constant 0 : index
    %c0_10 = arith.constant 0 : index
    %48 = vector.load %arg14[%c0_9, %c0_10] : memref<4x256xf32, #tpu.memory_space<vmem>>, vector<4x256xf32>
    %c0_11 = arith.constant 0 : index
    %c0_12 = arith.constant 0 : index
    %49 = vector.load %arg3[%c0_11, %c0_12] : memref<8x2xf32, #tpu.memory_space<vmem>>, vector<8x2xf32>
    %c0_13 = arith.constant 0 : index
    %c0_14 = arith.constant 0 : index
    %50 = vector.load %arg5[%c0_13, %c0_14] : memref<2x64xf32, #tpu.memory_space<vmem>>, vector<2x64xf32>
    %51 = vector.extract_strided_slice %49 {offsets = [0, 0], sizes = [8, 1], strides = [1, 1]} : vector<8x2xf32> to vector<8x1xf32>
    %52 = vector.extract_strided_slice %50 {offsets = [0, 0], sizes = [1, 64], strides = [1, 1]} : vector<2x64xf32> to vector<1x64xf32>
    %53 = vector.broadcast %51 : vector<8x1xf32> to vector<8x64xf32>
    %54 = vector.broadcast %52 : vector<1x64xf32> to vector<8x64xf32>
    %55 = arith.mulf %53, %54 : vector<8x64xf32>
    %56 = vector.extract_strided_slice %49 {offsets = [0, 1], sizes = [8, 1], strides = [1, 1]} : vector<8x2xf32> to vector<8x1xf32>
    %57 = vector.extract_strided_slice %50 {offsets = [1, 0], sizes = [1, 64], strides = [1, 1]} : vector<2x64xf32> to vector<1x64xf32>
    %58 = vector.broadcast %56 : vector<8x1xf32> to vector<8x64xf32>
    %59 = vector.broadcast %57 : vector<1x64xf32> to vector<8x64xf32>
    %60 = arith.mulf %58, %59 : vector<8x64xf32>
    %61 = arith.addf %55, %60 : vector<8x64xf32>
    %62 = vector.broadcast %1 : vector<1x64xf32> to vector<8x64xf32>
    %63 = arith.addf %61, %62 : vector<8x64xf32>
    %cst_15 = arith.constant 0.000000e+00 : f32
    %64 = vector.broadcast %cst_15 : f32 to vector<8x64xf32>
    %65 = arith.cmpf oge, %63, %64 : vector<8x64xf32>
    %cst_16 = arith.constant 2.000000e-01 : f32
    %66 = vector.broadcast %cst_16 : f32 to vector<8x64xf32>
    %67 = arith.mulf %66, %63 : vector<8x64xf32>
    %68 = arith.select %65, %63, %67 : vector<8x64xi1>, vector<8x64xf32>
    %cst_17 = arith.constant dense<0.000000e+00> : vector<8xf32>
    %69 = vector.multi_reduction <add>, %68, %cst_17 [1] : vector<8x64xf32> to vector<8xf32>
    %70 = vector.shape_cast %69 : vector<8xf32> to vector<8x1xf32>
    %cst_18 = arith.constant 6.400000e+01 : f32
    %71 = vector.broadcast %cst_18 : f32 to vector<8x1xf32>
    %72 = arith.divf %70, %71 : vector<8x1xf32>
    %73 = vector.broadcast %72 : vector<8x1xf32> to vector<8x64xf32>
    %74 = arith.subf %68, %73 : vector<8x64xf32>
    %75 = arith.mulf %74, %74 : vector<8x64xf32>
    %cst_19 = arith.constant dense<0.000000e+00> : vector<8xf32>
    %76 = vector.multi_reduction <add>, %75, %cst_19 [1] : vector<8x64xf32> to vector<8xf32>
    %77 = vector.shape_cast %76 : vector<8xf32> to vector<8x1xf32>
    %cst_20 = arith.constant 6.400000e+01 : f32
    %78 = vector.broadcast %cst_20 : f32 to vector<8x1xf32>
    %79 = arith.divf %77, %78 : vector<8x1xf32>
    %80 = vector.broadcast %72 : vector<8x1xf32> to vector<8x64xf32>
    %81 = arith.subf %68, %80 : vector<8x64xf32>
    %cst_21 = arith.constant 9.99999974E-6 : f32
    %82 = vector.broadcast %cst_21 : f32 to vector<8x1xf32>
    %83 = arith.addf %79, %82 : vector<8x1xf32>
    %84 = math.rsqrt %83 : vector<8x1xf32>
    %85 = vector.broadcast %84 : vector<8x1xf32> to vector<8x64xf32>
    %86 = arith.mulf %81, %85 : vector<8x64xf32>
    %87 = vector.broadcast %2 : vector<1x64xf32> to vector<8x64xf32>
    %88 = arith.mulf %86, %87 : vector<8x64xf32>
    %89 = vector.broadcast %3 : vector<1x64xf32> to vector<8x64xf32>
    %90 = arith.addf %88, %89 : vector<8x64xf32>
    %c0_22 = arith.constant 0 : index
    %c0_23 = arith.constant 0 : index
    %91 = vector.load %arg4[%c0_22, %c0_23] : memref<56x1xf32, #tpu.memory_space<vmem>>, vector<56x1xf32>
    %92 = vector.broadcast %91 : vector<56x1xf32> to vector<56x32xf32>
    %93 = vector.broadcast %11 : vector<1x32xf32> to vector<56x32xf32>
    %94 = arith.mulf %92, %93 : vector<56x32xf32>
    %95 = vector.broadcast %12 : vector<1x32xf32> to vector<56x32xf32>
    %96 = arith.addf %94, %95 : vector<56x32xf32>
    %cst_24 = arith.constant 0.000000e+00 : f32
    %97 = vector.broadcast %cst_24 : f32 to vector<56x32xf32>
    %98 = arith.cmpf oge, %96, %97 : vector<56x32xf32>
    %cst_25 = arith.constant 2.000000e-01 : f32
    %99 = vector.broadcast %cst_25 : f32 to vector<56x32xf32>
    %100 = arith.mulf %99, %96 : vector<56x32xf32>
    %101 = arith.select %98, %96, %100 : vector<56x32xi1>, vector<56x32xf32>
    %c0_26 = arith.constant 0 : index
    %c0_27 = arith.constant 0 : index
    %102 = vector.load %arg6[%c0_26, %c0_27] : memref<32x16xf32, #tpu.memory_space<vmem>>, vector<32x16xf32>
    %cst_28 = arith.constant dense<0.000000e+00> : vector<56x16xf32>
    %103 = tpu.matmul %101, %102, %cst_28 {dimension_numbers = #tpu.dot_dimension_numbers<[1], [0], [0], [1], [0, 0, 1, 1], [], []>} : vector<56x32xf32>, vector<32x16xf32>, vector<56x16xf32> -> vector<56x16xf32>
    %104 = vector.broadcast %13 : vector<1x16xf32> to vector<56x16xf32>
    %105 = arith.addf %103, %104 : vector<56x16xf32>
    %cst_29 = arith.constant dense<0.000000e+00> : vector<56xf32>
    %106 = vector.multi_reduction <add>, %105, %cst_29 [1] : vector<56x16xf32> to vector<56xf32>
    %107 = vector.shape_cast %106 : vector<56xf32> to vector<56x1xf32>
    %cst_30 = arith.constant 1.600000e+01 : f32
    %108 = vector.broadcast %cst_30 : f32 to vector<56x1xf32>
    %109 = arith.divf %107, %108 : vector<56x1xf32>
    %110 = vector.broadcast %109 : vector<56x1xf32> to vector<56x16xf32>
    %111 = arith.subf %105, %110 : vector<56x16xf32>
    %112 = arith.mulf %111, %111 : vector<56x16xf32>
    %cst_31 = arith.constant dense<0.000000e+00> : vector<56xf32>
    %113 = vector.multi_reduction <add>, %112, %cst_31 [1] : vector<56x16xf32> to vector<56xf32>
    %114 = vector.shape_cast %113 : vector<56xf32> to vector<56x1xf32>
    %cst_32 = arith.constant 1.600000e+01 : f32
    %115 = vector.broadcast %cst_32 : f32 to vector<56x1xf32>
    %116 = arith.divf %114, %115 : vector<56x1xf32>
    %117 = vector.broadcast %109 : vector<56x1xf32> to vector<56x16xf32>
    %118 = arith.subf %105, %117 : vector<56x16xf32>
    %cst_33 = arith.constant 9.99999974E-6 : f32
    %119 = vector.broadcast %cst_33 : f32 to vector<56x1xf32>
    %120 = arith.addf %116, %119 : vector<56x1xf32>
    %121 = math.rsqrt %120 : vector<56x1xf32>
    %122 = vector.broadcast %121 : vector<56x1xf32> to vector<56x16xf32>
    %123 = arith.mulf %118, %122 : vector<56x16xf32>
    %124 = vector.broadcast %14 : vector<1x16xf32> to vector<56x16xf32>
    %125 = arith.mulf %123, %124 : vector<56x16xf32>
    %126 = vector.broadcast %15 : vector<1x16xf32> to vector<56x16xf32>
    %127 = arith.addf %125, %126 : vector<56x16xf32>
    %c0_34 = arith.constant 0 : index
    %c0_35 = arith.constant 0 : index
    %128 = vector.load %arg7[%c0_34, %c0_35] : memref<16x5xf32, #tpu.memory_space<vmem>>, vector<16x5xf32>
    %cst_36 = arith.constant dense<0.000000e+00> : vector<56x5xf32>
    %129 = tpu.matmul %127, %128, %cst_36 {dimension_numbers = #tpu.dot_dimension_numbers<[1], [0], [0], [1], [0, 0, 1, 1], [], []>} : vector<56x16xf32>, vector<16x5xf32>, vector<56x5xf32> -> vector<56x5xf32>
    %130 = arith.truncf %129 : vector<56x5xf32> to vector<56x5xbf16>
    %cst_37 = arith.constant dense<0.000000e+00> : vector<8x5xf32>
    %131 = tpu.matmul %36, %130, %cst_37 {dimension_numbers = #tpu.dot_dimension_numbers<[1], [0], [0], [1], [0, 0, 1, 1], [], []>} : vector<8x56xbf16>, vector<56x5xbf16>, vector<8x5xf32> -> vector<8x5xf32>
    %132 = vector.broadcast %47 : vector<8x1xf32> to vector<8x5xf32>
    %133 = arith.mulf %131, %132 : vector<8x5xf32>
    %134 = vector.extract_strided_slice %129 {offsets = [0, 0], sizes = [56, 4], strides = [1, 1]} : vector<56x5xf32> to vector<56x4xf32>
    %135 = vector.extract_strided_slice %133 {offsets = [0, 0], sizes = [8, 4], strides = [1, 1]} : vector<8x5xf32> to vector<8x4xf32>
    %c0_38 = arith.constant 0 : index
    %c0_39 = arith.constant 0 : index
    %136 = vector.load %arg8[%c0_38, %c0_39] : memref<64x256xf32, #tpu.memory_space<vmem>>, vector<64x256xf32>
    %c0_40 = arith.constant 0 : index
    %c0_41 = arith.constant 0 : index
    %137 = vector.load %arg9[%c0_40, %c0_41] : memref<64x8xf32, #tpu.memory_space<vmem>>, vector<64x8xf32>
    %cst_42 = arith.constant dense<0.000000e+00> : vector<8x256xf32>
    %138 = tpu.matmul %90, %136, %cst_42 {dimension_numbers = #tpu.dot_dimension_numbers<[1], [0], [0], [1], [0, 0, 1, 1], [], []>} : vector<8x64xf32>, vector<64x256xf32>, vector<8x256xf32> -> vector<8x256xf32>
    %cst_43 = arith.constant dense<0.000000e+00> : vector<8x8xf32>
    %139 = tpu.matmul %90, %137, %cst_43 {dimension_numbers = #tpu.dot_dimension_numbers<[1], [0], [0], [1], [0, 0, 1, 1], [], []>} : vector<8x64xf32>, vector<64x8xf32>, vector<8x8xf32> -> vector<8x8xf32>
    %140 = vector.extract_strided_slice %139 {offsets = [0, 0], sizes = [8, 4], strides = [1, 1]} : vector<8x8xf32> to vector<8x4xf32>
    %141 = vector.extract_strided_slice %139 {offsets = [0, 4], sizes = [8, 4], strides = [1, 1]} : vector<8x8xf32> to vector<8x4xf32>
    %142 = arith.truncf %138 : vector<8x256xf32> to vector<8x256xbf16>
    %cst_44 = arith.constant dense<0.000000e+00> : vector<56x256xf32>
    %143 = tpu.matmul %26, %142, %cst_44 {dimension_numbers = #tpu.dot_dimension_numbers<[1], [0], [0], [1], [0, 0, 1, 1], [], []>} : vector<56x8xbf16>, vector<8x256xbf16>, vector<56x256xf32> -> vector<56x256xf32>
    %144 = arith.truncf %140 : vector<8x4xf32> to vector<8x4xbf16>
    %cst_45 = arith.constant dense<0.000000e+00> : vector<56x4xf32>
    %145 = tpu.matmul %26, %144, %cst_45 {dimension_numbers = #tpu.dot_dimension_numbers<[1], [0], [0], [1], [0, 0, 1, 1], [], []>} : vector<56x8xbf16>, vector<8x4xbf16>, vector<56x4xf32> -> vector<56x4xf32>
    %146 = arith.truncf %141 : vector<8x4xf32> to vector<8x4xbf16>
    %cst_46 = arith.constant dense<0.000000e+00> : vector<56x4xf32>
    %147 = tpu.matmul %29, %146, %cst_46 {dimension_numbers = #tpu.dot_dimension_numbers<[1], [0], [0], [1], [0, 0, 1, 1], [], []>} : vector<56x8xbf16>, vector<8x4xbf16>, vector<56x4xf32> -> vector<56x4xf32>
    %148 = arith.addf %145, %147 : vector<56x4xf32>
    %149 = arith.addf %148, %134 : vector<56x4xf32>
    %cst_47 = arith.constant 0.000000e+00 : f32
    %150 = vector.broadcast %cst_47 : f32 to vector<56x4xf32>
    %151 = arith.cmpf oge, %149, %150 : vector<56x4xf32>
    %cst_48 = arith.constant 2.000000e-01 : f32
    %152 = vector.broadcast %cst_48 : f32 to vector<56x4xf32>
    %153 = arith.mulf %152, %149 : vector<56x4xf32>
    %154 = arith.select %151, %149, %153 : vector<56x4xi1>, vector<56x4xf32>
    %155 = arith.addf %140, %141 : vector<8x4xf32>
    %156 = arith.addf %155, %135 : vector<8x4xf32>
    %cst_49 = arith.constant 0.000000e+00 : f32
    %157 = vector.broadcast %cst_49 : f32 to vector<8x4xf32>
    %158 = arith.cmpf oge, %156, %157 : vector<8x4xf32>
    %cst_50 = arith.constant 2.000000e-01 : f32
    %159 = vector.broadcast %cst_50 : f32 to vector<8x4xf32>
    %160 = arith.mulf %159, %156 : vector<8x4xf32>
    %161 = arith.select %158, %156, %160 : vector<8x4xi1>, vector<8x4xf32>
    %162 = vector.extract_strided_slice %154 {offsets = [0, 0], sizes = [56, 1], strides = [1, 1]} : vector<56x4xf32> to vector<56x1xf32>
    %cst_51 = arith.constant -1.000000e+30 : f32
    %163 = vector.shape_cast %162 : vector<56x1xf32> to vector<56x1xf32>
    %164 = vector.broadcast %163 : vector<56x1xf32> to vector<56x8xf32>
    %165 = vector.broadcast %cst_51 : f32 to vector<56x8xf32>
    %166 = arith.select %23, %164, %165 : vector<56x8xi1>, vector<56x8xf32>
    %cst_52 = arith.constant dense<0xFF800000> : vector<8xf32>
    %167 = vector.multi_reduction <maximumf>, %166, %cst_52 [0] : vector<56x8xf32> to vector<8xf32>
    %168 = vector.shape_cast %167 : vector<8xf32> to vector<1x8xf32>
    %cst_53 = arith.constant 0.000000e+00 : f32
    %169 = vector.shape_cast %168 : vector<1x8xf32> to vector<1x8xf32>
    %170 = vector.broadcast %169 : vector<1x8xf32> to vector<8x8xf32>
    %171 = vector.broadcast %cst_53 : f32 to vector<8x8xf32>
    %172 = arith.select %39, %170, %171 : vector<8x8xi1>, vector<8x8xf32>
    %cst_54 = arith.constant dense<0.000000e+00> : vector<8xf32>
    %173 = vector.multi_reduction <add>, %172, %cst_54 [1] : vector<8x8xf32> to vector<8xf32>
    %174 = vector.shape_cast %173 : vector<8xf32> to vector<8x1xf32>
    %175 = vector.extract_strided_slice %154 {offsets = [0, 1], sizes = [56, 1], strides = [1, 1]} : vector<56x4xf32> to vector<56x1xf32>
    %cst_55 = arith.constant -1.000000e+30 : f32
    %176 = vector.shape_cast %175 : vector<56x1xf32> to vector<56x1xf32>
    %177 = vector.broadcast %176 : vector<56x1xf32> to vector<56x8xf32>
    %178 = vector.broadcast %cst_55 : f32 to vector<56x8xf32>
    %179 = arith.select %23, %177, %178 : vector<56x8xi1>, vector<56x8xf32>
    %cst_56 = arith.constant dense<0xFF800000> : vector<8xf32>
    %180 = vector.multi_reduction <maximumf>, %179, %cst_56 [0] : vector<56x8xf32> to vector<8xf32>
    %181 = vector.shape_cast %180 : vector<8xf32> to vector<1x8xf32>
    %cst_57 = arith.constant 0.000000e+00 : f32
    %182 = vector.shape_cast %181 : vector<1x8xf32> to vector<1x8xf32>
    %183 = vector.broadcast %182 : vector<1x8xf32> to vector<8x8xf32>
    %184 = vector.broadcast %cst_57 : f32 to vector<8x8xf32>
    %185 = arith.select %39, %183, %184 : vector<8x8xi1>, vector<8x8xf32>
    %cst_58 = arith.constant dense<0.000000e+00> : vector<8xf32>
    %186 = vector.multi_reduction <add>, %185, %cst_58 [1] : vector<8x8xf32> to vector<8xf32>
    %187 = vector.shape_cast %186 : vector<8xf32> to vector<8x1xf32>
    %188 = vector.extract_strided_slice %154 {offsets = [0, 2], sizes = [56, 1], strides = [1, 1]} : vector<56x4xf32> to vector<56x1xf32>
    %cst_59 = arith.constant -1.000000e+30 : f32
    %189 = vector.shape_cast %188 : vector<56x1xf32> to vector<56x1xf32>
    %190 = vector.broadcast %189 : vector<56x1xf32> to vector<56x8xf32>
    %191 = vector.broadcast %cst_59 : f32 to vector<56x8xf32>
    %192 = arith.select %23, %190, %191 : vector<56x8xi1>, vector<56x8xf32>
    %cst_60 = arith.constant dense<0xFF800000> : vector<8xf32>
    %193 = vector.multi_reduction <maximumf>, %192, %cst_60 [0] : vector<56x8xf32> to vector<8xf32>
    %194 = vector.shape_cast %193 : vector<8xf32> to vector<1x8xf32>
    %cst_61 = arith.constant 0.000000e+00 : f32
    %195 = vector.shape_cast %194 : vector<1x8xf32> to vector<1x8xf32>
    %196 = vector.broadcast %195 : vector<1x8xf32> to vector<8x8xf32>
    %197 = vector.broadcast %cst_61 : f32 to vector<8x8xf32>
    %198 = arith.select %39, %196, %197 : vector<8x8xi1>, vector<8x8xf32>
    %cst_62 = arith.constant dense<0.000000e+00> : vector<8xf32>
    %199 = vector.multi_reduction <add>, %198, %cst_62 [1] : vector<8x8xf32> to vector<8xf32>
    %200 = vector.shape_cast %199 : vector<8xf32> to vector<8x1xf32>
    %201 = vector.extract_strided_slice %154 {offsets = [0, 3], sizes = [56, 1], strides = [1, 1]} : vector<56x4xf32> to vector<56x1xf32>
    %cst_63 = arith.constant -1.000000e+30 : f32
    %202 = vector.shape_cast %201 : vector<56x1xf32> to vector<56x1xf32>
    %203 = vector.broadcast %202 : vector<56x1xf32> to vector<56x8xf32>
    %204 = vector.broadcast %cst_63 : f32 to vector<56x8xf32>
    %205 = arith.select %23, %203, %204 : vector<56x8xi1>, vector<56x8xf32>
    %cst_64 = arith.constant dense<0xFF800000> : vector<8xf32>
    %206 = vector.multi_reduction <maximumf>, %205, %cst_64 [0] : vector<56x8xf32> to vector<8xf32>
    %207 = vector.shape_cast %206 : vector<8xf32> to vector<1x8xf32>
    %cst_65 = arith.constant 0.000000e+00 : f32
    %208 = vector.shape_cast %207 : vector<1x8xf32> to vector<1x8xf32>
    %209 = vector.broadcast %208 : vector<1x8xf32> to vector<8x8xf32>
    %210 = vector.broadcast %cst_65 : f32 to vector<8x8xf32>
    %211 = arith.select %39, %209, %210 : vector<8x8xi1>, vector<8x8xf32>
    %cst_66 = arith.constant dense<0.000000e+00> : vector<8xf32>
    %212 = vector.multi_reduction <add>, %211, %cst_66 [1] : vector<8x8xf32> to vector<8xf32>
    %213 = vector.shape_cast %212 : vector<8xf32> to vector<8x1xf32>
    %214 = tpu.concatenate %174, %187, %200, %213 in 1 : vector<8x1xf32>, vector<8x1xf32>, vector<8x1xf32>, vector<8x1xf32> -> vector<8x4xf32>
    %215 = arith.maximumf %214, %161 : vector<8x4xf32>
    %216 = arith.truncf %215 : vector<8x4xf32> to vector<8x4xbf16>
    %217 = arith.extf %216 : vector<8x4xbf16> to vector<8x4xf32>
    %218 = arith.subf %161, %217 : vector<8x4xf32>
    %219 = math.exp %218 : vector<8x4xf32>
    %cst_67 = arith.constant dense<0.000000e+00> : vector<56x4xf32>
    %220 = tpu.matmul %29, %216, %cst_67 {dimension_numbers = #tpu.dot_dimension_numbers<[1], [0], [0], [1], [0, 0, 1, 1], [], []>} : vector<56x8xbf16>, vector<8x4xbf16>, vector<56x4xf32> -> vector<56x4xf32>
    %221 = arith.subf %154, %220 : vector<56x4xf32>
    %222 = math.exp %221 : vector<56x4xf32>
    %cst_68 = arith.constant dense<0.000000e+00> : vector<56x256xf32>
    %223 = tpu.matmul %222, %48, %cst_68 {dimension_numbers = #tpu.dot_dimension_numbers<[1], [0], [0], [1], [0, 0, 1, 1], [], []>} : vector<56x4xf32>, vector<4x256xf32>, vector<56x256xf32> -> vector<56x256xf32>
    %cst_69 = arith.constant dense<0.000000e+00> : vector<8x256xf32>
    %224 = tpu.matmul %219, %48, %cst_69 {dimension_numbers = #tpu.dot_dimension_numbers<[1], [0], [0], [1], [0, 0, 1, 1], [], []>} : vector<8x4xf32>, vector<4x256xf32>, vector<8x256xf32> -> vector<8x256xf32>
    %225 = arith.mulf %223, %143 : vector<56x256xf32>
    %226 = arith.truncf %225 : vector<56x256xf32> to vector<56x256xbf16>
    %cst_70 = arith.constant dense<0.000000e+00> : vector<8x256xf32>
    %227 = tpu.matmul %36, %226, %cst_70 {dimension_numbers = #tpu.dot_dimension_numbers<[1], [0], [0], [1], [0, 0, 1, 1], [], []>} : vector<8x56xbf16>, vector<56x256xbf16>, vector<8x256xf32> -> vector<8x256xf32>
    %228 = arith.truncf %222 : vector<56x4xf32> to vector<56x4xbf16>
    %cst_71 = arith.constant dense<0.000000e+00> : vector<8x4xf32>
    %229 = tpu.matmul %36, %228, %cst_71 {dimension_numbers = #tpu.dot_dimension_numbers<[1], [0], [0], [1], [0, 0, 1, 1], [], []>} : vector<8x56xbf16>, vector<56x4xbf16>, vector<8x4xf32> -> vector<8x4xf32>
    %230 = arith.mulf %224, %138 : vector<8x256xf32>
    %231 = arith.addf %227, %230 : vector<8x256xf32>
    %232 = arith.addf %229, %219 : vector<8x4xf32>
    %233 = tpu.reciprocal %232 {approx = true} : vector<8x4xf32> -> vector<8x4xf32>
    %cst_72 = arith.constant dense<0.000000e+00> : vector<8x256xf32>
    %234 = tpu.matmul %233, %48, %cst_72 {dimension_numbers = #tpu.dot_dimension_numbers<[1], [0], [0], [1], [0, 0, 1, 1], [], []>} : vector<8x4xf32>, vector<4x256xf32>, vector<8x256xf32> -> vector<8x256xf32>
    %235 = arith.mulf %231, %234 : vector<8x256xf32>
    %236 = vector.broadcast %4 : vector<1x256xf32> to vector<8x256xf32>
    %237 = arith.addf %235, %236 : vector<8x256xf32>
    %cst_73 = arith.constant 0.000000e+00 : f32
    %238 = vector.broadcast %cst_73 : f32 to vector<8x256xf32>
    %239 = arith.cmpf oge, %237, %238 : vector<8x256xf32>
    %cst_74 = arith.constant 1.000000e-01 : f32
    %240 = vector.broadcast %cst_74 : f32 to vector<8x256xf32>
    %241 = arith.mulf %240, %237 : vector<8x256xf32>
    %242 = arith.select %239, %237, %241 : vector<8x256xi1>, vector<8x256xf32>
    %cst_75 = arith.constant dense<0.000000e+00> : vector<8xf32>
    %243 = vector.multi_reduction <add>, %242, %cst_75 [1] : vector<8x256xf32> to vector<8xf32>
    %244 = vector.shape_cast %243 : vector<8xf32> to vector<8x1xf32>
    %cst_76 = arith.constant 2.560000e+02 : f32
    %245 = vector.broadcast %cst_76 : f32 to vector<8x1xf32>
    %246 = arith.divf %244, %245 : vector<8x1xf32>
    %247 = vector.broadcast %246 : vector<8x1xf32> to vector<8x256xf32>
    %248 = arith.subf %242, %247 : vector<8x256xf32>
    %249 = arith.mulf %248, %248 : vector<8x256xf32>
    %cst_77 = arith.constant dense<0.000000e+00> : vector<8xf32>
    %250 = vector.multi_reduction <add>, %249, %cst_77 [1] : vector<8x256xf32> to vector<8xf32>
    %251 = vector.shape_cast %250 : vector<8xf32> to vector<8x1xf32>
    %cst_78 = arith.constant 2.560000e+02 : f32
    %252 = vector.broadcast %cst_78 : f32 to vector<8x1xf32>
    %253 = arith.divf %251, %252 : vector<8x1xf32>
    %254 = vector.broadcast %246 : vector<8x1xf32> to vector<8x256xf32>
    %255 = arith.subf %242, %254 : vector<8x256xf32>
    %cst_79 = arith.constant 9.99999974E-6 : f32
    %256 = vector.broadcast %cst_79 : f32 to vector<8x1xf32>
    %257 = arith.addf %253, %256 : vector<8x1xf32>
    %258 = math.rsqrt %257 : vector<8x1xf32>
    %259 = vector.broadcast %258 : vector<8x1xf32> to vector<8x256xf32>
    %260 = arith.mulf %255, %259 : vector<8x256xf32>
    %261 = vector.broadcast %5 : vector<1x256xf32> to vector<8x256xf32>
    %262 = arith.mulf %260, %261 : vector<8x256xf32>
    %263 = vector.broadcast %6 : vector<1x256xf32> to vector<8x256xf32>
    %264 = arith.addf %262, %263 : vector<8x256xf32>
    %265 = vector.extract_strided_slice %129 {offsets = [0, 4], sizes = [56, 1], strides = [1, 1]} : vector<56x5xf32> to vector<56x1xf32>
    %266 = vector.extract_strided_slice %133 {offsets = [0, 4], sizes = [8, 1], strides = [1, 1]} : vector<8x5xf32> to vector<8x1xf32>
    %c0_80 = arith.constant 0 : index
    %c0_81 = arith.constant 0 : index
    %267 = vector.load %arg10[%c0_80, %c0_81] : memref<256x64xf32, #tpu.memory_space<vmem>>, vector<256x64xf32>
    %c0_82 = arith.constant 0 : index
    %c0_83 = arith.constant 0 : index
    %268 = vector.load %arg11[%c0_82, %c0_83] : memref<256x2xf32, #tpu.memory_space<vmem>>, vector<256x2xf32>
    %cst_84 = arith.constant dense<0.000000e+00> : vector<8x64xf32>
    %269 = tpu.matmul %264, %267, %cst_84 {dimension_numbers = #tpu.dot_dimension_numbers<[1], [0], [0], [1], [0, 0, 1, 1], [], []>} : vector<8x256xf32>, vector<256x64xf32>, vector<8x64xf32> -> vector<8x64xf32>
    %cst_85 = arith.constant dense<0.000000e+00> : vector<8x2xf32>
    %270 = tpu.matmul %264, %268, %cst_85 {dimension_numbers = #tpu.dot_dimension_numbers<[1], [0], [0], [1], [0, 0, 1, 1], [], []>} : vector<8x256xf32>, vector<256x2xf32>, vector<8x2xf32> -> vector<8x2xf32>
    %271 = vector.extract_strided_slice %270 {offsets = [0, 0], sizes = [8, 1], strides = [1, 1]} : vector<8x2xf32> to vector<8x1xf32>
    %272 = vector.extract_strided_slice %270 {offsets = [0, 1], sizes = [8, 1], strides = [1, 1]} : vector<8x2xf32> to vector<8x1xf32>
    %273 = arith.truncf %269 : vector<8x64xf32> to vector<8x64xbf16>
    %cst_86 = arith.constant dense<0.000000e+00> : vector<56x64xf32>
    %274 = tpu.matmul %26, %273, %cst_86 {dimension_numbers = #tpu.dot_dimension_numbers<[1], [0], [0], [1], [0, 0, 1, 1], [], []>} : vector<56x8xbf16>, vector<8x64xbf16>, vector<56x64xf32> -> vector<56x64xf32>
    %275 = arith.truncf %271 : vector<8x1xf32> to vector<8x1xbf16>
    %cst_87 = arith.constant dense<0.000000e+00> : vector<56x1xf32>
    %276 = tpu.matmul %26, %275, %cst_87 {dimension_numbers = #tpu.dot_dimension_numbers<[1], [0], [0], [1], [0, 0, 1, 1], [], []>} : vector<56x8xbf16>, vector<8x1xbf16>, vector<56x1xf32> -> vector<56x1xf32>
    %277 = arith.truncf %272 : vector<8x1xf32> to vector<8x1xbf16>
    %cst_88 = arith.constant dense<0.000000e+00> : vector<56x1xf32>
    %278 = tpu.matmul %29, %277, %cst_88 {dimension_numbers = #tpu.dot_dimension_numbers<[1], [0], [0], [1], [0, 0, 1, 1], [], []>} : vector<56x8xbf16>, vector<8x1xbf16>, vector<56x1xf32> -> vector<56x1xf32>
    %279 = arith.addf %276, %278 : vector<56x1xf32>
    %280 = arith.addf %279, %265 : vector<56x1xf32>
    %cst_89 = arith.constant 0.000000e+00 : f32
    %281 = vector.broadcast %cst_89 : f32 to vector<56x1xf32>
    %282 = arith.cmpf oge, %280, %281 : vector<56x1xf32>
    %cst_90 = arith.constant 2.000000e-01 : f32
    %283 = vector.broadcast %cst_90 : f32 to vector<56x1xf32>
    %284 = arith.mulf %283, %280 : vector<56x1xf32>
    %285 = arith.select %282, %280, %284 : vector<56x1xi1>, vector<56x1xf32>
    %286 = arith.addf %271, %272 : vector<8x1xf32>
    %287 = arith.addf %286, %266 : vector<8x1xf32>
    %cst_91 = arith.constant 0.000000e+00 : f32
    %288 = vector.broadcast %cst_91 : f32 to vector<8x1xf32>
    %289 = arith.cmpf oge, %287, %288 : vector<8x1xf32>
    %cst_92 = arith.constant 2.000000e-01 : f32
    %290 = vector.broadcast %cst_92 : f32 to vector<8x1xf32>
    %291 = arith.mulf %290, %287 : vector<8x1xf32>
    %292 = arith.select %289, %287, %291 : vector<8x1xi1>, vector<8x1xf32>
    %cst_93 = arith.constant -1.000000e+30 : f32
    %293 = vector.shape_cast %285 : vector<56x1xf32> to vector<56x1xf32>
    %294 = vector.broadcast %293 : vector<56x1xf32> to vector<56x8xf32>
    %295 = vector.broadcast %cst_93 : f32 to vector<56x8xf32>
    %296 = arith.select %23, %294, %295 : vector<56x8xi1>, vector<56x8xf32>
    %cst_94 = arith.constant dense<0xFF800000> : vector<8xf32>
    %297 = vector.multi_reduction <maximumf>, %296, %cst_94 [0] : vector<56x8xf32> to vector<8xf32>
    %298 = vector.shape_cast %297 : vector<8xf32> to vector<1x8xf32>
    %cst_95 = arith.constant 0.000000e+00 : f32
    %299 = vector.shape_cast %298 : vector<1x8xf32> to vector<1x8xf32>
    %300 = vector.broadcast %299 : vector<1x8xf32> to vector<8x8xf32>
    %301 = vector.broadcast %cst_95 : f32 to vector<8x8xf32>
    %302 = arith.select %39, %300, %301 : vector<8x8xi1>, vector<8x8xf32>
    %cst_96 = arith.constant dense<0.000000e+00> : vector<8xf32>
    %303 = vector.multi_reduction <add>, %302, %cst_96 [1] : vector<8x8xf32> to vector<8xf32>
    %304 = vector.shape_cast %303 : vector<8xf32> to vector<8x1xf32>
    %305 = arith.maximumf %304, %292 : vector<8x1xf32>
    %306 = arith.truncf %305 : vector<8x1xf32> to vector<8x1xbf16>
    %307 = arith.extf %306 : vector<8x1xbf16> to vector<8x1xf32>
    %308 = arith.subf %292, %307 : vector<8x1xf32>
    %309 = math.exp %308 : vector<8x1xf32>
    %cst_97 = arith.constant dense<0.000000e+00> : vector<56x1xf32>
    %310 = tpu.matmul %29, %306, %cst_97 {dimension_numbers = #tpu.dot_dimension_numbers<[1], [0], [0], [1], [0, 0, 1, 1], [], []>} : vector<56x8xbf16>, vector<8x1xbf16>, vector<56x1xf32> -> vector<56x1xf32>
    %311 = arith.subf %285, %310 : vector<56x1xf32>
    %312 = math.exp %311 : vector<56x1xf32>
    %313 = vector.broadcast %312 : vector<56x1xf32> to vector<56x64xf32>
    %314 = arith.mulf %313, %274 : vector<56x64xf32>
    %315 = arith.truncf %314 : vector<56x64xf32> to vector<56x64xbf16>
    %cst_98 = arith.constant dense<0.000000e+00> : vector<8x64xf32>
    %316 = tpu.matmul %36, %315, %cst_98 {dimension_numbers = #tpu.dot_dimension_numbers<[1], [0], [0], [1], [0, 0, 1, 1], [], []>} : vector<8x56xbf16>, vector<56x64xbf16>, vector<8x64xf32> -> vector<8x64xf32>
    %317 = arith.truncf %312 : vector<56x1xf32> to vector<56x1xbf16>
    %cst_99 = arith.constant dense<0.000000e+00> : vector<8x1xf32>
    %318 = tpu.matmul %36, %317, %cst_99 {dimension_numbers = #tpu.dot_dimension_numbers<[1], [0], [0], [1], [0, 0, 1, 1], [], []>} : vector<8x56xbf16>, vector<56x1xbf16>, vector<8x1xf32> -> vector<8x1xf32>
    %319 = vector.broadcast %309 : vector<8x1xf32> to vector<8x64xf32>
    %320 = arith.mulf %319, %269 : vector<8x64xf32>
    %321 = arith.addf %316, %320 : vector<8x64xf32>
    %322 = arith.addf %318, %309 : vector<8x1xf32>
    %323 = tpu.reciprocal %322 {approx = true} : vector<8x1xf32> -> vector<8x1xf32>
    %324 = vector.broadcast %323 : vector<8x1xf32> to vector<8x64xf32>
    %325 = arith.mulf %321, %324 : vector<8x64xf32>
    %326 = vector.broadcast %7 : vector<1x64xf32> to vector<8x64xf32>
    %327 = arith.addf %325, %326 : vector<8x64xf32>
    %cst_100 = arith.constant 0.000000e+00 : f32
    %328 = vector.broadcast %cst_100 : f32 to vector<8x64xf32>
    %329 = arith.cmpf oge, %327, %328 : vector<8x64xf32>
    %cst_101 = arith.constant 1.000000e-01 : f32
    %330 = vector.broadcast %cst_101 : f32 to vector<8x64xf32>
    %331 = arith.mulf %330, %327 : vector<8x64xf32>
    %332 = arith.select %329, %327, %331 : vector<8x64xi1>, vector<8x64xf32>
    %cst_102 = arith.constant dense<0.000000e+00> : vector<8xf32>
    %333 = vector.multi_reduction <add>, %332, %cst_102 [1] : vector<8x64xf32> to vector<8xf32>
    %334 = vector.shape_cast %333 : vector<8xf32> to vector<8x1xf32>
    %cst_103 = arith.constant 6.400000e+01 : f32
    %335 = vector.broadcast %cst_103 : f32 to vector<8x1xf32>
    %336 = arith.divf %334, %335 : vector<8x1xf32>
    %337 = vector.broadcast %336 : vector<8x1xf32> to vector<8x64xf32>
    %338 = arith.subf %332, %337 : vector<8x64xf32>
    %339 = arith.mulf %338, %338 : vector<8x64xf32>
    %cst_104 = arith.constant dense<0.000000e+00> : vector<8xf32>
    %340 = vector.multi_reduction <add>, %339, %cst_104 [1] : vector<8x64xf32> to vector<8xf32>
    %341 = vector.shape_cast %340 : vector<8xf32> to vector<8x1xf32>
    %cst_105 = arith.constant 6.400000e+01 : f32
    %342 = vector.broadcast %cst_105 : f32 to vector<8x1xf32>
    %343 = arith.divf %341, %342 : vector<8x1xf32>
    %344 = vector.broadcast %336 : vector<8x1xf32> to vector<8x64xf32>
    %345 = arith.subf %332, %344 : vector<8x64xf32>
    %cst_106 = arith.constant 9.99999974E-6 : f32
    %346 = vector.broadcast %cst_106 : f32 to vector<8x1xf32>
    %347 = arith.addf %343, %346 : vector<8x1xf32>
    %348 = math.rsqrt %347 : vector<8x1xf32>
    %349 = vector.broadcast %348 : vector<8x1xf32> to vector<8x64xf32>
    %350 = arith.mulf %345, %349 : vector<8x64xf32>
    %351 = vector.broadcast %8 : vector<1x64xf32> to vector<8x64xf32>
    %352 = arith.mulf %350, %351 : vector<8x64xf32>
    %353 = vector.broadcast %9 : vector<1x64xf32> to vector<8x64xf32>
    %354 = arith.addf %352, %353 : vector<8x64xf32>
    %c0_107 = arith.constant 0 : index
    %c0_108 = arith.constant 0 : index
    %355 = vector.load %arg12[%c0_107, %c0_108] : memref<144x64xf32, #tpu.memory_space<vmem>>, vector<64x64xf32>
    %cst_109 = arith.constant dense<0.000000e+00> : vector<8x64xf32>
    %356 = tpu.matmul %354, %355, %cst_109 {dimension_numbers = #tpu.dot_dimension_numbers<[1], [0], [0], [1], [0, 0, 1, 1], [], []>} : vector<8x64xf32>, vector<64x64xf32>, vector<8x64xf32> -> vector<8x64xf32>
    %c64 = arith.constant 64 : index
    %c0_110 = arith.constant 0 : index
    %357 = vector.load %arg12[%c64, %c0_110] : memref<144x64xf32, #tpu.memory_space<vmem>>, vector<64x64xf32>
    %cst_111 = arith.constant dense<0.000000e+00> : vector<8x64xf32>
    %358 = tpu.matmul %354, %357, %cst_111 {dimension_numbers = #tpu.dot_dimension_numbers<[1], [0], [0], [1], [0, 0, 1, 1], [], []>} : vector<8x64xf32>, vector<64x64xf32>, vector<8x64xf32> -> vector<8x64xf32>
    %c128 = arith.constant 128 : index
    %c0_112 = arith.constant 0 : index
    %359 = vector.load %arg12[%c128, %c0_112] : memref<144x64xf32, #tpu.memory_space<vmem>>, vector<16x64xf32>
    %cst_113 = arith.constant dense<0.000000e+00> : vector<56x64xf32>
    %360 = tpu.matmul %127, %359, %cst_113 {dimension_numbers = #tpu.dot_dimension_numbers<[1], [0], [0], [1], [0, 0, 1, 1], [], []>} : vector<56x16xf32>, vector<16x64xf32>, vector<56x64xf32> -> vector<56x64xf32>
    %361 = arith.truncf %356 : vector<8x64xf32> to vector<8x64xbf16>
    %cst_114 = arith.constant dense<0.000000e+00> : vector<56x64xf32>
    %362 = tpu.matmul %26, %361, %cst_114 {dimension_numbers = #tpu.dot_dimension_numbers<[1], [0], [0], [1], [0, 0, 1, 1], [], []>} : vector<56x8xbf16>, vector<8x64xbf16>, vector<56x64xf32> -> vector<56x64xf32>
    %363 = arith.truncf %358 : vector<8x64xf32> to vector<8x64xbf16>
    %cst_115 = arith.constant dense<0.000000e+00> : vector<56x64xf32>
    %364 = tpu.matmul %29, %363, %cst_115 {dimension_numbers = #tpu.dot_dimension_numbers<[1], [0], [0], [1], [0, 0, 1, 1], [], []>} : vector<56x8xbf16>, vector<8x64xbf16>, vector<56x64xf32> -> vector<56x64xf32>
    %365 = arith.addf %362, %364 : vector<56x64xf32>
    %366 = arith.addf %365, %360 : vector<56x64xf32>
    %367 = vector.broadcast %10 : vector<1x64xf32> to vector<56x64xf32>
    %368 = arith.addf %366, %367 : vector<56x64xf32>
    %cst_116 = arith.constant 0.000000e+00 : f32
    %369 = vector.broadcast %cst_116 : f32 to vector<56x64xf32>
    %370 = arith.cmpf oge, %368, %369 : vector<56x64xf32>
    %cst_117 = arith.constant 1.000000e-01 : f32
    %371 = vector.broadcast %cst_117 : f32 to vector<56x64xf32>
    %372 = arith.mulf %371, %368 : vector<56x64xf32>
    %373 = arith.select %370, %368, %372 : vector<56x64xi1>, vector<56x64xf32>
    %c0_118 = arith.constant 0 : index
    %c0_119 = arith.constant 0 : index
    %374 = vector.load %arg13[%c0_118, %c0_119] : memref<64x128xf32, #tpu.memory_space<vmem>>, vector<64x128xf32>
    %cst_120 = arith.constant dense<0.000000e+00> : vector<56x128xf32>
    %375 = tpu.matmul %373, %374, %cst_120 {dimension_numbers = #tpu.dot_dimension_numbers<[1], [0], [0], [1], [0, 0, 1, 1], [], []>} : vector<56x64xf32>, vector<64x128xf32>, vector<56x128xf32> -> vector<56x128xf32>
    %376 = vector.broadcast %16 : vector<1x1xf32> to vector<56x128xf32>
    %377 = arith.addf %375, %376 : vector<56x128xf32>
    %c0_121 = arith.constant 0 : index
    %c0_122 = arith.constant 0 : index
    %378 = vector.load %arg16[%c0_121, %c0_122] : memref<56x128xf32, #tpu.memory_space<vmem>>, vector<56x128xf32>
    tpu.vector_store %arg16[%c0_121, %c0_122], %377 {strides = array<i32>} : memref<56x128xf32, #tpu.memory_space<vmem>>, vector<56x128xf32>,
    return
  }
}

</mosaic_0001>

<llo_original>
// kernel: tsp_gnn_forward.1
$region0: #{tsp_gnn_forward.1}
  #allocation0 [shape = 'u32[]', space=smem, size = 0x4, offset = 0x4, fixed_abs, tag = 'smem constant byte address 0x4 - core index']
  #allocation1 [shape = 'u32[144,128]{1,0:T(1,128)}', space=vmem, size = 0x12000, scoped, tag = 'internal scratch']
  %s0 = inlined_call_operand.vmem [shape: s32[56,1], index: 0, kind: input, shape index: {}]
  %s1 = inlined_call_operand.vmem [shape: s32[56,1], index: 1, kind: input, shape index: {}]
  %s2 = inlined_call_operand.vmem [shape: s32[1,56], index: 2, kind: input, shape index: {}]
  %s3 = inlined_call_operand.vmem [shape: f32[8,2], index: 3, kind: input, shape index: {}]
  %s4 = inlined_call_operand.vmem [shape: f32[56,1], index: 4, kind: input, shape index: {}]
  %s5 = inlined_call_operand.vmem [shape: f32[2,64], index: 5, kind: input, shape index: {}]
  %s6 = inlined_call_operand.vmem [shape: f32[32,16], index: 6, kind: input, shape index: {}]
  %s7 = inlined_call_operand.vmem [shape: f32[16,5], index: 7, kind: input, shape index: {}]
  %s8 = inlined_call_operand.vmem [shape: f32[64,256], index: 8, kind: input, shape index: {}]
  %s9 = inlined_call_operand.vmem [shape: f32[64,8], index: 9, kind: input, shape index: {}]
  %s10 = inlined_call_operand.vmem [shape: f32[256,64], index: 10, kind: input, shape index: {}]
  %s11 = inlined_call_operand.vmem [shape: f32[256,2], index: 11, kind: input, shape index: {}]
  %s12 = inlined_call_operand.vmem [shape: f32[144,64], index: 12, kind: input, shape index: {}]
  %s13 = inlined_call_operand.vmem [shape: f32[64,128], index: 13, kind: input, shape index: {}]
  %s14 = inlined_call_operand.vmem [shape: f32[4,256], index: 14, kind: input, shape index: {}]
  %s15 = inlined_call_operand.vmem [shape: f32[16,256], index: 15, kind: input, shape index: {}]
  %s16 = inlined_call_operand.vmem [shape: f32[56,128], index: 16, kind: output, shape index: {}]
  %s17 = sld [smem:[#allocation0]]
  $region74: #{tsp_gnn_forward.1} parent=0
    _
  %s19 = ssub.s32 1, %s17
  %s20 = scalar_select 0, %s19, %s17
  // Predicated region
  $region2: #{tsp_gnn_forward.1} parent=0 // pred_check
    _
  $region3: #{tsp_gnn_forward.1} parent=0 // pred_check_branch
    %22 = sbr.rel (0) target = $region5
  $region4: #{tsp_gnn_forward.1} parent=0 // pred_region
    _
  $region5: #{tsp_gnn_forward.1} parent=0 // pred_fallthru
    _
  // Predicated region
  $region6: #{tsp_gnn_forward.1} parent=0 // pred_check
    _
  $region7: #{tsp_gnn_forward.1} parent=0 // pred_check_branch
    %24 = sbr.rel (0) target = $region9
  $region8: #{tsp_gnn_forward.1} parent=0 // pred_region
    _
  $region9: #{tsp_gnn_forward.1} parent=0 // pred_fallthru
    _
  // Predicated region
  $region10: #{tsp_gnn_forward.1} parent=0 // pred_check
    _
  $region11: #{tsp_gnn_forward.1} parent=0 // pred_check_branch
    %26 = sbr.rel (0) target = $region13
  $region12: #{tsp_gnn_forward.1} parent=0 // pred_region
    _
  $region13: #{tsp_gnn_forward.1} parent=0 // pred_fallthru
    _
  // Predicated region
  $region14: #{tsp_gnn_forward.1} parent=0 // pred_check
    _
  $region15: #{tsp_gnn_forward.1} parent=0 // pred_check_branch
    %28 = sbr.rel (0) target = $region17
  $region16: #{tsp_gnn_forward.1} parent=0 // pred_region
    _
  $region17: #{tsp_gnn_forward.1} parent=0 // pred_fallthru
    _
  // Predicated region
  $region18: #{tsp_gnn_forward.1} parent=0 // pred_check
    _
  $region19: #{tsp_gnn_forward.1} parent=0 // pred_check_branch
    %30 = sbr.rel (0) target = $region21
  $region20: #{tsp_gnn_forward.1} parent=0 // pred_region
    _
  $region21: #{tsp_gnn_forward.1} parent=0 // pred_fallthru
    _
  // Predicated region
  $region22: #{tsp_gnn_forward.1} parent=0 // pred_check
    _
  $region23: #{tsp_gnn_forward.1} parent=0 // pred_check_branch
    %32 = sbr.rel (0) target = $region25
  $region24: #{tsp_gnn_forward.1} parent=0 // pred_region
    _
  $region25: #{tsp_gnn_forward.1} parent=0 // pred_fallthru
    _
  // Predicated region
  $region26: #{tsp_gnn_forward.1} parent=0 // pred_check
    _
  $region27: #{tsp_gnn_forward.1} parent=0 // pred_check_branch
    %34 = sbr.rel (0) target = $region29
  $region28: #{tsp_gnn_forward.1} parent=0 // pred_region
    _
  $region29: #{tsp_gnn_forward.1} parent=0 // pred_fallthru
    _
  // Predicated region
  $region30: #{tsp_gnn_forward.1} parent=0 // pred_check
    _
  $region31: #{tsp_gnn_forward.1} parent=0 // pred_check_branch
    %36 = sbr.rel (0) target = $region33
  $region32: #{tsp_gnn_forward.1} parent=0 // pred_region
    _
  $region33: #{tsp_gnn_forward.1} parent=0 // pred_fallthru
    _
  // Predicated region
  $region34: #{tsp_gnn_forward.1} parent=0 // pred_check
    _
  $region35: #{tsp_gnn_forward.1} parent=0 // pred_check_branch
    %38 = sbr.rel (0) target = $region37
  $region36: #{tsp_gnn_forward.1} parent=0 // pred_region
    _
  $region37: #{tsp_gnn_forward.1} parent=0 // pred_fallthru
    _
  // Predicated region
  $region38: #{tsp_gnn_forward.1} parent=0 // pred_check
    _
  $region39: #{tsp_gnn_forward.1} parent=0 // pred_check_branch
    %40 = sbr.rel (0) target = $region41
  $region40: #{tsp_gnn_forward.1} parent=0 // pred_region
    _
  $region41: #{tsp_gnn_forward.1} parent=0 // pred_fallthru
    _
  // Predicated region
  $region42: #{tsp_gnn_forward.1} parent=0 // pred_check
    _
  $region43: #{tsp_gnn_forward.1} parent=0 // pred_check_branch
    %42 = sbr.rel (0) target = $region45
  $region44: #{tsp_gnn_forward.1} parent=0 // pred_region
    _
  $region45: #{tsp_gnn_forward.1} parent=0 // pred_fallthru
    _
  // Predicated region
  $region46: #{tsp_gnn_forward.1} parent=0 // pred_check
    _
  $region47: #{tsp_gnn_forward.1} parent=0 // pred_check_branch
    %44 = sbr.rel (0) target = $region49
  $region48: #{tsp_gnn_forward.1} parent=0 // pred_region
    _
  $region49: #{tsp_gnn_forward.1} parent=0 // pred_fallthru
    _
  // Predicated region
  $region50: #{tsp_gnn_forward.1} parent=0 // pred_check
    _
  $region51: #{tsp_gnn_forward.1} parent=0 // pred_check_branch
    %46 = sbr.rel (0) target = $region53
  $region52: #{tsp_gnn_forward.1} parent=0 // pred_region
    _
  $region53: #{tsp_gnn_forward.1} parent=0 // pred_fallthru
    _
  // Predicated region
  $region54: #{tsp_gnn_forward.1} parent=0 // pred_check
    _
  $region55: #{tsp_gnn_forward.1} parent=0 // pred_check_branch
    %48 = sbr.rel (0) target = $region57
  $region56: #{tsp_gnn_forward.1} parent=0 // pred_region
    _
  $region57: #{tsp_gnn_forward.1} parent=0 // pred_fallthru
    _
  // Predicated region
  $region58: #{tsp_gnn_forward.1} parent=0 // pred_check
    _
  $region59: #{tsp_gnn_forward.1} parent=0 // pred_check_branch
    %50 = sbr.rel (0) target = $region61
  $region60: #{tsp_gnn_forward.1} parent=0 // pred_region
    _
  $region61: #{tsp_gnn_forward.1} parent=0 // pred_fallthru
    _
  // Predicated region
  $region62: #{tsp_gnn_forward.1} parent=0 // pred_check
    _
  $region63: #{tsp_gnn_forward.1} parent=0 // pred_check_branch
    %52 = sbr.rel (0) target = $region65
  $region64: #{tsp_gnn_forward.1} parent=0 // pred_region
    _
  $region65: #{tsp_gnn_forward.1} parent=0 // pred_fallthru
    _
  %v54 = vld [vmem:[%s15] sm:$0xff]
  %v55 = vld [vmem:[%s15 + $0x8] sm:$0xff]
  %v56 = vld [vmem:[%s15 + $0x10] sm:$0xff]
  %v57 = vlaneseq
  %v58 = vand.u32 %v57, 127
  %v59 = vld [vmem:[%s0] sm:$0xff]
  %v60 = vld [vmem:[%s0 + $0x8] sm:$0xff]
  %v61 = vld [vmem:[%s0 + $0x10] sm:$0xff]
  %v62 = vld [vmem:[%s0 + $0x18] sm:$0xff]
  %v63 = vld [vmem:[%s0 + $0x20] sm:$0xff]
  %v64 = vld [vmem:[%s0 + $0x28] sm:$0xff]
  %v65 = vld [vmem:[%s0 + $0x30] sm:$0xff]
  %66 = vset.pattern.permute.xlu0 0
  %67 = vperm.xlu0 %66, %v59
  %v68 = vpop.permute.xlu0 %67
  %69 = vset.pattern.permute.xlu0 0
  %70 = vperm.xlu0 %69, %v60
  %v71 = vpop.permute.xlu0 %70
  %72 = vset.pattern.permute.xlu0 0
  %73 = vperm.xlu0 %72, %v61
  %v74 = vpop.permute.xlu0 %73
  %75 = vset.pattern.permute.xlu0 0
  %76 = vperm.xlu0 %75, %v62
  %v77 = vpop.permute.xlu0 %76
  %78 = vset.pattern.permute.xlu0 0
  %79 = vperm.xlu0 %78, %v63
  %v80 = vpop.permute.xlu0 %79
  %81 = vset.pattern.permute.xlu0 0
  %82 = vperm.xlu0 %81, %v64
  %v83 = vpop.permute.xlu0 %82
  %84 = vset.pattern.permute.xlu0 0
  %85 = vperm.xlu0 %84, %v65
  %v86 = vpop.permute.xlu0 %85
  %vm87 = vcmp.eq.s32.totalorder %v58, %v68
  %vm88 = vcmp.eq.s32.totalorder %v58, %v71
  %vm89 = vcmp.eq.s32.totalorder %v58, %v74
  %vm90 = vcmp.eq.s32.totalorder %v58, %v77
  %vm91 = vcmp.eq.s32.totalorder %v58, %v80
  %vm92 = vcmp.eq.s32.totalorder %v58, %v83
  %vm93 = vcmp.eq.s32.totalorder %v58, %v86
  %v94 = vld [vmem:[%s1] sm:$0xff]
  %v95 = vld [vmem:[%s1 + $0x8] sm:$0xff]
  %v96 = vld [vmem:[%s1 + $0x10] sm:$0xff]
  %v97 = vld [vmem:[%s1 + $0x18] sm:$0xff]
  %v98 = vld [vmem:[%s1 + $0x20] sm:$0xff]
  %v99 = vld [vmem:[%s1 + $0x28] sm:$0xff]
  %v100 = vld [vmem:[%s1 + $0x30] sm:$0xff]
  %101 = vset.pattern.permute.xlu0 0
  %102 = vperm.xlu0 %101, %v94
  %v103 = vpop.permute.xlu0 %102
  %104 = vset.pattern.permute.xlu0 0
  %105 = vperm.xlu0 %104, %v95
  %v106 = vpop.permute.xlu0 %105
  %107 = vset.pattern.permute.xlu0 0
  %108 = vperm.xlu0 %107, %v96
  %v109 = vpop.permute.xlu0 %108
  %110 = vset.pattern.permute.xlu0 0
  %111 = vperm.xlu0 %110, %v97
  %v112 = vpop.permute.xlu0 %111
  %113 = vset.pattern.permute.xlu0 0
  %114 = vperm.xlu0 %113, %v98
  %v115 = vpop.permute.xlu0 %114
  %116 = vset.pattern.permute.xlu0 0
  %117 = vperm.xlu0 %116, %v99
  %v118 = vpop.permute.xlu0 %117
  %119 = vset.pattern.permute.xlu0 0
  %120 = vperm.xlu0 %119, %v100
  %v121 = vpop.permute.xlu0 %120
  %vm122 = vcmp.eq.s32.totalorder %v58, %v103
  %vm123 = vcmp.eq.s32.totalorder %v58, %v106
  %vm124 = vcmp.eq.s32.totalorder %v58, %v109
  %vm125 = vcmp.eq.s32.totalorder %v58, %v112
  %vm126 = vcmp.eq.s32.totalorder %v58, %v115
  %vm127 = vcmp.eq.s32.totalorder %v58, %v118
  %vm128 = vcmp.eq.s32.totalorder %v58, %v121
  %v129 = vsel %vm87, 1, 0
  %v130 = vsel %vm88, 1, 0
  %v131 = vsel %vm89, 1, 0
  %v132 = vsel %vm90, 1, 0
  %v133 = vsel %vm91, 1, 0
  %v134 = vsel %vm92, 1, 0
  %v135 = vsel %vm93, 1, 0
  %v136 = vcvt.s32.f32 %v129
  %v137 = vcvt.s32.f32 %v130
  %v138 = vcvt.s32.f32 %v131
  %v139 = vcvt.s32.f32 %v132
  %v140 = vcvt.s32.f32 %v133
  %v141 = vcvt.s32.f32 %v134
  %v142 = vcvt.s32.f32 %v135
  %v143 = vpack.c.bf16 %v137, %v136
  %v144 = vpack.c.bf16 %v139, %v138
  %v145 = vpack.c.bf16 %v141, %v140
  %v146 = vpack.c.bf16 %v142, %v142
  %v147 = vsel %vm122, 1, 0
  %v148 = vsel %vm123, 1, 0
  %v149 = vsel %vm124, 1, 0
  %v150 = vsel %vm125, 1, 0
  %v151 = vsel %vm126, 1, 0
  %v152 = vsel %vm127, 1, 0
  %v153 = vsel %vm128, 1, 0
  %v154 = vcvt.s32.f32 %v147
  %v155 = vcvt.s32.f32 %v148
  %v156 = vcvt.s32.f32 %v149
  %v157 = vcvt.s32.f32 %v150
  %v158 = vcvt.s32.f32 %v151
  %v159 = vcvt.s32.f32 %v152
  %v160 = vcvt.s32.f32 %v153
  %v161 = vpack.c.bf16 %v155, %v154
  %v162 = vpack.c.bf16 %v157, %v156
  %v163 = vpack.c.bf16 %v159, %v158
  %v164 = vpack.c.bf16 %v160, %v160
  %v165 = vlaneseq
  %v166 = vshrl.u32 %v165, 7
  %v167 = vld [vmem:[%s2] sm:$0x1]
  %v168 = vlaneseq
  %v169 = vshrl.u32 %v168, 7
  %v170 = vsub.s32 0, %v169
  %v171 = vrot.slane %v167, %v170
  %vm172 = vcmp.eq.s32.totalorder %v166, %v171
  %v173 = vsel %vm172, 1, 0
  %v174 = vcvt.s32.f32 %v173
  %v175 = vpack.c.bf16 %v174, %v174
  %vm176 = vcmp.eq.s32.totalorder %v166, %v58
  %vm177 = vcmask 457728
  %v178 = vsel %vm177, %v174, 0.0
  %179 = vadd.xlane.f32.xlu0 %v178
  %v180 = vpop.xlane.xlu0 %179
  %v181 = vmax.f32 %v180, 1.0
  %v182 = vrcp.pop %v181
  %v183 = vmul.f32 1.0, %v182
  %v184 = vld [vmem:[%s14] sm:$0xff]
  %v185 = vld [vmem:[%s3] sm:$0xff]
  %v186 = vld [vmem:[%s5] sm:$0x3]
  %188 = vset.pattern.permute.xlu0 0
  %189 = vperm.xlu0 %188, %v185
  %v190 = vpop.permute.xlu0 %189
  %v192 = vlaneseq
  %v193 = vshrl.u32 %v192, 7
  %v194 = vsub.s32 0, %v193
  %v195 = vrot.slane %v186, %v194
  %v196 = vmul.f32 %v190, %v195
  %197 = vset.pattern.permute.xlu0 1
  %198 = vperm.xlu0 %197, %v185
  %v199 = vpop.permute.xlu0 %198
  %v201 = vlaneseq
  %v202 = vshrl.u32 %v201, 7
  %v203 = vsub.s32 1, %v202
  %v204 = vrot.slane %v186, %v203
  %v205 = vmul.f32 %v199, %v204
  %v206 = vadd.f32 %v196, %v205
  %v207 = vlaneseq
  %v208 = vshrl.u32 %v207, 7
  %v209 = vsub.s32 0, %v208
  %v210 = vrot.slane %v54, %v209
  %v211 = vadd.f32 %v206, %v210
  %vm212 = vcmp.ge.f32.partialorder %v211, 0.0
  %v213 = vmul.f32 %v211, 0.2
  %v214 = vsel %vm212, %v211, %v213
  %vm215 = vcmask 523264
  %v216 = vsel %vm215, %v214, 0.0
  %217 = vadd.xlane.f32.xlu0 %v216
  %v218 = vpop.xlane.xlu0 %217
  %v219 = vrcp.pop 64.0
  %v220 = vmul.f32 %v218, %v219
  %v221 = vsub.f32 %v214, %v220
  %v222 = vmul.f32 %v221, %v221
  %v223 = vsel %vm215, %v222, 0.0
  %224 = vadd.xlane.f32.xlu0 %v223
  %v225 = vpop.xlane.xlu0 %224
  %v226 = vmul.f32 %v225, %v219
  %v227 = vadd.f32 %v226, 1e-05
  %v228 = vrsqrt.pop %v227
  %v229 = vmul.f32 %v221, %v228
  %v230 = vlaneseq
  %v231 = vshrl.u32 %v230, 7
  %v232 = vsub.s32 1, %v231
  %v233 = vrot.slane %v54, %v232
  %v234 = vmul.f32 %v229, %v233
  %v235 = vlaneseq
  %v236 = vshrl.u32 %v235, 7
  %v237 = vsub.s32 2, %v236
  %v238 = vrot.slane %v54, %v237
  %v239 = vadd.f32 %v234, %v238
  %v240 = vld [vmem:[%s4] sm:$0xff]
  %v241 = vld [vmem:[%s4 + $0x8] sm:$0xff]
  %v242 = vld [vmem:[%s4 + $0x10] sm:$0xff]
  %v243 = vld [vmem:[%s4 + $0x18] sm:$0xff]
  %v244 = vld [vmem:[%s4 + $0x20] sm:$0xff]
  %v245 = vld [vmem:[%s4 + $0x28] sm:$0xff]
  %v246 = vld [vmem:[%s4 + $0x30] sm:$0xff]
  %248 = vset.pattern.permute.xlu0 0
  %249 = vperm.xlu0 %248, %v240
  %v250 = vpop.permute.xlu0 %249
  %253 = vset.pattern.permute.xlu0 0
  %254 = vperm.xlu0 %253, %v241
  %v255 = vpop.permute.xlu0 %254
  %258 = vset.pattern.permute.xlu0 0
  %259 = vperm.xlu0 %258, %v242
  %v260 = vpop.permute.xlu0 %259
  %263 = vset.pattern.permute.xlu0 0
  %264 = vperm.xlu0 %263, %v243
  %v265 = vpop.permute.xlu0 %264
  %268 = vset.pattern.permute.xlu0 0
  %269 = vperm.xlu0 %268, %v244
  %v270 = vpop.permute.xlu0 %269
  %273 = vset.pattern.permute.xlu0 0
  %274 = vperm.xlu0 %273, %v245
  %v275 = vpop.permute.xlu0 %274
  %278 = vset.pattern.permute.xlu0 0
  %279 = vperm.xlu0 %278, %v246
  %v280 = vpop.permute.xlu0 %279
  %v282 = vlaneseq
  %v283 = vshrl.u32 %v282, 7
  %v284 = vsub.s32 2, %v283
  %v285 = vrot.slane %v56, %v284
  %v286 = vmul.f32 %v250, %v285
  %v287 = vmul.f32 %v255, %v285
  %v288 = vmul.f32 %v260, %v285
  %v289 = vmul.f32 %v265, %v285
  %v290 = vmul.f32 %v270, %v285
  %v291 = vmul.f32 %v275, %v285
  %v292 = vmul.f32 %v280, %v285
  %v293 = vlaneseq
  %v294 = vshrl.u32 %v293, 7
  %v295 = vsub.s32 3, %v294
  %v296 = vrot.slane %v56, %v295
  %v297 = vadd.f32 %v286, %v296
  %v298 = vadd.f32 %v287, %v296
  %v299 = vadd.f32 %v288, %v296
  %v300 = vadd.f32 %v289, %v296
  %v301 = vadd.f32 %v290, %v296
  %v302 = vadd.f32 %v291, %v296
  %v303 = vadd.f32 %v292, %v296
  %vm304 = vcmp.ge.f32.partialorder %v297, 0.0
  %vm305 = vcmp.ge.f32.partialorder %v298, 0.0
  %vm306 = vcmp.ge.f32.partialorder %v299, 0.0
  %vm307 = vcmp.ge.f32.partialorder %v300, 0.0
  %vm308 = vcmp.ge.f32.partialorder %v301, 0.0
  %vm309 = vcmp.ge.f32.partialorder %v302, 0.0
  %vm310 = vcmp.ge.f32.partialorder %v303, 0.0
  %v311 = vmul.f32 %v297, 0.2
  %v312 = vmul.f32 %v298, 0.2
  %v313 = vmul.f32 %v299, 0.2
  %v314 = vmul.f32 %v300, 0.2
  %v315 = vmul.f32 %v301, 0.2
  %v316 = vmul.f32 %v302, 0.2
  %v317 = vmul.f32 %v303, 0.2
  %v318 = vsel %vm304, %v297, %v311
  %v319 = vsel %vm305, %v298, %v312
  %v320 = vsel %vm306, %v299, %v313
  %v321 = vsel %vm307, %v300, %v314
  %v322 = vsel %vm308, %v301, %v315
  %v323 = vsel %vm309, %v302, %v316
  %v324 = vsel %vm310, %v303, %v317
  %v325 = vld [vmem:[%s6] sm:$0xff]
  %v326 = vld [vmem:[%s6 + $0x8] sm:$0xff]
  %v327 = vld [vmem:[%s6 + $0x10] sm:$0xff]
  %v328 = vld [vmem:[%s6 + $0x18] sm:$0xff]
  %v329 = vlaneseq
  %v330 = vshrl.u32 %v329, 7
  %v331 = vsub.s32 4, %v330
  %v332 = vrot.slane %v56, %v331
  %vm333 = vcmask 261120
  %v335 = vsel %vm333, %v318, 0
  %v338 = vsel %vm333, %v319, 0
  %v341 = vsel %vm333, %v320, 0
  %v344 = vsel %vm333, %v321, 0
  %v347 = vsel %vm333, %v322, 0
  %v350 = vsel %vm333, %v323, 0
  %v353 = vsel %vm333, %v324, 0
  %355 = vmatprep.subr.mxu0 0.0
  %356 = vmatpush1.msra.mxu0 %v325
  %357 = vmatprep.subr.mxu0 0.0
  %358 = vmatpush1.msra.mxu0 %v326
  %359 = vmatprep.subr.mxu0 0.0
  %360 = vmatpush1.msra.mxu0 %v327
  %361 = vmatprep.subr.mxu0 0.0
  %362 = vmatpush1.msra.mxu0 %v328
  %363 = vmatprep.subr.mxu0 0.0
  %364 = vmatpush1.msra.mxu0 0.0
  %365 = vmatprep.subr.mxu0 0.0
  %366 = vmatpush1.msra.mxu0 0.0
  %367 = vmatprep.subr.mxu0 0.0
  %368 = vmatpush1.msra.mxu0 0.0
  %369 = vmatprep.subr.mxu0 0.0
  %370 = vmatpush1.msra.mxu0 0.0
  %371 = vmatprep.subr.mxu0 0.0
  %372 = vmatpush1.msra.mxu0 0.0
  %373 = vmatprep.subr.mxu0 0.0
  %374 = vmatpush1.msra.mxu0 0.0
  %375 = vmatprep.subr.mxu0 0.0
  %376 = vmatpush1.msra.mxu0 0.0
  %377 = vmatprep.subr.mxu0 0.0
  %378 = vmatpush1.msra.mxu0 0.0
  %379 = vmatprep.subr.mxu0 0.0
  %380 = vmatpush1.msra.mxu0 0.0
  %381 = vmatprep.subr.mxu0 0.0
  %382 = vmatpush1.msra.mxu0 0.0
  %383 = vmatprep.subr.mxu0 0.0
  %384 = vmatpush1.msra.mxu0 0.0
  %385 = vmatprep.subr.mxu0 0.0
  %386 = vmatpush1.msra.mxu0 0.0
  %387 = vmatprep.subr.mxu0 0.0
  %388 = vmatpush1.msra.mxu0 0.0
  %389 = vmatprep.subr.mxu0 0.0
  %390 = vmatpush1.msra.mxu0 0.0
  %391 = vmatprep.subr.mxu0 0.0
  %392 = vmatpush1.msra.mxu0 0.0
  %393 = vmatprep.subr.mxu0 0.0
  %394 = vmatpush1.msra.mxu0 0.0
  %395 = vmatprep.subr.mxu0 0.0
  %396 = vmatpush1.msra.mxu0 0.0
  %397 = vmatprep.subr.mxu0 0.0
  %398 = vmatpush1.msra.mxu0 0.0
  %399 = vmatprep.subr.mxu0 0.0
  %400 = vmatpush1.msra.mxu0 0.0
  %401 = vmatprep.subr.mxu0 0.0
  %402 = vmatpush1.msra.mxu0 0.0
  %403 = vmatprep.subr.mxu0 0.0
  %404 = vmatpush1.msra.mxu0 0.0
  %405 = vmatprep.subr.mxu0 0.0
  %406 = vmatpush1.msra.mxu0 0.0
  %407 = vmatprep.subr.mxu0 0.0
  %408 = vmatpush1.msra.mxu0 0.0
  %409 = vmatprep.subr.mxu0 0.0
  %410 = vmatpush1.msra.mxu0 0.0
  %411 = vmatprep.subr.mxu0 0.0
  %412 = vmatpush1.msra.mxu0 0.0
  %413 = vmatprep.subr.mxu0 0.0
  %414 = vmatpush1.msra.mxu0 0.0
  %415 = vmatprep.subr.mxu0 0.0
  %416 = vmatpush1.msra.mxu0 0.0
  %417 = vmatprep.subr.mxu0 0.0
  %418 = vmatpush1.msra.mxu0 0.0
  %419 = vmatprep.mubr.f32.mxu0 0.0
  %420 = vmatmul.mubr.f32.gmra.mrb[0].mxu0 %v335
  %v421 = vpop.f32.mrb[0].mxu0
  %v422 = vadd.f32 %v332, %v421
  %v423 = vpop.f32.mrb[0].mxu0
  %424 = vmatprep.mubr.f32.mxu0 0.0
  %425 = vmatmul.mubr.f32.gmra.mrb[0].mxu0 %v338
  %v426 = vpop.f32.mrb[0].mxu0
  %v427 = vadd.f32 %v332, %v426
  %v428 = vpop.f32.mrb[0].mxu0
  %429 = vmatprep.mubr.f32.mxu0 0.0
  %430 = vmatmul.mubr.f32.gmra.mrb[0].mxu0 %v341
  %v431 = vpop.f32.mrb[0].mxu0
  %v432 = vadd.f32 %v332, %v431
  %v433 = vpop.f32.mrb[0].mxu0
  %434 = vmatprep.mubr.f32.mxu0 0.0
  %435 = vmatmul.mubr.f32.gmra.mrb[0].mxu0 %v344
  %v436 = vpop.f32.mrb[0].mxu0
  %v437 = vadd.f32 %v332, %v436
  %v438 = vpop.f32.mrb[0].mxu0
  %439 = vmatprep.mubr.f32.mxu0 0.0
  %440 = vmatmul.mubr.f32.gmra.mrb[0].mxu0 %v347
  %v441 = vpop.f32.mrb[0].mxu0
  %v442 = vadd.f32 %v332, %v441
  %v443 = vpop.f32.mrb[0].mxu0
  %444 = vmatprep.mubr.f32.mxu0 0.0
  %445 = vmatmul.mubr.f32.gmra.mrb[0].mxu0 %v350
  %v446 = vpop.f32.mrb[0].mxu0
  %v447 = vadd.f32 %v332, %v446
  %v448 = vpop.f32.mrb[0].mxu0
  %449 = vmatprep.mubr.f32.mxu0 0.0
  %450 = vmatmul.mubr.f32.gmra.mrb[0].mxu0 %v353
  %v451 = vpop.f32.mrb[0].mxu0
  %v452 = vadd.f32 %v332, %v451
  %v453 = vpop.f32.mrb[0].mxu0
  %454 = vdwg.mxu0
  %vm455 = vcmask 130048
  %v456 = vsel %vm455, %v422, 0.0
  %457 = vadd.xlane.f32.xlu0 %v456
  %v458 = vpop.xlane.xlu0 %457
  %v459 = vsel %vm455, %v427, 0.0
  %460 = vadd.xlane.f32.xlu0 %v459
  %v461 = vpop.xlane.xlu0 %460
  %v462 = vsel %vm455, %v432, 0.0
  %463 = vadd.xlane.f32.xlu0 %v462
  %v464 = vpop.xlane.xlu0 %463
  %v465 = vsel %vm455, %v437, 0.0
  %466 = vadd.xlane.f32.xlu0 %v465
  %v467 = vpop.xlane.xlu0 %466
  %v468 = vsel %vm455, %v442, 0.0
  %469 = vadd.xlane.f32.xlu0 %v468
  %v470 = vpop.xlane.xlu0 %469
  %v471 = vsel %vm455, %v447, 0.0
  %472 = vadd.xlane.f32.xlu0 %v471
  %v473 = vpop.xlane.xlu0 %472
  %v474 = vsel %vm455, %v452, 0.0
  %475 = vadd.xlane.f32.xlu0 %v474
  %v476 = vpop.xlane.xlu0 %475
  %v477 = vrcp.pop 16.0
  %v478 = vmul.f32 %v458, %v477
  %v479 = vmul.f32 %v461, %v477
  %v480 = vmul.f32 %v464, %v477
  %v481 = vmul.f32 %v467, %v477
  %v482 = vmul.f32 %v470, %v477
  %v483 = vmul.f32 %v473, %v477
  %v484 = vmul.f32 %v476, %v477
  %v485 = vsub.f32 %v422, %v478
  %v486 = vsub.f32 %v427, %v479
  %v487 = vsub.f32 %v432, %v480
  %v488 = vsub.f32 %v437, %v481
  %v489 = vsub.f32 %v442, %v482
  %v490 = vsub.f32 %v447, %v483
  %v491 = vsub.f32 %v452, %v484
  %v492 = vmul.f32 %v485, %v485
  %v493 = vmul.f32 %v486, %v486
  %v494 = vmul.f32 %v487, %v487
  %v495 = vmul.f32 %v488, %v488
  %v496 = vmul.f32 %v489, %v489
  %v497 = vmul.f32 %v490, %v490
  %v498 = vmul.f32 %v491, %v491
  %v499 = vsel %vm455, %v492, 0.0
  %500 = vadd.xlane.f32.xlu0 %v499
  %v501 = vpop.xlane.xlu0 %500
  %v502 = vsel %vm455, %v493, 0.0
  %503 = vadd.xlane.f32.xlu0 %v502
  %v504 = vpop.xlane.xlu0 %503
  %v505 = vsel %vm455, %v494, 0.0
  %506 = vadd.xlane.f32.xlu0 %v505
  %v507 = vpop.xlane.xlu0 %506
  %v508 = vsel %vm455, %v495, 0.0
  %509 = vadd.xlane.f32.xlu0 %v508
  %v510 = vpop.xlane.xlu0 %509
  %v511 = vsel %vm455, %v496, 0.0
  %512 = vadd.xlane.f32.xlu0 %v511
  %v513 = vpop.xlane.xlu0 %512
  %v514 = vsel %vm455, %v497, 0.0
  %515 = vadd.xlane.f32.xlu0 %v514
  %v516 = vpop.xlane.xlu0 %515
  %v517 = vsel %vm455, %v498, 0.0
  %518 = vadd.xlane.f32.xlu0 %v517
  %v519 = vpop.xlane.xlu0 %518
  %v520 = vmul.f32 %v501, %v477
  %v521 = vmul.f32 %v504, %v477
  %v522 = vmul.f32 %v507, %v477
  %v523 = vmul.f32 %v510, %v477
  %v524 = vmul.f32 %v513, %v477
  %v525 = vmul.f32 %v516, %v477
  %v526 = vmul.f32 %v519, %v477
  %v527 = vadd.f32 %v520, 1e-05
  %v528 = vadd.f32 %v521, 1e-05
  %v529 = vadd.f32 %v522, 1e-05
  %v530 = vadd.f32 %v523, 1e-05
  %v531 = vadd.f32 %v524, 1e-05
  %v532 = vadd.f32 %v525, 1e-05
  %v533 = vadd.f32 %v526, 1e-05
  %v534 = vrsqrt.pop %v527
  %v535 = vrsqrt.pop %v528
  %v536 = vrsqrt.pop %v529
  %v537 = vrsqrt.pop %v530
  %v538 = vrsqrt.pop %v531
  %v539 = vrsqrt.pop %v532
  %v540 = vrsqrt.pop %v533
  %v541 = vmul.f32 %v485, %v534
  %v542 = vmul.f32 %v486, %v535
  %v543 = vmul.f32 %v487, %v536
  %v544 = vmul.f32 %v488, %v537
  %v545 = vmul.f32 %v489, %v538
  %v546 = vmul.f32 %v490, %v539
  %v547 = vmul.f32 %v491, %v540
  %v548 = vlaneseq
  %v549 = vshrl.u32 %v548, 7
  %v550 = vsub.s32 5, %v549
  %v551 = vrot.slane %v56, %v550
  %v552 = vmul.f32 %v541, %v551
  %v553 = vmul.f32 %v542, %v551
  %v554 = vmul.f32 %v543, %v551
  %v555 = vmul.f32 %v544, %v551
  %v556 = vmul.f32 %v545, %v551
  %v557 = vmul.f32 %v546, %v551
  %v558 = vmul.f32 %v547, %v551
  %v559 = vlaneseq
  %v560 = vshrl.u32 %v559, 7
  %v561 = vsub.s32 6, %v560
  %v562 = vrot.slane %v56, %v561
  %v563 = vadd.f32 %v552, %v562
  %v564 = vadd.f32 %v553, %v562
  %v565 = vadd.f32 %v554, %v562
  %v566 = vadd.f32 %v555, %v562
  %v567 = vadd.f32 %v556, %v562
  %v568 = vadd.f32 %v557, %v562
  %v569 = vadd.f32 %v558, %v562
  %v570 = vld [vmem:[%s7] sm:$0xff]
  %v571 = vld [vmem:[%s7 + $0x8] sm:$0xff]
  %v573 = vsel %vm455, %v563, 0
  %v576 = vsel %vm455, %v564, 0
  %v579 = vsel %vm455, %v565, 0
  %v582 = vsel %vm455, %v566, 0
  %v585 = vsel %vm455, %v567, 0
  %v588 = vsel %vm455, %v568, 0
  %v591 = vsel %vm455, %v569, 0
  %593 = vmatprep.subr.mxu0 0.0
  %594 = vmatpush1.msra.mxu0 %v570
  %595 = vmatprep.subr.mxu0 0.0
  %596 = vmatpush1.msra.mxu0 %v571
  %597 = vmatprep.subr.mxu0 0.0
  %598 = vmatpush1.msra.mxu0 0.0
  %599 = vmatprep.subr.mxu0 0.0
  %600 = vmatpush1.msra.mxu0 0.0
  %601 = vmatprep.subr.mxu0 0.0
  %602 = vmatpush1.msra.mxu0 0.0
  %603 = vmatprep.subr.mxu0 0.0
  %604 = vmatpush1.msra.mxu0 0.0
  %605 = vmatprep.subr.mxu0 0.0
  %606 = vmatpush1.msra.mxu0 0.0
  %607 = vmatprep.subr.mxu0 0.0
  %608 = vmatpush1.msra.mxu0 0.0
  %609 = vmatprep.subr.mxu0 0.0
  %610 = vmatpush1.msra.mxu0 0.0
  %611 = vmatprep.subr.mxu0 0.0
  %612 = vmatpush1.msra.mxu0 0.0
  %613 = vmatprep.subr.mxu0 0.0
  %614 = vmatpush1.msra.mxu0 0.0
  %615 = vmatprep.subr.mxu0 0.0
  %616 = vmatpush1.msra.mxu0 0.0
  %617 = vmatprep.subr.mxu0 0.0
  %618 = vmatpush1.msra.mxu0 0.0
  %619 = vmatprep.subr.mxu0 0.0
  %620 = vmatpush1.msra.mxu0 0.0
  %621 = vmatprep.subr.mxu0 0.0
  %622 = vmatpush1.msra.mxu0 0.0
  %623 = vmatprep.subr.mxu0 0.0
  %624 = vmatpush1.msra.mxu0 0.0
  %625 = vmatprep.subr.mxu0 0.0
  %626 = vmatpush1.msra.mxu0 0.0
  %627 = vmatprep.subr.mxu0 0.0
  %628 = vmatpush1.msra.mxu0 0.0
  %629 = vmatprep.subr.mxu0 0.0
  %630 = vmatpush1.msra.mxu0 0.0
  %631 = vmatprep.subr.mxu0 0.0
  %632 = vmatpush1.msra.mxu0 0.0
  %633 = vmatprep.subr.mxu0 0.0
  %634 = vmatpush1.msra.mxu0 0.0
  %635 = vmatprep.subr.mxu0 0.0
  %636 = vmatpush1.msra.mxu0 0.0
  %637 = vmatprep.subr.mxu0 0.0
  %638 = vmatpush1.msra.mxu0 0.0
  %639 = vmatprep.subr.mxu0 0.0
  %640 = vmatpush1.msra.mxu0 0.0
  %641 = vmatprep.subr.mxu0 0.0
  %642 = vmatpush1.msra.mxu0 0.0
  %643 = vmatprep.subr.mxu0 0.0
  %644 = vmatpush1.msra.mxu0 0.0
  %645 = vmatprep.subr.mxu0 0.0
  %646 = vmatpush1.msra.mxu0 0.0
  %647 = vmatprep.subr.mxu0 0.0
  %648 = vmatpush1.msra.mxu0 0.0
  %649 = vmatprep.subr.mxu0 0.0
  %650 = vmatpush1.msra.mxu0 0.0
  %651 = vmatprep.subr.mxu0 0.0
  %652 = vmatpush1.msra.mxu0 0.0
  %653 = vmatprep.subr.mxu0 0.0
  %654 = vmatpush1.msra.mxu0 0.0
  %655 = vmatprep.subr.mxu0 0.0
  %656 = vmatpush1.msra.mxu0 0.0
  %657 = vmatprep.mubr.f32.mxu0 0.0
  %658 = vmatmul.mubr.f32.gmra.mrb[0].mxu0 %v573
  %v659 = vpop.f32.mrb[0].mxu0
  %v660 = vadd.f32 0.0, %v659
  %v661 = vpop.f32.mrb[0].mxu0
  %662 = vmatprep.mubr.f32.mxu0 0.0
  %663 = vmatmul.mubr.f32.gmra.mrb[0].mxu0 %v576
  %v664 = vpop.f32.mrb[0].mxu0
  %v665 = vadd.f32 0.0, %v664
  %v666 = vpop.f32.mrb[0].mxu0
  %667 = vmatprep.mubr.f32.mxu0 0.0
  %668 = vmatmul.mubr.f32.gmra.mrb[0].mxu0 %v579
  %v669 = vpop.f32.mrb[0].mxu0
  %v670 = vadd.f32 0.0, %v669
  %v671 = vpop.f32.mrb[0].mxu0
  %672 = vmatprep.mubr.f32.mxu0 0.0
  %673 = vmatmul.mubr.f32.gmra.mrb[0].mxu0 %v582
  %v674 = vpop.f32.mrb[0].mxu0
  %v675 = vadd.f32 0.0, %v674
  %v676 = vpop.f32.mrb[0].mxu0
  %677 = vmatprep.mubr.f32.mxu0 0.0
  %678 = vmatmul.mubr.f32.gmra.mrb[0].mxu0 %v585
  %v679 = vpop.f32.mrb[0].mxu0
  %v680 = vadd.f32 0.0, %v679
  %v681 = vpop.f32.mrb[0].mxu0
  %682 = vmatprep.mubr.f32.mxu0 0.0
  %683 = vmatmul.mubr.f32.gmra.mrb[0].mxu0 %v588
  %v684 = vpop.f32.mrb[0].mxu0
  %v685 = vadd.f32 0.0, %v684
  %v686 = vpop.f32.mrb[0].mxu0
  %687 = vmatprep.mubr.f32.mxu0 0.0
  %688 = vmatmul.mubr.f32.gmra.mrb[0].mxu0 %v591
  %v689 = vpop.f32.mrb[0].mxu0
  %v690 = vadd.f32 0.0, %v689
  %v691 = vpop.f32.mrb[0].mxu0
  %692 = vdwg.mxu0
  %v693 = vpack.c.bf16 %v665, %v660
  %v694 = vpack.c.bf16 %v675, %v670
  %v695 = vpack.c.bf16 %v685, %v680
  %v696 = vpack.c.bf16 %v690, %v690
  %v698 = vsel %vm177, %v175, 0
  %vm700 = vcmask 1043456
  %v702 = vsel %vm700, %v696, 0
  %704 = vmatprep.subr.bf16.mxu0 0
  %705 = vmatpush1.bf16.msra.mxu0 %v693
  %706 = vmatprep.subr.bf16.mxu0 0
  %707 = vmatpush1.bf16.msra.mxu0 %v694
  %708 = vmatprep.subr.bf16.mxu0 0
  %709 = vmatpush1.bf16.msra.mxu0 %v695
  %710 = vmatprep.subr.bf16.mxu0 0
  %711 = vmatpush1.bf16.msra.mxu0 %v702
  %712 = vmatprep.subr.bf16.mxu0 0
  %713 = vmatpush1.bf16.msra.mxu0 0
  %714 = vmatprep.subr.bf16.mxu0 0
  %715 = vmatpush1.bf16.msra.mxu0 0
  %716 = vmatprep.subr.bf16.mxu0 0
  %717 = vmatpush1.bf16.msra.mxu0 0
  %718 = vmatprep.subr.bf16.mxu0 0
  %719 = vmatpush1.bf16.msra.mxu0 0
  %720 = vmatprep.subr.bf16.mxu0 0
  %721 = vmatpush1.bf16.msra.mxu0 0
  %722 = vmatprep.subr.bf16.mxu0 0
  %723 = vmatpush1.bf16.msra.mxu0 0
  %724 = vmatprep.subr.bf16.mxu0 0
  %725 = vmatpush1.bf16.msra.mxu0 0
  %726 = vmatprep.subr.bf16.mxu0 0
  %727 = vmatpush1.bf16.msra.mxu0 0
  %728 = vmatprep.subr.bf16.mxu0 0
  %729 = vmatpush1.bf16.msra.mxu0 0
  %730 = vmatprep.subr.bf16.mxu0 0
  %731 = vmatpush1.bf16.msra.mxu0 0
  %732 = vmatprep.subr.bf16.mxu0 0
  %733 = vmatpush1.bf16.msra.mxu0 0
  %734 = vmatprep.subr.bf16.mxu0 0
  %735 = vmatpush1.bf16.msra.mxu0 0
  %736 = vmatprep.mubr.bf16.mxu0 0
  %737 = vmatmul.mubr.bf16.gmra.mrb[0].mxu0 %v698
  %v738 = vpop.f32.mrb[0].mxu0
  %v739 = vadd.f32 0.0, %v738
  %v740 = vpop.f32.mrb[0].mxu0
  %v741 = vpop.f32.mrb[0].mxu0
  %v742 = vpop.f32.mrb[0].mxu0
  %743 = vdwg.mxu0
  %v744 = vmul.f32 %v739, %v183
  %v745 = vld [vmem:[%s8] sm:$0xff]
  %v746 = vld [vmem:[%s8 + $0x8] sm:$0xff]
  %v747 = vld [vmem:[%s8 + $0x10] sm:$0xff]
  %v748 = vld [vmem:[%s8 + $0x18] sm:$0xff]
  %v749 = vld [vmem:[%s8 + $0x20] sm:$0xff]
  %v750 = vld [vmem:[%s8 + $0x28] sm:$0xff]
  %v751 = vld [vmem:[%s8 + $0x30] sm:$0xff]
  %v752 = vld [vmem:[%s8 + $0x38] sm:$0xff]
  %v753 = vld [vmem:[%s8 + $0x40] sm:$0xff]
  %v754 = vld [vmem:[%s8 + $0x48] sm:$0xff]
  %v755 = vld [vmem:[%s8 + $0x50] sm:$0xff]
  %v756 = vld [vmem:[%s8 + $0x58] sm:$0xff]
  %v757 = vld [vmem:[%s8 + $0x60] sm:$0xff]
  %v758 = vld [vmem:[%s8 + $0x68] sm:$0xff]
  %v759 = vld [vmem:[%s8 + $0x70] sm:$0xff]
  %v760 = vld [vmem:[%s8 + $0x78] sm:$0xff]
  %v761 = vld [vmem:[%s9] sm:$0xff]
  %v762 = vld [vmem:[%s9 + $0x8] sm:$0xff]
  %v763 = vld [vmem:[%s9 + $0x10] sm:$0xff]
  %v764 = vld [vmem:[%s9 + $0x18] sm:$0xff]
  %v765 = vld [vmem:[%s9 + $0x20] sm:$0xff]
  %v766 = vld [vmem:[%s9 + $0x28] sm:$0xff]
  %v767 = vld [vmem:[%s9 + $0x30] sm:$0xff]
  %v768 = vld [vmem:[%s9 + $0x38] sm:$0xff]
  %v770 = vsel %vm215, %v239, 0
  %772 = vmatprep.subr.mxu0 %v746
  %773 = vmatpush1.msra.mxu0 %v745
  %774 = vmatprep.subr.mxu0 %v748
  %775 = vmatpush1.msra.mxu0 %v747
  %776 = vmatprep.subr.mxu0 %v750
  %777 = vmatpush1.msra.mxu0 %v749
  %778 = vmatprep.subr.mxu0 %v752
  %779 = vmatpush1.msra.mxu0 %v751
  %780 = vmatprep.subr.mxu0 %v754
  %781 = vmatpush1.msra.mxu0 %v753
  %782 = vmatprep.subr.mxu0 %v756
  %783 = vmatpush1.msra.mxu0 %v755
  %784 = vmatprep.subr.mxu0 %v758
  %785 = vmatpush1.msra.mxu0 %v757
  %786 = vmatprep.subr.mxu0 %v760
  %787 = vmatpush1.msra.mxu0 %v759
  %788 = vmatprep.subr.mxu0 0.0
  %789 = vmatpush1.msra.mxu0 0.0
  %790 = vmatprep.subr.mxu0 0.0
  %791 = vmatpush1.msra.mxu0 0.0
  %792 = vmatprep.subr.mxu0 0.0
  %793 = vmatpush1.msra.mxu0 0.0
  %794 = vmatprep.subr.mxu0 0.0
  %795 = vmatpush1.msra.mxu0 0.0
  %796 = vmatprep.subr.mxu0 0.0
  %797 = vmatpush1.msra.mxu0 0.0
  %798 = vmatprep.subr.mxu0 0.0
  %799 = vmatpush1.msra.mxu0 0.0
  %800 = vmatprep.subr.mxu0 0.0
  %801 = vmatpush1.msra.mxu0 0.0
  %802 = vmatprep.subr.mxu0 0.0
  %803 = vmatpush1.msra.mxu0 0.0
  %804 = vmatprep.subr.mxu0 0.0
  %805 = vmatpush1.msra.mxu0 0.0
  %806 = vmatprep.subr.mxu0 0.0
  %807 = vmatpush1.msra.mxu0 0.0
  %808 = vmatprep.subr.mxu0 0.0
  %809 = vmatpush1.msra.mxu0 0.0
  %810 = vmatprep.subr.mxu0 0.0
  %811 = vmatpush1.msra.mxu0 0.0
  %812 = vmatprep.subr.mxu0 0.0
  %813 = vmatpush1.msra.mxu0 0.0
  %814 = vmatprep.subr.mxu0 0.0
  %815 = vmatpush1.msra.mxu0 0.0
  %816 = vmatprep.subr.mxu0 0.0
  %817 = vmatpush1.msra.mxu0 0.0
  %818 = vmatprep.subr.mxu0 0.0
  %819 = vmatpush1.msra.mxu0 0.0
  %820 = vmatprep.subr.mxu0 0.0
  %821 = vmatpush1.msra.mxu0 0.0
  %822 = vmatprep.subr.mxu0 0.0
  %823 = vmatpush1.msra.mxu0 0.0
  %824 = vmatprep.subr.mxu0 0.0
  %825 = vmatpush1.msra.mxu0 0.0
  %826 = vmatprep.subr.mxu0 0.0
  %827 = vmatpush1.msra.mxu0 0.0
  %828 = vmatprep.subr.mxu0 0.0
  %829 = vmatpush1.msra.mxu0 0.0
  %830 = vmatprep.subr.mxu0 0.0
  %831 = vmatpush1.msra.mxu0 0.0
  %832 = vmatprep.subr.mxu0 0.0
  %833 = vmatpush1.msra.mxu0 0.0
  %834 = vmatprep.subr.mxu0 0.0
  %835 = vmatpush1.msra.mxu0 0.0
  %836 = vmatprep.mubr.f32.mxu0 0.0
  %837 = vmatmul.mubr.f32.gmra.mrb[0].mxu0 %v770
  %v838 = vpop.f32.mrb[0].mxu0
  %v839 = vadd.f32 0.0, %v838
  %v840 = vpop.f32.mrb[0].mxu0
  %v841 = vadd.f32 0.0, %v840
  %842 = vdwg.mxu0
  %843 = vmatprep.subr.mxu0 0.0
  %844 = vmatpush1.msra.mxu0 %v761
  %845 = vmatprep.subr.mxu0 0.0
  %846 = vmatpush1.msra.mxu0 %v762
  %847 = vmatprep.subr.mxu0 0.0
  %848 = vmatpush1.msra.mxu0 %v763
  %849 = vmatprep.subr.mxu0 0.0
  %850 = vmatpush1.msra.mxu0 %v764
  %851 = vmatprep.subr.mxu0 0.0
  %852 = vmatpush1.msra.mxu0 %v765
  %853 = vmatprep.subr.mxu0 0.0
  %854 = vmatpush1.msra.mxu0 %v766
  %855 = vmatprep.subr.mxu0 0.0
  %856 = vmatpush1.msra.mxu0 %v767
  %857 = vmatprep.subr.mxu0 0.0
  %858 = vmatpush1.msra.mxu0 %v768
  %859 = vmatprep.subr.mxu0 0.0
  %860 = vmatpush1.msra.mxu0 0.0
  %861 = vmatprep.subr.mxu0 0.0
  %862 = vmatpush1.msra.mxu0 0.0
  %863 = vmatprep.subr.mxu0 0.0
  %864 = vmatpush1.msra.mxu0 0.0
  %865 = vmatprep.subr.mxu0 0.0
  %866 = vmatpush1.msra.mxu0 0.0
  %867 = vmatprep.subr.mxu0 0.0
  %868 = vmatpush1.msra.mxu0 0.0
  %869 = vmatprep.subr.mxu0 0.0
  %870 = vmatpush1.msra.mxu0 0.0
  %871 = vmatprep.subr.mxu0 0.0
  %872 = vmatpush1.msra.mxu0 0.0
  %873 = vmatprep.subr.mxu0 0.0
  %874 = vmatpush1.msra.mxu0 0.0
  %875 = vmatprep.subr.mxu0 0.0
  %876 = vmatpush1.msra.mxu0 0.0
  %877 = vmatprep.subr.mxu0 0.0
  %878 = vmatpush1.msra.mxu0 0.0
  %879 = vmatprep.subr.mxu0 0.0
  %880 = vmatpush1.msra.mxu0 0.0
  %881 = vmatprep.subr.mxu0 0.0
  %882 = vmatpush1.msra.mxu0 0.0
  %883 = vmatprep.subr.mxu0 0.0
  %884 = vmatpush1.msra.mxu0 0.0
  %885 = vmatprep.subr.mxu0 0.0
  %886 = vmatpush1.msra.mxu0 0.0
  %887 = vmatprep.subr.mxu0 0.0
  %888 = vmatpush1.msra.mxu0 0.0
  %889 = vmatprep.subr.mxu0 0.0
  %890 = vmatpush1.msra.mxu0 0.0
  %891 = vmatprep.subr.mxu0 0.0
  %892 = vmatpush1.msra.mxu0 0.0
  %893 = vmatprep.subr.mxu0 0.0
  %894 = vmatpush1.msra.mxu0 0.0
  %895 = vmatprep.subr.mxu0 0.0
  %896 = vmatpush1.msra.mxu0 0.0
  %897 = vmatprep.subr.mxu0 0.0
  %898 = vmatpush1.msra.mxu0 0.0
  %899 = vmatprep.subr.mxu0 0.0
  %900 = vmatpush1.msra.mxu0 0.0
  %901 = vmatprep.subr.mxu0 0.0
  %902 = vmatpush1.msra.mxu0 0.0
  %903 = vmatprep.subr.mxu0 0.0
  %904 = vmatpush1.msra.mxu0 0.0
  %905 = vmatprep.subr.mxu0 0.0
  %906 = vmatpush1.msra.mxu0 0.0
  %907 = vmatprep.mubr.f32.mxu0 0.0
  %908 = vmatmul.mubr.f32.gmra.mrb[0].mxu0 %v770
  %v909 = vpop.f32.mrb[0].mxu0
  %v910 = vadd.f32 0.0, %v909
  %v911 = vpop.f32.mrb[0].mxu0
  %912 = vdwg.mxu0
  %v913 = vpack.c.bf16 %v839, %v839
  %v914 = vpack.c.bf16 %v841, %v841
  %vm915 = vcmask 64512
  %v917 = vsel %vm915, %v143, 0
  %v920 = vsel %vm915, %v144, 0
  %v923 = vsel %vm915, %v145, 0
  %v926 = vsel %vm915, %v146, 0
  %v929 = vsel %vm700, %v913, 0
  %v932 = vsel %vm700, %v914, 0
  %934 = vmatprep.subr.bf16.mxu0 %v932
  %935 = vmatpush1.bf16.msra.mxu0 %v929
  %936 = vmatprep.subr.bf16.mxu0 0
  %937 = vmatpush1.bf16.msra.mxu0 0
  %938 = vmatprep.subr.bf16.mxu0 0
  %939 = vmatpush1.bf16.msra.mxu0 0
  %940 = vmatprep.subr.bf16.mxu0 0
  %941 = vmatpush1.bf16.msra.mxu0 0
  %942 = vmatprep.subr.bf16.mxu0 0
  %943 = vmatpush1.bf16.msra.mxu0 0
  %944 = vmatprep.subr.bf16.mxu0 0
  %945 = vmatpush1.bf16.msra.mxu0 0
  %946 = vmatprep.subr.bf16.mxu0 0
  %947 = vmatpush1.bf16.msra.mxu0 0
  %948 = vmatprep.subr.bf16.mxu0 0
  %949 = vmatpush1.bf16.msra.mxu0 0
  %950 = vmatprep.subr.bf16.mxu0 0
  %951 = vmatpush1.bf16.msra.mxu0 0
  %952 = vmatprep.subr.bf16.mxu0 0
  %953 = vmatpush1.bf16.msra.mxu0 0
  %954 = vmatprep.subr.bf16.mxu0 0
  %955 = vmatpush1.bf16.msra.mxu0 0
  %956 = vmatprep.subr.bf16.mxu0 0
  %957 = vmatpush1.bf16.msra.mxu0 0
  %958 = vmatprep.subr.bf16.mxu0 0
  %959 = vmatpush1.bf16.msra.mxu0 0
  %960 = vmatprep.subr.bf16.mxu0 0
  %961 = vmatpush1.bf16.msra.mxu0 0
  %962 = vmatprep.subr.bf16.mxu0 0
  %963 = vmatpush1.bf16.msra.mxu0 0
  %964 = vmatprep.subr.bf16.mxu0 0
  %965 = vmatpush1.bf16.msra.mxu0 0
  %966 = vmatprep.mubr.bf16.mxu0 0
  %967 = vmatmul.mubr.bf16.gmra.mrb[0].mxu0 %v917
  %v968 = vpop.f32.mrb[0].mxu0
  %v969 = vadd.f32 0.0, %v968
  %v970 = vpop.f32.mrb[0].mxu0
  %v971 = vadd.f32 0.0, %v970
  %v972 = vpop.f32.mrb[0].mxu0
  %v973 = vadd.f32 0.0, %v972
  %v974 = vpop.f32.mrb[0].mxu0
  %v975 = vadd.f32 0.0, %v974
  %976 = vmatprep.mubr.bf16.mxu0 0
  %977 = vmatmul.mubr.bf16.gmra.mrb[0].mxu0 %v920
  %v978 = vpop.f32.mrb[0].mxu0
  %v979 = vadd.f32 0.0, %v978
  %v980 = vpop.f32.mrb[0].mxu0
  %v981 = vadd.f32 0.0, %v980
  %v982 = vpop.f32.mrb[0].mxu0
  %v983 = vadd.f32 0.0, %v982
  %v984 = vpop.f32.mrb[0].mxu0
  %v985 = vadd.f32 0.0, %v984
  %986 = vmatprep.mubr.bf16.mxu0 0
  %987 = vmatmul.mubr.bf16.gmra.mrb[0].mxu0 %v923
  %v988 = vpop.f32.mrb[0].mxu0
  %v989 = vadd.f32 0.0, %v988
  %v990 = vpop.f32.mrb[0].mxu0
  %v991 = vadd.f32 0.0, %v990
  %v992 = vpop.f32.mrb[0].mxu0
  %v993 = vadd.f32 0.0, %v992
  %v994 = vpop.f32.mrb[0].mxu0
  %v995 = vadd.f32 0.0, %v994
  %996 = vmatprep.mubr.bf16.mxu0 0
  %997 = vmatmul.mubr.bf16.gmra.mrb[0].mxu0 %v926
  %v998 = vpop.f32.mrb[0].mxu0
  %v999 = vadd.f32 0.0, %v998
  %v1000 = vpop.f32.mrb[0].mxu0
  %v1001 = vadd.f32 0.0, %v1000
  %v1002 = vpop.f32.mrb[0].mxu0
  %v1003 = vpop.f32.mrb[0].mxu0
  %1004 = vdwg.mxu0
  %v1005 = vpack.c.bf16 %v910, %v910
  %1007 = vrot.lane.b32.xlu0 %v1005, 124
  %v1008 = vpop.permute.xlu0 %1007
  %v1010 = vsel %vm915, %v161, 0
  %v1013 = vsel %vm915, %v162, 0
  %v1016 = vsel %vm915, %v163, 0
  %v1019 = vsel %vm915, %v164, 0
  %v1022 = vsel %vm700, %v1008, 0
  %1024 = vmatprep.subr.bf16.mxu0 0
  %1025 = vmatpush1.bf16.msra.mxu0 %v1022
  %1026 = vmatprep.subr.bf16.mxu0 0
  %1027 = vmatpush1.bf16.msra.mxu0 0
  %1028 = vmatprep.subr.bf16.mxu0 0
  %1029 = vmatpush1.bf16.msra.mxu0 0
  %1030 = vmatprep.subr.bf16.mxu0 0
  %1031 = vmatpush1.bf16.msra.mxu0 0
  %1032 = vmatprep.subr.bf16.mxu0 0
  %1033 = vmatpush1.bf16.msra.mxu0 0
  %1034 = vmatprep.subr.bf16.mxu0 0
  %1035 = vmatpush1.bf16.msra.mxu0 0
  %1036 = vmatprep.subr.bf16.mxu0 0
  %1037 = vmatpush1.bf16.msra.mxu0 0
  %1038 = vmatprep.subr.bf16.mxu0 0
  %1039 = vmatpush1.bf16.msra.mxu0 0
  %1040 = vmatprep.subr.bf16.mxu0 0
  %1041 = vmatpush1.bf16.msra.mxu0 0
  %1042 = vmatprep.subr.bf16.mxu0 0
  %1043 = vmatpush1.bf16.msra.mxu0 0
  %1044 = vmatprep.subr.bf16.mxu0 0
  %1045 = vmatpush1.bf16.msra.mxu0 0
  %1046 = vmatprep.subr.bf16.mxu0 0
  %1047 = vmatpush1.bf16.msra.mxu0 0
  %1048 = vmatprep.subr.bf16.mxu0 0
  %1049 = vmatpush1.bf16.msra.mxu0 0
  %1050 = vmatprep.subr.bf16.mxu0 0
  %1051 = vmatpush1.bf16.msra.mxu0 0
  %1052 = vmatprep.subr.bf16.mxu0 0
  %1053 = vmatpush1.bf16.msra.mxu0 0
  %1054 = vmatprep.subr.bf16.mxu0 0
  %1055 = vmatpush1.bf16.msra.mxu0 0
  %1056 = vmatprep.mubr.bf16.mxu0 0
  %1057 = vmatmul.mubr.bf16.gmra.mrb[0].mxu0 %v1010
  %v1058 = vpop.f32.mrb[0].mxu0
  %v1059 = vadd.f32 0.0, %v1058
  %v1060 = vpop.f32.mrb[0].mxu0
  %v1061 = vpop.f32.mrb[0].mxu0
  %v1062 = vadd.f32 0.0, %v1061
  %v1063 = vpop.f32.mrb[0].mxu0
  %1064 = vmatprep.mubr.bf16.mxu0 0
  %1065 = vmatmul.mubr.bf16.gmra.mrb[0].mxu0 %v1013
  %v1066 = vpop.f32.mrb[0].mxu0
  %v1067 = vadd.f32 0.0, %v1066
  %v1068 = vpop.f32.mrb[0].mxu0
  %v1069 = vpop.f32.mrb[0].mxu0
  %v1070 = vadd.f32 0.0, %v1069
  %v1071 = vpop.f32.mrb[0].mxu0
  %1072 = vmatprep.mubr.bf16.mxu0 0
  %1073 = vmatmul.mubr.bf16.gmra.mrb[0].mxu0 %v1016
  %v1074 = vpop.f32.mrb[0].mxu0
  %v1075 = vadd.f32 0.0, %v1074
  %v1076 = vpop.f32.mrb[0].mxu0
  %v1077 = vpop.f32.mrb[0].mxu0
  %v1078 = vadd.f32 0.0, %v1077
  %v1079 = vpop.f32.mrb[0].mxu0
  %1080 = vmatprep.mubr.bf16.mxu0 0
  %1081 = vmatmul.mubr.bf16.gmra.mrb[0].mxu0 %v1019
  %v1082 = vpop.f32.mrb[0].mxu0
  %v1083 = vadd.f32 0.0, %v1082
  %v1084 = vpop.f32.mrb[0].mxu0
  %v1085 = vpop.f32.mrb[0].mxu0
  %v1086 = vpop.f32.mrb[0].mxu0
  %1087 = vdwg.mxu0
  %v1089 = vsel %vm700, %v1005, 0
  %1091 = vmatprep.subr.bf16.mxu0 0
  %1092 = vmatpush1.bf16.msra.mxu0 %v1089
  %1093 = vmatprep.subr.bf16.mxu0 0
  %1094 = vmatpush1.bf16.msra.mxu0 0
  %1095 = vmatprep.subr.bf16.mxu0 0
  %1096 = vmatpush1.bf16.msra.mxu0 0
  %1097 = vmatprep.subr.bf16.mxu0 0
  %1098 = vmatpush1.bf16.msra.mxu0 0
  %1099 = vmatprep.subr.bf16.mxu0 0
  %1100 = vmatpush1.bf16.msra.mxu0 0
  %1101 = vmatprep.subr.bf16.mxu0 0
  %1102 = vmatpush1.bf16.msra.mxu0 0
  %1103 = vmatprep.subr.bf16.mxu0 0
  %1104 = vmatpush1.bf16.msra.mxu0 0
  %1105 = vmatprep.subr.bf16.mxu0 0
  %1106 = vmatpush1.bf16.msra.mxu0 0
  %1107 = vmatprep.subr.bf16.mxu0 0
  %1108 = vmatpush1.bf16.msra.mxu0 0
  %1109 = vmatprep.subr.bf16.mxu0 0
  %1110 = vmatpush1.bf16.msra.mxu0 0
  %1111 = vmatprep.subr.bf16.mxu0 0
  %1112 = vmatpush1.bf16.msra.mxu0 0
  %1113 = vmatprep.subr.bf16.mxu0 0
  %1114 = vmatpush1.bf16.msra.mxu0 0
  %1115 = vmatprep.subr.bf16.mxu0 0
  %1116 = vmatpush1.bf16.msra.mxu0 0
  %1117 = vmatprep.subr.bf16.mxu0 0
  %1118 = vmatpush1.bf16.msra.mxu0 0
  %1119 = vmatprep.subr.bf16.mxu0 0
  %1120 = vmatpush1.bf16.msra.mxu0 0
  %1121 = vmatprep.subr.bf16.mxu0 0
  %1122 = vmatpush1.bf16.msra.mxu0 0
  %1123 = vmatprep.mubr.bf16.mxu0 0
  %1124 = vmatmul.mubr.bf16.gmra.mrb[0].mxu0 %v917
  %v1125 = vpop.f32.mrb[0].mxu0
  %v1126 = vadd.f32 %v1059, %v1125
  %v1127 = vpop.f32.mrb[0].mxu0
  %v1128 = vpop.f32.mrb[0].mxu0
  %v1129 = vadd.f32 %v1062, %v1128
  %v1130 = vpop.f32.mrb[0].mxu0
  %1131 = vmatprep.mubr.bf16.mxu0 0
  %1132 = vmatmul.mubr.bf16.gmra.mrb[0].mxu0 %v920
  %v1133 = vpop.f32.mrb[0].mxu0
  %v1134 = vadd.f32 %v1067, %v1133
  %v1135 = vpop.f32.mrb[0].mxu0
  %v1136 = vpop.f32.mrb[0].mxu0
  %v1137 = vadd.f32 %v1070, %v1136
  %v1138 = vpop.f32.mrb[0].mxu0
  %1139 = vmatprep.mubr.bf16.mxu0 0
  %1140 = vmatmul.mubr.bf16.gmra.mrb[0].mxu0 %v923
  %v1141 = vpop.f32.mrb[0].mxu0
  %v1142 = vadd.f32 %v1075, %v1141
  %v1143 = vpop.f32.mrb[0].mxu0
  %v1144 = vpop.f32.mrb[0].mxu0
  %v1145 = vadd.f32 %v1078, %v1144
  %v1146 = vpop.f32.mrb[0].mxu0
  %1147 = vmatprep.mubr.bf16.mxu0 0
  %1148 = vmatmul.mubr.bf16.gmra.mrb[0].mxu0 %v926
  %v1149 = vpop.f32.mrb[0].mxu0
  %v1150 = vadd.f32 %v1083, %v1149
  %v1151 = vpop.f32.mrb[0].mxu0
  %v1152 = vpop.f32.mrb[0].mxu0
  %v1153 = vpop.f32.mrb[0].mxu0
  %1154 = vdwg.mxu0
  %v1155 = vadd.f32 %v1126, %v660
  %v1156 = vadd.f32 %v1129, %v665
  %v1157 = vadd.f32 %v1134, %v670
  %v1158 = vadd.f32 %v1137, %v675
  %v1159 = vadd.f32 %v1142, %v680
  %v1160 = vadd.f32 %v1145, %v685
  %v1161 = vadd.f32 %v1150, %v690
  %vm1162 = vcmp.ge.f32.partialorder %v1155, 0.0
  %vm1163 = vcmp.ge.f32.partialorder %v1156, 0.0
  %vm1164 = vcmp.ge.f32.partialorder %v1157, 0.0
  %vm1165 = vcmp.ge.f32.partialorder %v1158, 0.0
  %vm1166 = vcmp.ge.f32.partialorder %v1159, 0.0
  %vm1167 = vcmp.ge.f32.partialorder %v1160, 0.0
  %vm1168 = vcmp.ge.f32.partialorder %v1161, 0.0
  %v1169 = vmul.f32 %v1155, 0.2
  %v1170 = vmul.f32 %v1156, 0.2
  %v1171 = vmul.f32 %v1157, 0.2
  %v1172 = vmul.f32 %v1158, 0.2
  %v1173 = vmul.f32 %v1159, 0.2
  %v1174 = vmul.f32 %v1160, 0.2
  %v1175 = vmul.f32 %v1161, 0.2
  %v1176 = vsel %vm1162, %v1155, %v1169
  %v1177 = vsel %vm1163, %v1156, %v1170
  %v1178 = vsel %vm1164, %v1157, %v1171
  %v1179 = vsel %vm1165, %v1158, %v1172
  %v1180 = vsel %vm1166, %v1159, %v1173
  %v1181 = vsel %vm1167, %v1160, %v1174
  %v1182 = vsel %vm1168, %v1161, %v1175
  %1184 = vrot.lane.b32.xlu0 %v910, 124
  %v1185 = vpop.permute.xlu0 %1184
  %v1187 = vadd.f32 %v910, %v1185
  %v1188 = vadd.f32 %v1187, %v744
  %vm1189 = vcmp.ge.f32.partialorder %v1188, 0.0
  %v1190 = vmul.f32 %v1188, 0.2
  %v1191 = vsel %vm1189, %v1188, %v1190
  %1193 = vset.pattern.permute.xlu0 0
  %1194 = vperm.xlu0 %1193, %v1176
  %v1195 = vpop.permute.xlu0 %1194
  %1198 = vset.pattern.permute.xlu0 0
  %1199 = vperm.xlu0 %1198, %v1177
  %v1200 = vpop.permute.xlu0 %1199
  %1203 = vset.pattern.permute.xlu0 0
  %1204 = vperm.xlu0 %1203, %v1178
  %v1205 = vpop.permute.xlu0 %1204
  %1208 = vset.pattern.permute.xlu0 0
  %1209 = vperm.xlu0 %1208, %v1179
  %v1210 = vpop.permute.xlu0 %1209
  %1213 = vset.pattern.permute.xlu0 0
  %1214 = vperm.xlu0 %1213, %v1180
  %v1215 = vpop.permute.xlu0 %1214
  %1218 = vset.pattern.permute.xlu0 0
  %1219 = vperm.xlu0 %1218, %v1181
  %v1220 = vpop.permute.xlu0 %1219
  %1223 = vset.pattern.permute.xlu0 0
  %1224 = vperm.xlu0 %1223, %v1182
  %v1225 = vpop.permute.xlu0 %1224
  %v1227 = vsel %vm122, %v1195, -1e+30
  %v1228 = vsel %vm123, %v1200, -1e+30
  %v1229 = vsel %vm124, %v1205, -1e+30
  %v1230 = vsel %vm125, %v1210, -1e+30
  %v1231 = vsel %vm126, %v1215, -1e+30
  %v1232 = vsel %vm127, %v1220, -1e+30
  %v1233 = vsel %vm128, %v1225, -1e+30
  %v1234 = vsel %vm915, %v1227, -inf
  %v1235 = vsel %vm915, %v1228, -inf
  %v1236 = vsel %vm915, %v1229, -inf
  %v1237 = vsel %vm915, %v1230, -inf
  %v1238 = vsel %vm915, %v1231, -inf
  %v1239 = vmax.f32 %v1234, %v1238
  %v1240 = vsel %vm915, %v1232, -inf
  %v1241 = vmax.f32 %v1235, %v1240
  %v1242 = vsel %vm915, %v1233, -inf
  %v1243 = vmax.f32 %v1236, %v1242
  %v1244 = vmax.f32 %v1239, %v1241
  %v1245 = vmax.f32 %v1243, %v1237
  %v1246 = vmax.f32 %v1244, %v1245
  %v1247 = vrot.slane %v1246, 4
  %v1248 = vmax.f32 %v1246, %v1247
  %v1249 = vrot.slane %v1248, 2
  %v1250 = vmax.f32 %v1248, %v1249
  %v1251 = vrot.slane %v1250, 1
  %v1252 = vmax.f32 %v1250, %v1251
  %v1253 = vsel %vm176, %v1252, 0.0
  %v1254 = vsel %vm915, %v1253, 0.0
  %1255 = vadd.xlane.f32.xlu0 %v1254
  %v1256 = vpop.xlane.xlu0 %1255
  %1257 = vset.pattern.permute.xlu0 1
  %1258 = vperm.xlu0 %1257, %v1176
  %v1259 = vpop.permute.xlu0 %1258
  %1261 = vset.pattern.permute.xlu0 1
  %1262 = vperm.xlu0 %1261, %v1177
  %v1263 = vpop.permute.xlu0 %1262
  %1265 = vset.pattern.permute.xlu0 1
  %1266 = vperm.xlu0 %1265, %v1178
  %v1267 = vpop.permute.xlu0 %1266
  %1269 = vset.pattern.permute.xlu0 1
  %1270 = vperm.xlu0 %1269, %v1179
  %v1271 = vpop.permute.xlu0 %1270
  %1273 = vset.pattern.permute.xlu0 1
  %1274 = vperm.xlu0 %1273, %v1180
  %v1275 = vpop.permute.xlu0 %1274
  %1277 = vset.pattern.permute.xlu0 1
  %1278 = vperm.xlu0 %1277, %v1181
  %v1279 = vpop.permute.xlu0 %1278
  %1281 = vset.pattern.permute.xlu0 1
  %1282 = vperm.xlu0 %1281, %v1182
  %v1283 = vpop.permute.xlu0 %1282
  %v1285 = vsel %vm122, %v1259, -1e+30
  %v1286 = vsel %vm123, %v1263, -1e+30
  %v1287 = vsel %vm124, %v1267, -1e+30
  %v1288 = vsel %vm125, %v1271, -1e+30
  %v1289 = vsel %vm126, %v1275, -1e+30
  %v1290 = vsel %vm127, %v1279, -1e+30
  %v1291 = vsel %vm128, %v1283, -1e+30
  %v1292 = vsel %vm915, %v1285, -inf
  %v1293 = vsel %vm915, %v1286, -inf
  %v1294 = vsel %vm915, %v1287, -inf
  %v1295 = vsel %vm915, %v1288, -inf
  %v1296 = vsel %vm915, %v1289, -inf
  %v1297 = vmax.f32 %v1292, %v1296
  %v1298 = vsel %vm915, %v1290, -inf
  %v1299 = vmax.f32 %v1293, %v1298
  %v1300 = vsel %vm915, %v1291, -inf
  %v1301 = vmax.f32 %v1294, %v1300
  %v1302 = vmax.f32 %v1297, %v1299
  %v1303 = vmax.f32 %v1301, %v1295
  %v1304 = vmax.f32 %v1302, %v1303
  %v1305 = vrot.slane %v1304, 4
  %v1306 = vmax.f32 %v1304, %v1305
  %v1307 = vrot.slane %v1306, 2
  %v1308 = vmax.f32 %v1306, %v1307
  %v1309 = vrot.slane %v1308, 1
  %v1310 = vmax.f32 %v1308, %v1309
  %v1311 = vsel %vm176, %v1310, 0.0
  %v1312 = vsel %vm915, %v1311, 0.0
  %1313 = vadd.xlane.f32.xlu0 %v1312
  %v1314 = vpop.xlane.xlu0 %1313
  %1315 = vset.pattern.permute.xlu0 2
  %1316 = vperm.xlu0 %1315, %v1176
  %v1317 = vpop.permute.xlu0 %1316
  %1319 = vset.pattern.permute.xlu0 2
  %1320 = vperm.xlu0 %1319, %v1177
  %v1321 = vpop.permute.xlu0 %1320
  %1323 = vset.pattern.permute.xlu0 2
  %1324 = vperm.xlu0 %1323, %v1178
  %v1325 = vpop.permute.xlu0 %1324
  %1327 = vset.pattern.permute.xlu0 2
  %1328 = vperm.xlu0 %1327, %v1179
  %v1329 = vpop.permute.xlu0 %1328
  %1331 = vset.pattern.permute.xlu0 2
  %1332 = vperm.xlu0 %1331, %v1180
  %v1333 = vpop.permute.xlu0 %1332
  %1335 = vset.pattern.permute.xlu0 2
  %1336 = vperm.xlu0 %1335, %v1181
  %v1337 = vpop.permute.xlu0 %1336
  %1339 = vset.pattern.permute.xlu0 2
  %1340 = vperm.xlu0 %1339, %v1182
  %v1341 = vpop.permute.xlu0 %1340
  %v1343 = vsel %vm122, %v1317, -1e+30
  %v1344 = vsel %vm123, %v1321, -1e+30
  %v1345 = vsel %vm124, %v1325, -1e+30
  %v1346 = vsel %vm125, %v1329, -1e+30
  %v1347 = vsel %vm126, %v1333, -1e+30
  %v1348 = vsel %vm127, %v1337, -1e+30
  %v1349 = vsel %vm128, %v1341, -1e+30
  %v1350 = vsel %vm915, %v1343, -inf
  %v1351 = vsel %vm915, %v1344, -inf
  %v1352 = vsel %vm915, %v1345, -inf
  %v1353 = vsel %vm915, %v1346, -inf
  %v1354 = vsel %vm915, %v1347, -inf
  %v1355 = vmax.f32 %v1350, %v1354
  %v1356 = vsel %vm915, %v1348, -inf
  %v1357 = vmax.f32 %v1351, %v1356
  %v1358 = vsel %vm915, %v1349, -inf
  %v1359 = vmax.f32 %v1352, %v1358
  %v1360 = vmax.f32 %v1355, %v1357
  %v1361 = vmax.f32 %v1359, %v1353
  %v1362 = vmax.f32 %v1360, %v1361
  %v1363 = vrot.slane %v1362, 4
  %v1364 = vmax.f32 %v1362, %v1363
  %v1365 = vrot.slane %v1364, 2
  %v1366 = vmax.f32 %v1364, %v1365
  %v1367 = vrot.slane %v1366, 1
  %v1368 = vmax.f32 %v1366, %v1367
  %v1369 = vsel %vm176, %v1368, 0.0
  %v1370 = vsel %vm915, %v1369, 0.0
  %1371 = vadd.xlane.f32.xlu0 %v1370
  %v1372 = vpop.xlane.xlu0 %1371
  %1373 = vset.pattern.permute.xlu0 3
  %1374 = vperm.xlu0 %1373, %v1176
  %v1375 = vpop.permute.xlu0 %1374
  %1377 = vset.pattern.permute.xlu0 3
  %1378 = vperm.xlu0 %1377, %v1177
  %v1379 = vpop.permute.xlu0 %1378
  %1381 = vset.pattern.permute.xlu0 3
  %1382 = vperm.xlu0 %1381, %v1178
  %v1383 = vpop.permute.xlu0 %1382
  %1385 = vset.pattern.permute.xlu0 3
  %1386 = vperm.xlu0 %1385, %v1179
  %v1387 = vpop.permute.xlu0 %1386
  %1389 = vset.pattern.permute.xlu0 3
  %1390 = vperm.xlu0 %1389, %v1180
  %v1391 = vpop.permute.xlu0 %1390
  %1393 = vset.pattern.permute.xlu0 3
  %1394 = vperm.xlu0 %1393, %v1181
  %v1395 = vpop.permute.xlu0 %1394
  %1397 = vset.pattern.permute.xlu0 3
  %1398 = vperm.xlu0 %1397, %v1182
  %v1399 = vpop.permute.xlu0 %1398
  %v1401 = vsel %vm122, %v1375, -1e+30
  %v1402 = vsel %vm123, %v1379, -1e+30
  %v1403 = vsel %vm124, %v1383, -1e+30
  %v1404 = vsel %vm125, %v1387, -1e+30
  %v1405 = vsel %vm126, %v1391, -1e+30
  %v1406 = vsel %vm127, %v1395, -1e+30
  %v1407 = vsel %vm128, %v1399, -1e+30
  %v1408 = vsel %vm915, %v1401, -inf
  %v1409 = vsel %vm915, %v1402, -inf
  %v1410 = vsel %vm915, %v1403, -inf
  %v1411 = vsel %vm915, %v1404, -inf
  %v1412 = vsel %vm915, %v1405, -inf
  %v1413 = vmax.f32 %v1408, %v1412
  %v1414 = vsel %vm915, %v1406, -inf
  %v1415 = vmax.f32 %v1409, %v1414
  %v1416 = vsel %vm915, %v1407, -inf
  %v1417 = vmax.f32 %v1410, %v1416
  %v1418 = vmax.f32 %v1413, %v1415
  %v1419 = vmax.f32 %v1417, %v1411
  %v1420 = vmax.f32 %v1418, %v1419
  %v1421 = vrot.slane %v1420, 4
  %v1422 = vmax.f32 %v1420, %v1421
  %v1423 = vrot.slane %v1422, 2
  %v1424 = vmax.f32 %v1422, %v1423
  %v1425 = vrot.slane %v1424, 1
  %v1426 = vmax.f32 %v1424, %v1425
  %v1427 = vsel %vm176, %v1426, 0.0
  %v1428 = vsel %vm915, %v1427, 0.0
  %1429 = vadd.xlane.f32.xlu0 %v1428
  %v1430 = vpop.xlane.xlu0 %1429
  %vm1431 = vcmask 7168
  %v1432 = vsel %vm1431, %v1256, %v1314
  %vm1433 = vcmask 15360
  %v1434 = vsel %vm1433, %v1432, %v1372
  %vm1435 = vcmask 23552
  %v1436 = vsel %vm1435, %v1434, %v1430
  %v1437 = vmax.f32 %v1436, %v1191
  %v1438 = vpack.c.bf16 %v1437, %v1437
  %v1439 = vunpack.c.l.bf16 %v1438
  %v1440 = vsub.f32 %v1191, %v1439
  %v1441 = vmul.f32 %v1440, 1.442695
  %v1442 = vpow.pop %v1441
  %v1444 = vsel %vm700, %v1438, 0
  %1446 = vmatprep.subr.bf16.mxu0 0
  %1447 = vmatpush1.bf16.msra.mxu0 %v1444
  %1448 = vmatprep.subr.bf16.mxu0 0
  %1449 = vmatpush1.bf16.msra.mxu0 0
  %1450 = vmatprep.subr.bf16.mxu0 0
  %1451 = vmatpush1.bf16.msra.mxu0 0
  %1452 = vmatprep.subr.bf16.mxu0 0
  %1453 = vmatpush1.bf16.msra.mxu0 0
  %1454 = vmatprep.subr.bf16.mxu0 0
  %1455 = vmatpush1.bf16.msra.mxu0 0
  %1456 = vmatprep.subr.bf16.mxu0 0
  %1457 = vmatpush1.bf16.msra.mxu0 0
  %1458 = vmatprep.subr.bf16.mxu0 0
  %1459 = vmatpush1.bf16.msra.mxu0 0
  %1460 = vmatprep.subr.bf16.mxu0 0
  %1461 = vmatpush1.bf16.msra.mxu0 0
  %1462 = vmatprep.subr.bf16.mxu0 0
  %1463 = vmatpush1.bf16.msra.mxu0 0
  %1464 = vmatprep.subr.bf16.mxu0 0
  %1465 = vmatpush1.bf16.msra.mxu0 0
  %1466 = vmatprep.subr.bf16.mxu0 0
  %1467 = vmatpush1.bf16.msra.mxu0 0
  %1468 = vmatprep.subr.bf16.mxu0 0
  %1469 = vmatpush1.bf16.msra.mxu0 0
  %1470 = vmatprep.subr.bf16.mxu0 0
  %1471 = vmatpush1.bf16.msra.mxu0 0
  %1472 = vmatprep.subr.bf16.mxu0 0
  %1473 = vmatpush1.bf16.msra.mxu0 0
  %1474 = vmatprep.subr.bf16.mxu0 0
  %1475 = vmatpush1.bf16.msra.mxu0 0
  %1476 = vmatprep.subr.bf16.mxu0 0
  %1477 = vmatpush1.bf16.msra.mxu0 0
  %1478 = vmatprep.mubr.bf16.mxu0 0
  %1479 = vmatmul.mubr.bf16.gmra.mrb[0].mxu0 %v1010
  %v1480 = vpop.f32.mrb[0].mxu0
  %v1481 = vadd.f32 0.0, %v1480
  %v1482 = vpop.f32.mrb[0].mxu0
  %v1483 = vpop.f32.mrb[0].mxu0
  %v1484 = vadd.f32 0.0, %v1483
  %v1485 = vpop.f32.mrb[0].mxu0
  %1486 = vmatprep.mubr.bf16.mxu0 0
  %1487 = vmatmul.mubr.bf16.gmra.mrb[0].mxu0 %v1013
  %v1488 = vpop.f32.mrb[0].mxu0
  %v1489 = vadd.f32 0.0, %v1488
  %v1490 = vpop.f32.mrb[0].mxu0
  %v1491 = vpop.f32.mrb[0].mxu0
  %v1492 = vadd.f32 0.0, %v1491
  %v1493 = vpop.f32.mrb[0].mxu0
  %1494 = vmatprep.mubr.bf16.mxu0 0
  %1495 = vmatmul.mubr.bf16.gmra.mrb[0].mxu0 %v1016
  %v1496 = vpop.f32.mrb[0].mxu0
  %v1497 = vadd.f32 0.0, %v1496
  %v1498 = vpop.f32.mrb[0].mxu0
  %v1499 = vpop.f32.mrb[0].mxu0
  %v1500 = vadd.f32 0.0, %v1499
  %v1501 = vpop.f32.mrb[0].mxu0
  %1502 = vmatprep.mubr.bf16.mxu0 0
  %1503 = vmatmul.mubr.bf16.gmra.mrb[0].mxu0 %v1019
  %v1504 = vpop.f32.mrb[0].mxu0
  %v1505 = vadd.f32 0.0, %v1504
  %v1506 = vpop.f32.mrb[0].mxu0
  %v1507 = vpop.f32.mrb[0].mxu0
  %v1508 = vpop.f32.mrb[0].mxu0
  %1509 = vdwg.mxu0
  %v1510 = vsub.f32 %v1176, %v1481
  %v1511 = vsub.f32 %v1177, %v1484
  %v1512 = vsub.f32 %v1178, %v1489
  %v1513 = vsub.f32 %v1179, %v1492
  %v1514 = vsub.f32 %v1180, %v1497
  %v1515 = vsub.f32 %v1181, %v1500
  %v1516 = vsub.f32 %v1182, %v1505
  %v1517 = vmul.f32 %v1510, 1.442695
  %v1518 = vpow.pop %v1517
  %v1519 = vmul.f32 %v1511, 1.442695
  %v1520 = vpow.pop %v1519
  %v1521 = vmul.f32 %v1512, 1.442695
  %v1522 = vpow.pop %v1521
  %v1523 = vmul.f32 %v1513, 1.442695
  %v1524 = vpow.pop %v1523
  %v1525 = vmul.f32 %v1514, 1.442695
  %v1526 = vpow.pop %v1525
  %v1527 = vmul.f32 %v1515, 1.442695
  %v1528 = vpow.pop %v1527
  %v1529 = vmul.f32 %v1516, 1.442695
  %v1530 = vpow.pop %v1529
  %v1532 = vcombine.high %v184, %v184
  %vm1533 = vcmask 31744
  %v1535 = vsel %vm1533, %v1518, 0
  %v1538 = vsel %vm1533, %v1520, 0
  %v1541 = vsel %vm1533, %v1522, 0
  %v1544 = vsel %vm1533, %v1524, 0
  %v1547 = vsel %vm1533, %v1526, 0
  %v1550 = vsel %vm1533, %v1528, 0
  %v1553 = vsel %vm1533, %v1530, 0
  %v1555 = vsel %vm700, %v184, 0
  %v1557 = vsel %vm700, %v1532, 0
  %1559 = vmatprep.subr.mxu0 %v1557
  %1560 = vmatpush1.msra.mxu0 %v1555
  %1561 = vmatprep.subr.mxu0 0.0
  %1562 = vmatpush1.msra.mxu0 0.0
  %1563 = vmatprep.subr.mxu0 0.0
  %1564 = vmatpush1.msra.mxu0 0.0
  %1565 = vmatprep.subr.mxu0 0.0
  %1566 = vmatpush1.msra.mxu0 0.0
  %1567 = vmatprep.subr.mxu0 0.0
  %1568 = vmatpush1.msra.mxu0 0.0
  %1569 = vmatprep.subr.mxu0 0.0
  %1570 = vmatpush1.msra.mxu0 0.0
  %1571 = vmatprep.subr.mxu0 0.0
  %1572 = vmatpush1.msra.mxu0 0.0
  %1573 = vmatprep.subr.mxu0 0.0
  %1574 = vmatpush1.msra.mxu0 0.0
  %1575 = vmatprep.subr.mxu0 0.0
  %1576 = vmatpush1.msra.mxu0 0.0
  %1577 = vmatprep.subr.mxu0 0.0
  %1578 = vmatpush1.msra.mxu0 0.0
  %1579 = vmatprep.subr.mxu0 0.0
  %1580 = vmatpush1.msra.mxu0 0.0
  %1581 = vmatprep.subr.mxu0 0.0
  %1582 = vmatpush1.msra.mxu0 0.0
  %1583 = vmatprep.subr.mxu0 0.0
  %1584 = vmatpush1.msra.mxu0 0.0
  %1585 = vmatprep.subr.mxu0 0.0
  %1586 = vmatpush1.msra.mxu0 0.0
  %1587 = vmatprep.subr.mxu0 0.0
  %1588 = vmatpush1.msra.mxu0 0.0
  %1589 = vmatprep.subr.mxu0 0.0
  %1590 = vmatpush1.msra.mxu0 0.0
  %1591 = vmatprep.subr.mxu0 0.0
  %1592 = vmatpush1.msra.mxu0 0.0
  %1593 = vmatprep.subr.mxu0 0.0
  %1594 = vmatpush1.msra.mxu0 0.0
  %1595 = vmatprep.subr.mxu0 0.0
  %1596 = vmatpush1.msra.mxu0 0.0
  %1597 = vmatprep.subr.mxu0 0.0
  %1598 = vmatpush1.msra.mxu0 0.0
  %1599 = vmatprep.subr.mxu0 0.0
  %1600 = vmatpush1.msra.mxu0 0.0
  %1601 = vmatprep.subr.mxu0 0.0
  %1602 = vmatpush1.msra.mxu0 0.0
  %1603 = vmatprep.subr.mxu0 0.0
  %1604 = vmatpush1.msra.mxu0 0.0
  %1605 = vmatprep.subr.mxu0 0.0
  %1606 = vmatpush1.msra.mxu0 0.0
  %1607 = vmatprep.subr.mxu0 0.0
  %1608 = vmatpush1.msra.mxu0 0.0
  %1609 = vmatprep.subr.mxu0 0.0
  %1610 = vmatpush1.msra.mxu0 0.0
  %1611 = vmatprep.subr.mxu0 0.0
  %1612 = vmatpush1.msra.mxu0 0.0
  %1613 = vmatprep.subr.mxu0 0.0
  %1614 = vmatpush1.msra.mxu0 0.0
  %1615 = vmatprep.subr.mxu0 0.0
  %1616 = vmatpush1.msra.mxu0 0.0
  %1617 = vmatprep.subr.mxu0 0.0
  %1618 = vmatpush1.msra.mxu0 0.0
  %1619 = vmatprep.subr.mxu0 0.0
  %1620 = vmatpush1.msra.mxu0 0.0
  %1621 = vmatprep.subr.mxu0 0.0
  %1622 = vmatpush1.msra.mxu0 0.0
  %1623 = vmatprep.mubr.f32.mxu0 0.0
  %1624 = vmatmul.mubr.f32.gmra.mrb[0].mxu0 %v1535
  %v1625 = vpop.f32.mrb[0].mxu0
  %v1626 = vadd.f32 0.0, %v1625
  %v1627 = vpop.f32.mrb[0].mxu0
  %v1628 = vadd.f32 0.0, %v1627
  %1629 = vmatprep.mubr.f32.mxu0 0.0
  %1630 = vmatmul.mubr.f32.gmra.mrb[0].mxu0 %v1538
  %v1631 = vpop.f32.mrb[0].mxu0
  %v1632 = vadd.f32 0.0, %v1631
  %v1633 = vpop.f32.mrb[0].mxu0
  %v1634 = vadd.f32 0.0, %v1633
  %1635 = vmatprep.mubr.f32.mxu0 0.0
  %1636 = vmatmul.mubr.f32.gmra.mrb[0].mxu0 %v1541
  %v1637 = vpop.f32.mrb[0].mxu0
  %v1638 = vadd.f32 0.0, %v1637
  %v1639 = vpop.f32.mrb[0].mxu0
  %v1640 = vadd.f32 0.0, %v1639
  %1641 = vmatprep.mubr.f32.mxu0 0.0
  %1642 = vmatmul.mubr.f32.gmra.mrb[0].mxu0 %v1544
  %v1643 = vpop.f32.mrb[0].mxu0
  %v1644 = vadd.f32 0.0, %v1643
  %v1645 = vpop.f32.mrb[0].mxu0
  %v1646 = vadd.f32 0.0, %v1645
  %1647 = vmatprep.mubr.f32.mxu0 0.0
  %1648 = vmatmul.mubr.f32.gmra.mrb[0].mxu0 %v1547
  %v1649 = vpop.f32.mrb[0].mxu0
  %v1650 = vadd.f32 0.0, %v1649
  %v1651 = vpop.f32.mrb[0].mxu0
  %v1652 = vadd.f32 0.0, %v1651
  %1653 = vmatprep.mubr.f32.mxu0 0.0
  %1654 = vmatmul.mubr.f32.gmra.mrb[0].mxu0 %v1550
  %v1655 = vpop.f32.mrb[0].mxu0
  %v1656 = vadd.f32 0.0, %v1655
  %v1657 = vpop.f32.mrb[0].mxu0
  %v1658 = vadd.f32 0.0, %v1657
  %1659 = vmatprep.mubr.f32.mxu0 0.0
  %1660 = vmatmul.mubr.f32.gmra.mrb[0].mxu0 %v1553
  %v1661 = vpop.f32.mrb[0].mxu0
  %v1662 = vadd.f32 0.0, %v1661
  %v1663 = vpop.f32.mrb[0].mxu0
  %v1664 = vadd.f32 0.0, %v1663
  %1665 = vdwg.mxu0
  %v1667 = vsel %vm1533, %v1442, 0
  %1669 = vmatprep.subr.mxu0 %v1557
  %1670 = vmatpush1.msra.mxu0 %v1555
  %1671 = vmatprep.subr.mxu0 0.0
  %1672 = vmatpush1.msra.mxu0 0.0
  %1673 = vmatprep.subr.mxu0 0.0
  %1674 = vmatpush1.msra.mxu0 0.0
  %1675 = vmatprep.subr.mxu0 0.0
  %1676 = vmatpush1.msra.mxu0 0.0
  %1677 = vmatprep.subr.mxu0 0.0
  %1678 = vmatpush1.msra.mxu0 0.0
  %1679 = vmatprep.subr.mxu0 0.0
  %1680 = vmatpush1.msra.mxu0 0.0
  %1681 = vmatprep.subr.mxu0 0.0
  %1682 = vmatpush1.msra.mxu0 0.0
  %1683 = vmatprep.subr.mxu0 0.0
  %1684 = vmatpush1.msra.mxu0 0.0
  %1685 = vmatprep.subr.mxu0 0.0
  %1686 = vmatpush1.msra.mxu0 0.0
  %1687 = vmatprep.subr.mxu0 0.0
  %1688 = vmatpush1.msra.mxu0 0.0
  %1689 = vmatprep.subr.mxu0 0.0
  %1690 = vmatpush1.msra.mxu0 0.0
  %1691 = vmatprep.subr.mxu0 0.0
  %1692 = vmatpush1.msra.mxu0 0.0
  %1693 = vmatprep.subr.mxu0 0.0
  %1694 = vmatpush1.msra.mxu0 0.0
  %1695 = vmatprep.subr.mxu0 0.0
  %1696 = vmatpush1.msra.mxu0 0.0
  %1697 = vmatprep.subr.mxu0 0.0
  %1698 = vmatpush1.msra.mxu0 0.0
  %1699 = vmatprep.subr.mxu0 0.0
  %1700 = vmatpush1.msra.mxu0 0.0
  %1701 = vmatprep.subr.mxu0 0.0
  %1702 = vmatpush1.msra.mxu0 0.0
  %1703 = vmatprep.subr.mxu0 0.0
  %1704 = vmatpush1.msra.mxu0 0.0
  %1705 = vmatprep.subr.mxu0 0.0
  %1706 = vmatpush1.msra.mxu0 0.0
  %1707 = vmatprep.subr.mxu0 0.0
  %1708 = vmatpush1.msra.mxu0 0.0
  %1709 = vmatprep.subr.mxu0 0.0
  %1710 = vmatpush1.msra.mxu0 0.0
  %1711 = vmatprep.subr.mxu0 0.0
  %1712 = vmatpush1.msra.mxu0 0.0
  %1713 = vmatprep.subr.mxu0 0.0
  %1714 = vmatpush1.msra.mxu0 0.0
  %1715 = vmatprep.subr.mxu0 0.0
  %1716 = vmatpush1.msra.mxu0 0.0
  %1717 = vmatprep.subr.mxu0 0.0
  %1718 = vmatpush1.msra.mxu0 0.0
  %1719 = vmatprep.subr.mxu0 0.0
  %1720 = vmatpush1.msra.mxu0 0.0
  %1721 = vmatprep.subr.mxu0 0.0
  %1722 = vmatpush1.msra.mxu0 0.0
  %1723 = vmatprep.subr.mxu0 0.0
  %1724 = vmatpush1.msra.mxu0 0.0
  %1725 = vmatprep.subr.mxu0 0.0
  %1726 = vmatpush1.msra.mxu0 0.0
  %1727 = vmatprep.subr.mxu0 0.0
  %1728 = vmatpush1.msra.mxu0 0.0
  %1729 = vmatprep.subr.mxu0 0.0
  %1730 = vmatpush1.msra.mxu0 0.0
  %1731 = vmatprep.subr.mxu0 0.0
  %1732 = vmatpush1.msra.mxu0 0.0
  %1733 = vmatprep.mubr.f32.mxu0 0.0
  %1734 = vmatmul.mubr.f32.gmra.mrb[0].mxu0 %v1667
  %v1735 = vpop.f32.mrb[0].mxu0
  %v1736 = vadd.f32 0.0, %v1735
  %v1737 = vpop.f32.mrb[0].mxu0
  %v1738 = vadd.f32 0.0, %v1737
  %1739 = vdwg.mxu0
  %v1740 = vmul.f32 %v1626, %v969
  %v1741 = vmul.f32 %v1628, %v971
  %v1742 = vmul.f32 %v1632, %v973
  %v1743 = vmul.f32 %v1634, %v975
  %v1744 = vmul.f32 %v1638, %v979
  %v1745 = vmul.f32 %v1640, %v981
  %v1746 = vmul.f32 %v1644, %v983
  %v1747 = vmul.f32 %v1646, %v985
  %v1748 = vmul.f32 %v1650, %v989
  %v1749 = vmul.f32 %v1652, %v991
  %v1750 = vmul.f32 %v1656, %v993
  %v1751 = vmul.f32 %v1658, %v995
  %v1752 = vmul.f32 %v1662, %v999
  %v1753 = vmul.f32 %v1664, %v1001
  %v1754 = vpack.c.bf16 %v1742, %v1740
  %v1755 = vpack.c.bf16 %v1743, %v1741
  %v1756 = vpack.c.bf16 %v1746, %v1744
  %v1757 = vpack.c.bf16 %v1747, %v1745
  %v1758 = vpack.c.bf16 %v1750, %v1748
  %v1759 = vpack.c.bf16 %v1751, %v1749
  %v1760 = vpack.c.bf16 %v1752, %v1752
  %v1761 = vpack.c.bf16 %v1753, %v1753
  %v1762 = vpack.c.bf16 %v1520, %v1518
  %v1763 = vpack.c.bf16 %v1524, %v1522
  %v1764 = vpack.c.bf16 %v1528, %v1526
  %v1765 = vpack.c.bf16 %v1530, %v1530
  %v1766 = vmul.f32 %v1736, %v839
  %v1767 = vmul.f32 %v1738, %v841
  %v1769 = vsel %vm700, %v1760, 0
  %v1772 = vsel %vm700, %v1761, 0
  %1774 = vmatprep.subr.bf16.mxu0 %v1755
  %1775 = vmatpush1.bf16.msra.mxu0 %v1754
  %1776 = vmatprep.subr.bf16.mxu0 %v1757
  %1777 = vmatpush1.bf16.msra.mxu0 %v1756
  %1778 = vmatprep.subr.bf16.mxu0 %v1759
  %1779 = vmatpush1.bf16.msra.mxu0 %v1758
  %1780 = vmatprep.subr.bf16.mxu0 %v1772
  %1781 = vmatpush1.bf16.msra.mxu0 %v1769
  %1782 = vmatprep.subr.bf16.mxu0 0
  %1783 = vmatpush1.bf16.msra.mxu0 0
  %1784 = vmatprep.subr.bf16.mxu0 0
  %1785 = vmatpush1.bf16.msra.mxu0 0
  %1786 = vmatprep.subr.bf16.mxu0 0
  %1787 = vmatpush1.bf16.msra.mxu0 0
  %1788 = vmatprep.subr.bf16.mxu0 0
  %1789 = vmatpush1.bf16.msra.mxu0 0
  %1790 = vmatprep.subr.bf16.mxu0 0
  %1791 = vmatpush1.bf16.msra.mxu0 0
  %1792 = vmatprep.subr.bf16.mxu0 0
  %1793 = vmatpush1.bf16.msra.mxu0 0
  %1794 = vmatprep.subr.bf16.mxu0 0
  %1795 = vmatpush1.bf16.msra.mxu0 0
  %1796 = vmatprep.subr.bf16.mxu0 0
  %1797 = vmatpush1.bf16.msra.mxu0 0
  %1798 = vmatprep.subr.bf16.mxu0 0
  %1799 = vmatpush1.bf16.msra.mxu0 0
  %1800 = vmatprep.subr.bf16.mxu0 0
  %1801 = vmatpush1.bf16.msra.mxu0 0
  %1802 = vmatprep.subr.bf16.mxu0 0
  %1803 = vmatpush1.bf16.msra.mxu0 0
  %1804 = vmatprep.subr.bf16.mxu0 0
  %1805 = vmatpush1.bf16.msra.mxu0 0
  %1806 = vmatprep.mubr.bf16.mxu0 0
  %1807 = vmatmul.mubr.bf16.gmra.mrb[0].mxu0 %v698
  %v1808 = vpop.f32.mrb[0].mxu0
  %v1809 = vadd.f32 %v1766, %v1808
  %v1810 = vpop.f32.mrb[0].mxu0
  %v1811 = vadd.f32 %v1767, %v1810
  %v1812 = vpop.f32.mrb[0].mxu0
  %v1813 = vpop.f32.mrb[0].mxu0
  %1814 = vdwg.mxu0
  %v1816 = vsel %vm700, %v1765, 0
  %1818 = vmatprep.subr.bf16.mxu0 0
  %1819 = vmatpush1.bf16.msra.mxu0 %v1762
  %1820 = vmatprep.subr.bf16.mxu0 0
  %1821 = vmatpush1.bf16.msra.mxu0 %v1763
  %1822 = vmatprep.subr.bf16.mxu0 0
  %1823 = vmatpush1.bf16.msra.mxu0 %v1764
  %1824 = vmatprep.subr.bf16.mxu0 0
  %1825 = vmatpush1.bf16.msra.mxu0 %v1816
  %1826 = vmatprep.subr.bf16.mxu0 0
  %1827 = vmatpush1.bf16.msra.mxu0 0
  %1828 = vmatprep.subr.bf16.mxu0 0
  %1829 = vmatpush1.bf16.msra.mxu0 0
  %1830 = vmatprep.subr.bf16.mxu0 0
  %1831 = vmatpush1.bf16.msra.mxu0 0
  %1832 = vmatprep.subr.bf16.mxu0 0
  %1833 = vmatpush1.bf16.msra.mxu0 0
  %1834 = vmatprep.subr.bf16.mxu0 0
  %1835 = vmatpush1.bf16.msra.mxu0 0
  %1836 = vmatprep.subr.bf16.mxu0 0
  %1837 = vmatpush1.bf16.msra.mxu0 0
  %1838 = vmatprep.subr.bf16.mxu0 0
  %1839 = vmatpush1.bf16.msra.mxu0 0
  %1840 = vmatprep.subr.bf16.mxu0 0
  %1841 = vmatpush1.bf16.msra.mxu0 0
  %1842 = vmatprep.subr.bf16.mxu0 0
  %1843 = vmatpush1.bf16.msra.mxu0 0
  %1844 = vmatprep.subr.bf16.mxu0 0
  %1845 = vmatpush1.bf16.msra.mxu0 0
  %1846 = vmatprep.subr.bf16.mxu0 0
  %1847 = vmatpush1.bf16.msra.mxu0 0
  %1848 = vmatprep.subr.bf16.mxu0 0
  %1849 = vmatpush1.bf16.msra.mxu0 0
  %1850 = vmatprep.mubr.bf16.mxu0 0
  %1851 = vmatmul.mubr.bf16.gmra.mrb[0].mxu0 %v698
  %v1852 = vpop.f32.mrb[0].mxu0
  %v1853 = vadd.f32 %v1442, %v1852
  %v1854 = vpop.f32.mrb[0].mxu0
  %v1855 = vpop.f32.mrb[0].mxu0
  %v1856 = vpop.f32.mrb[0].mxu0
  %1857 = vdwg.mxu0
  %v1858 = vrcp.pop %v1853
  %v1860 = vsel %vm1533, %v1858, 0
  %1862 = vmatprep.subr.mxu0 %v1557
  %1863 = vmatpush1.msra.mxu0 %v1555
  %1864 = vmatprep.subr.mxu0 0.0
  %1865 = vmatpush1.msra.mxu0 0.0
  %1866 = vmatprep.subr.mxu0 0.0
  %1867 = vmatpush1.msra.mxu0 0.0
  %1868 = vmatprep.subr.mxu0 0.0
  %1869 = vmatpush1.msra.mxu0 0.0
  %1870 = vmatprep.subr.mxu0 0.0
  %1871 = vmatpush1.msra.mxu0 0.0
  %1872 = vmatprep.subr.mxu0 0.0
  %1873 = vmatpush1.msra.mxu0 0.0
  %1874 = vmatprep.subr.mxu0 0.0
  %1875 = vmatpush1.msra.mxu0 0.0
  %1876 = vmatprep.subr.mxu0 0.0
  %1877 = vmatpush1.msra.mxu0 0.0
  %1878 = vmatprep.subr.mxu0 0.0
  %1879 = vmatpush1.msra.mxu0 0.0
  %1880 = vmatprep.subr.mxu0 0.0
  %1881 = vmatpush1.msra.mxu0 0.0
  %1882 = vmatprep.subr.mxu0 0.0
  %1883 = vmatpush1.msra.mxu0 0.0
  %1884 = vmatprep.subr.mxu0 0.0
  %1885 = vmatpush1.msra.mxu0 0.0
  %1886 = vmatprep.subr.mxu0 0.0
  %1887 = vmatpush1.msra.mxu0 0.0
  %1888 = vmatprep.subr.mxu0 0.0
  %1889 = vmatpush1.msra.mxu0 0.0
  %1890 = vmatprep.subr.mxu0 0.0
  %1891 = vmatpush1.msra.mxu0 0.0
  %1892 = vmatprep.subr.mxu0 0.0
  %1893 = vmatpush1.msra.mxu0 0.0
  %1894 = vmatprep.subr.mxu0 0.0
  %1895 = vmatpush1.msra.mxu0 0.0
  %1896 = vmatprep.subr.mxu0 0.0
  %1897 = vmatpush1.msra.mxu0 0.0
  %1898 = vmatprep.subr.mxu0 0.0
  %1899 = vmatpush1.msra.mxu0 0.0
  %1900 = vmatprep.subr.mxu0 0.0
  %1901 = vmatpush1.msra.mxu0 0.0
  %1902 = vmatprep.subr.mxu0 0.0
  %1903 = vmatpush1.msra.mxu0 0.0
  %1904 = vmatprep.subr.mxu0 0.0
  %1905 = vmatpush1.msra.mxu0 0.0
  %1906 = vmatprep.subr.mxu0 0.0
  %1907 = vmatpush1.msra.mxu0 0.0
  %1908 = vmatprep.subr.mxu0 0.0
  %1909 = vmatpush1.msra.mxu0 0.0
  %1910 = vmatprep.subr.mxu0 0.0
  %1911 = vmatpush1.msra.mxu0 0.0
  %1912 = vmatprep.subr.mxu0 0.0
  %1913 = vmatpush1.msra.mxu0 0.0
  %1914 = vmatprep.subr.mxu0 0.0
  %1915 = vmatpush1.msra.mxu0 0.0
  %1916 = vmatprep.subr.mxu0 0.0
  %1917 = vmatpush1.msra.mxu0 0.0
  %1918 = vmatprep.subr.mxu0 0.0
  %1919 = vmatpush1.msra.mxu0 0.0
  %1920 = vmatprep.subr.mxu0 0.0
  %1921 = vmatpush1.msra.mxu0 0.0
  %1922 = vmatprep.subr.mxu0 0.0
  %1923 = vmatpush1.msra.mxu0 0.0
  %1924 = vmatprep.subr.mxu0 0.0
  %1925 = vmatpush1.msra.mxu0 0.0
  %1926 = vmatprep.mubr.f32.mxu0 0.0
  %1927 = vmatmul.mubr.f32.gmra.mrb[0].mxu0 %v1860
  %v1928 = vpop.f32.mrb[0].mxu0
  %v1929 = vadd.f32 0.0, %v1928
  %v1930 = vpop.f32.mrb[0].mxu0
  %v1931 = vadd.f32 0.0, %v1930
  %1932 = vdwg.mxu0
  %v1933 = vmul.f32 %v1809, %v1929
  %v1934 = vmul.f32 %v1811, %v1931
  %v1935 = vlaneseq
  %v1936 = vshrl.u32 %v1935, 7
  %v1937 = vsub.s32 3, %v1936
  %v1938 = vrot.slane %v54, %v1937
  %v1939 = vlaneseq
  %v1940 = vshrl.u32 %v1939, 7
  %v1941 = vsub.s32 3, %v1940
  %v1942 = vrot.slane %v55, %v1941
  %v1943 = vadd.f32 %v1933, %v1938
  %v1944 = vadd.f32 %v1934, %v1942
  %vm1945 = vcmp.ge.f32.partialorder %v1943, 0.0
  %vm1946 = vcmp.ge.f32.partialorder %v1944, 0.0
  %v1947 = vmul.f32 %v1943, 0.1
  %v1948 = vmul.f32 %v1944, 0.1
  %v1949 = vsel %vm1945, %v1943, %v1947
  %v1950 = vsel %vm1946, %v1944, %v1948
  %v1951 = vadd.f32 %v1949, %v1950
  %1952 = vadd.xlane.f32.xlu0 %v1951
  %v1953 = vpop.xlane.xlu0 %1952
  %v1954 = vrcp.pop 256.0
  %v1955 = vmul.f32 %v1953, %v1954
  %v1956 = vsub.f32 %v1949, %v1955
  %v1957 = vsub.f32 %v1950, %v1955
  %v1958 = vmul.f32 %v1956, %v1956
  %v1959 = vmul.f32 %v1957, %v1957
  %v1960 = vadd.f32 %v1958, %v1959
  %1961 = vadd.xlane.f32.xlu0 %v1960
  %v1962 = vpop.xlane.xlu0 %1961
  %v1963 = vmul.f32 %v1962, %v1954
  %v1964 = vadd.f32 %v1963, 1e-05
  %v1965 = vrsqrt.pop %v1964
  %v1966 = vmul.f32 %v1956, %v1965
  %v1967 = vmul.f32 %v1957, %v1965
  %v1968 = vlaneseq
  %v1969 = vshrl.u32 %v1968, 7
  %v1970 = vsub.s32 4, %v1969
  %v1971 = vrot.slane %v54, %v1970
  %v1972 = vlaneseq
  %v1973 = vshrl.u32 %v1972, 7
  %v1974 = vsub.s32 4, %v1973
  %v1975 = vrot.slane %v55, %v1974
  %v1976 = vmul.f32 %v1966, %v1971
  %v1977 = vmul.f32 %v1967, %v1975
  %v1978 = vlaneseq
  %v1979 = vshrl.u32 %v1978, 7
  %v1980 = vsub.s32 5, %v1979
  %v1981 = vrot.slane %v54, %v1980
  %v1982 = vlaneseq
  %v1983 = vshrl.u32 %v1982, 7
  %v1984 = vsub.s32 5, %v1983
  %v1985 = vrot.slane %v55, %v1984
  %v1986 = vadd.f32 %v1976, %v1981
  %v1987 = vadd.f32 %v1977, %v1985
  %v1988 = vld [vmem:[%s10] sm:$0xff]
  %v1989 = vld [vmem:[%s10 + $0x8] sm:$0xff]
  %v1990 = vld [vmem:[%s10 + $0x10] sm:$0xff]
  %v1991 = vld [vmem:[%s10 + $0x18] sm:$0xff]
  %v1992 = vld [vmem:[%s10 + $0x20] sm:$0xff]
  %v1993 = vld [vmem:[%s10 + $0x28] sm:$0xff]
  %v1994 = vld [vmem:[%s10 + $0x30] sm:$0xff]
  %v1995 = vld [vmem:[%s10 + $0x38] sm:$0xff]
  %v1996 = vld [vmem:[%s10 + $0x40] sm:$0xff]
  %v1997 = vld [vmem:[%s10 + $0x48] sm:$0xff]
  %v1998 = vld [vmem:[%s10 + $0x50] sm:$0xff]
  %v1999 = vld [vmem:[%s10 + $0x58] sm:$0xff]
  %v2000 = vld [vmem:[%s10 + $0x60] sm:$0xff]
  %v2001 = vld [vmem:[%s10 + $0x68] sm:$0xff]
  %v2002 = vld [vmem:[%s10 + $0x70] sm:$0xff]
  %v2003 = vld [vmem:[%s10 + $0x78] sm:$0xff]
  %v2004 = vld [vmem:[%s10 + $0x80] sm:$0xff]
  %v2005 = vld [vmem:[%s10 + $0x88] sm:$0xff]
  %v2006 = vld [vmem:[%s10 + $0x90] sm:$0xff]
  %v2007 = vld [vmem:[%s10 + $0x98] sm:$0xff]
  %v2008 = vld [vmem:[%s10 + $0xa0] sm:$0xff]
  %v2009 = vld [vmem:[%s10 + $0xa8] sm:$0xff]
  %v2010 = vld [vmem:[%s10 + $0xb0] sm:$0xff]
  %v2011 = vld [vmem:[%s10 + $0xb8] sm:$0xff]
  %v2012 = vld [vmem:[%s10 + $0xc0] sm:$0xff]
  %v2013 = vld [vmem:[%s10 + $0xc8] sm:$0xff]
  %v2014 = vld [vmem:[%s10 + $0xd0] sm:$0xff]
  %v2015 = vld [vmem:[%s10 + $0xd8] sm:$0xff]
  %v2016 = vld [vmem:[%s10 + $0xe0] sm:$0xff]
  %v2017 = vld [vmem:[%s10 + $0xe8] sm:$0xff]
  %v2018 = vld [vmem:[%s10 + $0xf0] sm:$0xff]
  %v2019 = vld [vmem:[%s10 + $0xf8] sm:$0xff]
  %v2020 = vld [vmem:[%s11] sm:$0xff]
  %v2021 = vld [vmem:[%s11 + $0x8] sm:$0xff]
  %v2022 = vld [vmem:[%s11 + $0x10] sm:$0xff]
  %v2023 = vld [vmem:[%s11 + $0x18] sm:$0xff]
  %v2024 = vld [vmem:[%s11 + $0x20] sm:$0xff]
  %v2025 = vld [vmem:[%s11 + $0x28] sm:$0xff]
  %v2026 = vld [vmem:[%s11 + $0x30] sm:$0xff]
  %v2027 = vld [vmem:[%s11 + $0x38] sm:$0xff]
  %v2028 = vld [vmem:[%s11 + $0x40] sm:$0xff]
  %v2029 = vld [vmem:[%s11 + $0x48] sm:$0xff]
  %v2030 = vld [vmem:[%s11 + $0x50] sm:$0xff]
  %v2031 = vld [vmem:[%s11 + $0x58] sm:$0xff]
  %v2032 = vld [vmem:[%s11 + $0x60] sm:$0xff]
  %v2033 = vld [vmem:[%s11 + $0x68] sm:$0xff]
  %v2034 = vld [vmem:[%s11 + $0x70] sm:$0xff]
  %v2035 = vld [vmem:[%s11 + $0x78] sm:$0xff]
  %v2036 = vld [vmem:[%s11 + $0x80] sm:$0xff]
  %v2037 = vld [vmem:[%s11 + $0x88] sm:$0xff]
  %v2038 = vld [vmem:[%s11 + $0x90] sm:$0xff]
  %v2039 = vld [vmem:[%s11 + $0x98] sm:$0xff]
  %v2040 = vld [vmem:[%s11 + $0xa0] sm:$0xff]
  %v2041 = vld [vmem:[%s11 + $0xa8] sm:$0xff]
  %v2042 = vld [vmem:[%s11 + $0xb0] sm:$0xff]
  %v2043 = vld [vmem:[%s11 + $0xb8] sm:$0xff]
  %v2044 = vld [vmem:[%s11 + $0xc0] sm:$0xff]
  %v2045 = vld [vmem:[%s11 + $0xc8] sm:$0xff]
  %v2046 = vld [vmem:[%s11 + $0xd0] sm:$0xff]
  %v2047 = vld [vmem:[%s11 + $0xd8] sm:$0xff]
  %v2048 = vld [vmem:[%s11 + $0xe0] sm:$0xff]
  %v2049 = vld [vmem:[%s11 + $0xe8] sm:$0xff]
  %v2050 = vld [vmem:[%s11 + $0xf0] sm:$0xff]
  %v2051 = vld [vmem:[%s11 + $0xf8] sm:$0xff]
  %2052 = vmatprep.subr.mxu0 0.0
  %2053 = vmatpush1.msra.mxu0 %v1988
  %2054 = vmatprep.subr.mxu0 0.0
  %2055 = vmatpush1.msra.mxu0 %v1989
  %2056 = vmatprep.subr.mxu0 0.0
  %2057 = vmatpush1.msra.mxu0 %v1990
  %2058 = vmatprep.subr.mxu0 0.0
  %2059 = vmatpush1.msra.mxu0 %v1991
  %2060 = vmatprep.subr.mxu0 0.0
  %2061 = vmatpush1.msra.mxu0 %v1992
  %2062 = vmatprep.subr.mxu0 0.0
  %2063 = vmatpush1.msra.mxu0 %v1993
  %2064 = vmatprep.subr.mxu0 0.0
  %2065 = vmatpush1.msra.mxu0 %v1994
  %2066 = vmatprep.subr.mxu0 0.0
  %2067 = vmatpush1.msra.mxu0 %v1995
  %2068 = vmatprep.subr.mxu0 0.0
  %2069 = vmatpush1.msra.mxu0 %v1996
  %2070 = vmatprep.subr.mxu0 0.0
  %2071 = vmatpush1.msra.mxu0 %v1997
  %2072 = vmatprep.subr.mxu0 0.0
  %2073 = vmatpush1.msra.mxu0 %v1998
  %2074 = vmatprep.subr.mxu0 0.0
  %2075 = vmatpush1.msra.mxu0 %v1999
  %2076 = vmatprep.subr.mxu0 0.0
  %2077 = vmatpush1.msra.mxu0 %v2000
  %2078 = vmatprep.subr.mxu0 0.0
  %2079 = vmatpush1.msra.mxu0 %v2001
  %2080 = vmatprep.subr.mxu0 0.0
  %2081 = vmatpush1.msra.mxu0 %v2002
  %2082 = vmatprep.subr.mxu0 0.0
  %2083 = vmatpush1.msra.mxu0 %v2003
  %2084 = vmatprep.subr.mxu0 0.0
  %2085 = vmatpush1.msra.mxu0 %v2004
  %2086 = vmatprep.subr.mxu0 0.0
  %2087 = vmatpush1.msra.mxu0 %v2005
  %2088 = vmatprep.subr.mxu0 0.0
  %2089 = vmatpush1.msra.mxu0 %v2006
  %2090 = vmatprep.subr.mxu0 0.0
  %2091 = vmatpush1.msra.mxu0 %v2007
  %2092 = vmatprep.subr.mxu0 0.0
  %2093 = vmatpush1.msra.mxu0 %v2008
  %2094 = vmatprep.subr.mxu0 0.0
  %2095 = vmatpush1.msra.mxu0 %v2009
  %2096 = vmatprep.subr.mxu0 0.0
  %2097 = vmatpush1.msra.mxu0 %v2010
  %2098 = vmatprep.subr.mxu0 0.0
  %2099 = vmatpush1.msra.mxu0 %v2011
  %2100 = vmatprep.subr.mxu0 0.0
  %2101 = vmatpush1.msra.mxu0 %v2012
  %2102 = vmatprep.subr.mxu0 0.0
  %2103 = vmatpush1.msra.mxu0 %v2013
  %2104 = vmatprep.subr.mxu0 0.0
  %2105 = vmatpush1.msra.mxu0 %v2014
  %2106 = vmatprep.subr.mxu0 0.0
  %2107 = vmatpush1.msra.mxu0 %v2015
  %2108 = vmatprep.subr.mxu0 0.0
  %2109 = vmatpush1.msra.mxu0 %v2016
  %2110 = vmatprep.subr.mxu0 0.0
  %2111 = vmatpush1.msra.mxu0 %v2017
  %2112 = vmatprep.subr.mxu0 0.0
  %2113 = vmatpush1.msra.mxu0 %v2018
  %2114 = vmatprep.subr.mxu0 0.0
  %2115 = vmatpush1.msra.mxu0 %v2019
  %2116 = vmatprep.mubr.f32.mxu0 %v1987
  %2117 = vmatmul.mubr.f32.gmra.mrb[0].mxu0 %v1986
  %v2118 = vpop.f32.mrb[0].mxu0
  %v2119 = vadd.f32 0.0, %v2118
  %v2120 = vpop.f32.mrb[0].mxu0
  %2121 = vdwg.mxu0
  %2122 = vmatprep.subr.mxu0 0.0
  %2123 = vmatpush1.msra.mxu0 %v2020
  %2124 = vmatprep.subr.mxu0 0.0
  %2125 = vmatpush1.msra.mxu0 %v2021
  %2126 = vmatprep.subr.mxu0 0.0
  %2127 = vmatpush1.msra.mxu0 %v2022
  %2128 = vmatprep.subr.mxu0 0.0
  %2129 = vmatpush1.msra.mxu0 %v2023
  %2130 = vmatprep.subr.mxu0 0.0
  %2131 = vmatpush1.msra.mxu0 %v2024
  %2132 = vmatprep.subr.mxu0 0.0
  %2133 = vmatpush1.msra.mxu0 %v2025
  %2134 = vmatprep.subr.mxu0 0.0
  %2135 = vmatpush1.msra.mxu0 %v2026
  %2136 = vmatprep.subr.mxu0 0.0
  %2137 = vmatpush1.msra.mxu0 %v2027
  %2138 = vmatprep.subr.mxu0 0.0
  %2139 = vmatpush1.msra.mxu0 %v2028
  %2140 = vmatprep.subr.mxu0 0.0
  %2141 = vmatpush1.msra.mxu0 %v2029
  %2142 = vmatprep.subr.mxu0 0.0
  %2143 = vmatpush1.msra.mxu0 %v2030
  %2144 = vmatprep.subr.mxu0 0.0
  %2145 = vmatpush1.msra.mxu0 %v2031
  %2146 = vmatprep.subr.mxu0 0.0
  %2147 = vmatpush1.msra.mxu0 %v2032
  %2148 = vmatprep.subr.mxu0 0.0
  %2149 = vmatpush1.msra.mxu0 %v2033
  %2150 = vmatprep.subr.mxu0 0.0
  %2151 = vmatpush1.msra.mxu0 %v2034
  %2152 = vmatprep.subr.mxu0 0.0
  %2153 = vmatpush1.msra.mxu0 %v2035
  %2154 = vmatprep.subr.mxu0 0.0
  %2155 = vmatpush1.msra.mxu0 %v2036
  %2156 = vmatprep.subr.mxu0 0.0
  %2157 = vmatpush1.msra.mxu0 %v2037
  %2158 = vmatprep.subr.mxu0 0.0
  %2159 = vmatpush1.msra.mxu0 %v2038
  %2160 = vmatprep.subr.mxu0 0.0
  %2161 = vmatpush1.msra.mxu0 %v2039
  %2162 = vmatprep.subr.mxu0 0.0
  %2163 = vmatpush1.msra.mxu0 %v2040
  %2164 = vmatprep.subr.mxu0 0.0
  %2165 = vmatpush1.msra.mxu0 %v2041
  %2166 = vmatprep.subr.mxu0 0.0
  %2167 = vmatpush1.msra.mxu0 %v2042
  %2168 = vmatprep.subr.mxu0 0.0
  %2169 = vmatpush1.msra.mxu0 %v2043
  %2170 = vmatprep.subr.mxu0 0.0
  %2171 = vmatpush1.msra.mxu0 %v2044
  %2172 = vmatprep.subr.mxu0 0.0
  %2173 = vmatpush1.msra.mxu0 %v2045
  %2174 = vmatprep.subr.mxu0 0.0
  %2175 = vmatpush1.msra.mxu0 %v2046
  %2176 = vmatprep.subr.mxu0 0.0
  %2177 = vmatpush1.msra.mxu0 %v2047
  %2178 = vmatprep.subr.mxu0 0.0
  %2179 = vmatpush1.msra.mxu0 %v2048
  %2180 = vmatprep.subr.mxu0 0.0
  %2181 = vmatpush1.msra.mxu0 %v2049
  %2182 = vmatprep.subr.mxu0 0.0
  %2183 = vmatpush1.msra.mxu0 %v2050
  %2184 = vmatprep.subr.mxu0 0.0
  %2185 = vmatpush1.msra.mxu0 %v2051
  %2186 = vmatprep.mubr.f32.mxu0 %v1987
  %2187 = vmatmul.mubr.f32.gmra.mrb[0].mxu0 %v1986
  %v2188 = vpop.f32.mrb[0].mxu0
  %v2189 = vadd.f32 0.0, %v2188
  %v2190 = vpop.f32.mrb[0].mxu0
  %2191 = vdwg.mxu0
  %v2192 = vpack.c.bf16 %v2119, %v2119
  %v2194 = vsel %vm700, %v2192, 0
  %2196 = vmatprep.subr.bf16.mxu0 0
  %2197 = vmatpush1.bf16.msra.mxu0 %v2194
  %2198 = vmatprep.subr.bf16.mxu0 0
  %2199 = vmatpush1.bf16.msra.mxu0 0
  %2200 = vmatprep.subr.bf16.mxu0 0
  %2201 = vmatpush1.bf16.msra.mxu0 0
  %2202 = vmatprep.subr.bf16.mxu0 0
  %2203 = vmatpush1.bf16.msra.mxu0 0
  %2204 = vmatprep.subr.bf16.mxu0 0
  %2205 = vmatpush1.bf16.msra.mxu0 0
  %2206 = vmatprep.subr.bf16.mxu0 0
  %2207 = vmatpush1.bf16.msra.mxu0 0
  %2208 = vmatprep.subr.bf16.mxu0 0
  %2209 = vmatpush1.bf16.msra.mxu0 0
  %2210 = vmatprep.subr.bf16.mxu0 0
  %2211 = vmatpush1.bf16.msra.mxu0 0
  %2212 = vmatprep.subr.bf16.mxu0 0
  %2213 = vmatpush1.bf16.msra.mxu0 0
  %2214 = vmatprep.subr.bf16.mxu0 0
  %2215 = vmatpush1.bf16.msra.mxu0 0
  %2216 = vmatprep.subr.bf16.mxu0 0
  %2217 = vmatpush1.bf16.msra.mxu0 0
  %2218 = vmatprep.subr.bf16.mxu0 0
  %2219 = vmatpush1.bf16.msra.mxu0 0
  %2220 = vmatprep.subr.bf16.mxu0 0
  %2221 = vmatpush1.bf16.msra.mxu0 0
  %2222 = vmatprep.subr.bf16.mxu0 0
  %2223 = vmatpush1.bf16.msra.mxu0 0
  %2224 = vmatprep.subr.bf16.mxu0 0
  %2225 = vmatpush1.bf16.msra.mxu0 0
  %2226 = vmatprep.subr.bf16.mxu0 0
  %2227 = vmatpush1.bf16.msra.mxu0 0
  %2228 = vmatprep.mubr.bf16.mxu0 0
  %2229 = vmatmul.mubr.bf16.gmra.mrb[0].mxu0 %v917
  %v2230 = vpop.f32.mrb[0].mxu0
  %v2231 = vadd.f32 0.0, %v2230
  %v2232 = vpop.f32.mrb[0].mxu0
  %v2233 = vpop.f32.mrb[0].mxu0
  %v2234 = vadd.f32 0.0, %v2233
  %v2235 = vpop.f32.mrb[0].mxu0
  %2236 = vmatprep.mubr.bf16.mxu0 0
  %2237 = vmatmul.mubr.bf16.gmra.mrb[0].mxu0 %v920
  %v2238 = vpop.f32.mrb[0].mxu0
  %v2239 = vadd.f32 0.0, %v2238
  %v2240 = vpop.f32.mrb[0].mxu0
  %v2241 = vpop.f32.mrb[0].mxu0
  %v2242 = vadd.f32 0.0, %v2241
  %v2243 = vpop.f32.mrb[0].mxu0
  %2244 = vmatprep.mubr.bf16.mxu0 0
  %2245 = vmatmul.mubr.bf16.gmra.mrb[0].mxu0 %v923
  %v2246 = vpop.f32.mrb[0].mxu0
  %v2247 = vadd.f32 0.0, %v2246
  %v2248 = vpop.f32.mrb[0].mxu0
  %v2249 = vpop.f32.mrb[0].mxu0
  %v2250 = vadd.f32 0.0, %v2249
  %v2251 = vpop.f32.mrb[0].mxu0
  %2252 = vmatprep.mubr.bf16.mxu0 0
  %2253 = vmatmul.mubr.bf16.gmra.mrb[0].mxu0 %v926
  %v2254 = vpop.f32.mrb[0].mxu0
  %v2255 = vadd.f32 0.0, %v2254
  %v2256 = vpop.f32.mrb[0].mxu0
  %v2257 = vpop.f32.mrb[0].mxu0
  %v2258 = vpop.f32.mrb[0].mxu0
  %2259 = vdwg.mxu0
  %v2260 = vpack.c.bf16 %v2189, %v2189
  %2262 = vrot.lane.b32.xlu0 %v2260, 127
  %v2263 = vpop.permute.xlu0 %2262
  %v2265 = vsel %vm700, %v2263, 0
  %2267 = vmatprep.subr.bf16.mxu0 0
  %2268 = vmatpush1.bf16.msra.mxu0 %v2265
  %2269 = vmatprep.subr.bf16.mxu0 0
  %2270 = vmatpush1.bf16.msra.mxu0 0
  %2271 = vmatprep.subr.bf16.mxu0 0
  %2272 = vmatpush1.bf16.msra.mxu0 0
  %2273 = vmatprep.subr.bf16.mxu0 0
  %2274 = vmatpush1.bf16.msra.mxu0 0
  %2275 = vmatprep.subr.bf16.mxu0 0
  %2276 = vmatpush1.bf16.msra.mxu0 0
  %2277 = vmatprep.subr.bf16.mxu0 0
  %2278 = vmatpush1.bf16.msra.mxu0 0
  %2279 = vmatprep.subr.bf16.mxu0 0
  %2280 = vmatpush1.bf16.msra.mxu0 0
  %2281 = vmatprep.subr.bf16.mxu0 0
  %2282 = vmatpush1.bf16.msra.mxu0 0
  %2283 = vmatprep.subr.bf16.mxu0 0
  %2284 = vmatpush1.bf16.msra.mxu0 0
  %2285 = vmatprep.subr.bf16.mxu0 0
  %2286 = vmatpush1.bf16.msra.mxu0 0
  %2287 = vmatprep.subr.bf16.mxu0 0
  %2288 = vmatpush1.bf16.msra.mxu0 0
  %2289 = vmatprep.subr.bf16.mxu0 0
  %2290 = vmatpush1.bf16.msra.mxu0 0
  %2291 = vmatprep.subr.bf16.mxu0 0
  %2292 = vmatpush1.bf16.msra.mxu0 0
  %2293 = vmatprep.subr.bf16.mxu0 0
  %2294 = vmatpush1.bf16.msra.mxu0 0
  %2295 = vmatprep.subr.bf16.mxu0 0
  %2296 = vmatpush1.bf16.msra.mxu0 0
  %2297 = vmatprep.subr.bf16.mxu0 0
  %2298 = vmatpush1.bf16.msra.mxu0 0
  %2299 = vmatprep.mubr.bf16.mxu0 0
  %2300 = vmatmul.mubr.bf16.gmra.mrb[0].mxu0 %v1010
  %v2301 = vpop.f32.mrb[0].mxu0
  %v2302 = vadd.f32 0.0, %v2301
  %v2303 = vpop.f32.mrb[0].mxu0
  %v2304 = vpop.f32.mrb[0].mxu0
  %v2305 = vadd.f32 0.0, %v2304
  %v2306 = vpop.f32.mrb[0].mxu0
  %2307 = vmatprep.mubr.bf16.mxu0 0
  %2308 = vmatmul.mubr.bf16.gmra.mrb[0].mxu0 %v1013
  %v2309 = vpop.f32.mrb[0].mxu0
  %v2310 = vadd.f32 0.0, %v2309
  %v2311 = vpop.f32.mrb[0].mxu0
  %v2312 = vpop.f32.mrb[0].mxu0
  %v2313 = vadd.f32 0.0, %v2312
  %v2314 = vpop.f32.mrb[0].mxu0
  %2315 = vmatprep.mubr.bf16.mxu0 0
  %2316 = vmatmul.mubr.bf16.gmra.mrb[0].mxu0 %v1016
  %v2317 = vpop.f32.mrb[0].mxu0
  %v2318 = vadd.f32 0.0, %v2317
  %v2319 = vpop.f32.mrb[0].mxu0
  %v2320 = vpop.f32.mrb[0].mxu0
  %v2321 = vadd.f32 0.0, %v2320
  %v2322 = vpop.f32.mrb[0].mxu0
  %2323 = vmatprep.mubr.bf16.mxu0 0
  %2324 = vmatmul.mubr.bf16.gmra.mrb[0].mxu0 %v1019
  %v2325 = vpop.f32.mrb[0].mxu0
  %v2326 = vadd.f32 0.0, %v2325
  %v2327 = vpop.f32.mrb[0].mxu0
  %v2328 = vpop.f32.mrb[0].mxu0
  %v2329 = vpop.f32.mrb[0].mxu0
  %2330 = vdwg.mxu0
  %v2332 = vsel %vm700, %v2260, 0
  %2334 = vmatprep.subr.bf16.mxu0 0
  %2335 = vmatpush1.bf16.msra.mxu0 %v2332
  %2336 = vmatprep.subr.bf16.mxu0 0
  %2337 = vmatpush1.bf16.msra.mxu0 0
  %2338 = vmatprep.subr.bf16.mxu0 0
  %2339 = vmatpush1.bf16.msra.mxu0 0
  %2340 = vmatprep.subr.bf16.mxu0 0
  %2341 = vmatpush1.bf16.msra.mxu0 0
  %2342 = vmatprep.subr.bf16.mxu0 0
  %2343 = vmatpush1.bf16.msra.mxu0 0
  %2344 = vmatprep.subr.bf16.mxu0 0
  %2345 = vmatpush1.bf16.msra.mxu0 0
  %2346 = vmatprep.subr.bf16.mxu0 0
  %2347 = vmatpush1.bf16.msra.mxu0 0
  %2348 = vmatprep.subr.bf16.mxu0 0
  %2349 = vmatpush1.bf16.msra.mxu0 0
  %2350 = vmatprep.subr.bf16.mxu0 0
  %2351 = vmatpush1.bf16.msra.mxu0 0
  %2352 = vmatprep.subr.bf16.mxu0 0
  %2353 = vmatpush1.bf16.msra.mxu0 0
  %2354 = vmatprep.subr.bf16.mxu0 0
  %2355 = vmatpush1.bf16.msra.mxu0 0
  %2356 = vmatprep.subr.bf16.mxu0 0
  %2357 = vmatpush1.bf16.msra.mxu0 0
  %2358 = vmatprep.subr.bf16.mxu0 0
  %2359 = vmatpush1.bf16.msra.mxu0 0
  %2360 = vmatprep.subr.bf16.mxu0 0
  %2361 = vmatpush1.bf16.msra.mxu0 0
  %2362 = vmatprep.subr.bf16.mxu0 0
  %2363 = vmatpush1.bf16.msra.mxu0 0
  %2364 = vmatprep.subr.bf16.mxu0 0
  %2365 = vmatpush1.bf16.msra.mxu0 0
  %2366 = vmatprep.mubr.bf16.mxu0 0
  %2367 = vmatmul.mubr.bf16.gmra.mrb[0].mxu0 %v917
  %v2368 = vpop.f32.mrb[0].mxu0
  %v2369 = vadd.f32 %v2302, %v2368
  %v2370 = vpop.f32.mrb[0].mxu0
  %v2371 = vpop.f32.mrb[0].mxu0
  %v2372 = vadd.f32 %v2305, %v2371
  %v2373 = vpop.f32.mrb[0].mxu0
  %2374 = vmatprep.mubr.bf16.mxu0 0
  %2375 = vmatmul.mubr.bf16.gmra.mrb[0].mxu0 %v920
  %v2376 = vpop.f32.mrb[0].mxu0
  %v2377 = vadd.f32 %v2310, %v2376
  %v2378 = vpop.f32.mrb[0].mxu0
  %v2379 = vpop.f32.mrb[0].mxu0
  %v2380 = vadd.f32 %v2313, %v2379
  %v2381 = vpop.f32.mrb[0].mxu0
  %2382 = vmatprep.mubr.bf16.mxu0 0
  %2383 = vmatmul.mubr.bf16.gmra.mrb[0].mxu0 %v923
  %v2384 = vpop.f32.mrb[0].mxu0
  %v2385 = vadd.f32 %v2318, %v2384
  %v2386 = vpop.f32.mrb[0].mxu0
  %v2387 = vpop.f32.mrb[0].mxu0
  %v2388 = vadd.f32 %v2321, %v2387
  %v2389 = vpop.f32.mrb[0].mxu0
  %2390 = vmatprep.mubr.bf16.mxu0 0
  %2391 = vmatmul.mubr.bf16.gmra.mrb[0].mxu0 %v926
  %v2392 = vpop.f32.mrb[0].mxu0
  %v2393 = vadd.f32 %v2326, %v2392
  %v2394 = vpop.f32.mrb[0].mxu0
  %v2395 = vpop.f32.mrb[0].mxu0
  %v2396 = vpop.f32.mrb[0].mxu0
  %2397 = vdwg.mxu0
  %2405 = vrot.lane.b32.xlu0 %v660, 124
  %v2406 = vpop.permute.xlu0 %2405
  %2407 = vrot.lane.b32.xlu0 %v665, 124
  %v2408 = vpop.permute.xlu0 %2407
  %2409 = vrot.lane.b32.xlu0 %v670, 124
  %v2410 = vpop.permute.xlu0 %2409
  %2411 = vrot.lane.b32.xlu0 %v675, 124
  %v2412 = vpop.permute.xlu0 %2411
  %2413 = vrot.lane.b32.xlu0 %v680, 124
  %v2414 = vpop.permute.xlu0 %2413
  %2415 = vrot.lane.b32.xlu0 %v685, 124
  %v2416 = vpop.permute.xlu0 %2415
  %2417 = vrot.lane.b32.xlu0 %v690, 124
  %v2418 = vpop.permute.xlu0 %2417
  %v2426 = vadd.f32 %v2369, %v2406
  %v2427 = vadd.f32 %v2372, %v2408
  %v2428 = vadd.f32 %v2377, %v2410
  %v2429 = vadd.f32 %v2380, %v2412
  %v2430 = vadd.f32 %v2385, %v2414
  %v2431 = vadd.f32 %v2388, %v2416
  %v2432 = vadd.f32 %v2393, %v2418
  %vm2433 = vcmp.ge.f32.partialorder %v2426, 0.0
  %vm2434 = vcmp.ge.f32.partialorder %v2427, 0.0
  %vm2435 = vcmp.ge.f32.partialorder %v2428, 0.0
  %vm2436 = vcmp.ge.f32.partialorder %v2429, 0.0
  %vm2437 = vcmp.ge.f32.partialorder %v2430, 0.0
  %vm2438 = vcmp.ge.f32.partialorder %v2431, 0.0
  %vm2439 = vcmp.ge.f32.partialorder %v2432, 0.0
  %v2440 = vmul.f32 %v2426, 0.2
  %v2441 = vmul.f32 %v2427, 0.2
  %v2442 = vmul.f32 %v2428, 0.2
  %v2443 = vmul.f32 %v2429, 0.2
  %v2444 = vmul.f32 %v2430, 0.2
  %v2445 = vmul.f32 %v2431, 0.2
  %v2446 = vmul.f32 %v2432, 0.2
  %v2447 = vsel %vm2433, %v2426, %v2440
  %v2448 = vsel %vm2434, %v2427, %v2441
  %v2449 = vsel %vm2435, %v2428, %v2442
  %v2450 = vsel %vm2436, %v2429, %v2443
  %v2451 = vsel %vm2437, %v2430, %v2444
  %v2452 = vsel %vm2438, %v2431, %v2445
  %v2453 = vsel %vm2439, %v2432, %v2446
  %2455 = vrot.lane.b32.xlu0 %v2189, 127
  %v2456 = vpop.permute.xlu0 %2455
  %v2458 = vadd.f32 %v2189, %v2456
  %2460 = vrot.lane.b32.xlu0 %v744, 124
  %v2461 = vpop.permute.xlu0 %2460
  %v2463 = vadd.f32 %v2458, %v2461
  %vm2464 = vcmp.ge.f32.partialorder %v2463, 0.0
  %v2465 = vmul.f32 %v2463, 0.2
  %v2466 = vsel %vm2464, %v2463, %v2465
  %2468 = vset.pattern.permute.xlu0 0
  %2469 = vperm.xlu0 %2468, %v2447
  %v2470 = vpop.permute.xlu0 %2469
  %2473 = vset.pattern.permute.xlu0 0
  %2474 = vperm.xlu0 %2473, %v2448
  %v2475 = vpop.permute.xlu0 %2474
  %2478 = vset.pattern.permute.xlu0 0
  %2479 = vperm.xlu0 %2478, %v2449
  %v2480 = vpop.permute.xlu0 %2479
  %2483 = vset.pattern.permute.xlu0 0
  %2484 = vperm.xlu0 %2483, %v2450
  %v2485 = vpop.permute.xlu0 %2484
  %2488 = vset.pattern.permute.xlu0 0
  %2489 = vperm.xlu0 %2488, %v2451
  %v2490 = vpop.permute.xlu0 %2489
  %2493 = vset.pattern.permute.xlu0 0
  %2494 = vperm.xlu0 %2493, %v2452
  %v2495 = vpop.permute.xlu0 %2494
  %2498 = vset.pattern.permute.xlu0 0
  %2499 = vperm.xlu0 %2498, %v2453
  %v2500 = vpop.permute.xlu0 %2499
  %v2502 = vsel %vm122, %v2470, -1e+30
  %v2503 = vsel %vm123, %v2475, -1e+30
  %v2504 = vsel %vm124, %v2480, -1e+30
  %v2505 = vsel %vm125, %v2485, -1e+30
  %v2506 = vsel %vm126, %v2490, -1e+30
  %v2507 = vsel %vm127, %v2495, -1e+30
  %v2508 = vsel %vm128, %v2500, -1e+30
  %v2509 = vsel %vm915, %v2502, -inf
  %v2510 = vsel %vm915, %v2503, -inf
  %v2511 = vsel %vm915, %v2504, -inf
  %v2512 = vsel %vm915, %v2505, -inf
  %v2513 = vsel %vm915, %v2506, -inf
  %v2514 = vmax.f32 %v2509, %v2513
  %v2515 = vsel %vm915, %v2507, -inf
  %v2516 = vmax.f32 %v2510, %v2515
  %v2517 = vsel %vm915, %v2508, -inf
  %v2518 = vmax.f32 %v2511, %v2517
  %v2519 = vmax.f32 %v2514, %v2516
  %v2520 = vmax.f32 %v2518, %v2512
  %v2521 = vmax.f32 %v2519, %v2520
  %v2522 = vrot.slane %v2521, 4
  %v2523 = vmax.f32 %v2521, %v2522
  %v2524 = vrot.slane %v2523, 2
  %v2525 = vmax.f32 %v2523, %v2524
  %v2526 = vrot.slane %v2525, 1
  %v2527 = vmax.f32 %v2525, %v2526
  %v2528 = vsel %vm176, %v2527, 0.0
  %v2529 = vsel %vm915, %v2528, 0.0
  %2530 = vadd.xlane.f32.xlu0 %v2529
  %v2531 = vpop.xlane.xlu0 %2530
  %v2532 = vmax.f32 %v2531, %v2466
  %v2533 = vpack.c.bf16 %v2532, %v2532
  %v2534 = vunpack.c.l.bf16 %v2533
  %v2535 = vsub.f32 %v2466, %v2534
  %v2536 = vmul.f32 %v2535, 1.442695
  %v2537 = vpow.pop %v2536
  %v2539 = vsel %vm700, %v2533, 0
  %2541 = vmatprep.subr.bf16.mxu0 0
  %2542 = vmatpush1.bf16.msra.mxu0 %v2539
  %2543 = vmatprep.subr.bf16.mxu0 0
  %2544 = vmatpush1.bf16.msra.mxu0 0
  %2545 = vmatprep.subr.bf16.mxu0 0
  %2546 = vmatpush1.bf16.msra.mxu0 0
  %2547 = vmatprep.subr.bf16.mxu0 0
  %2548 = vmatpush1.bf16.msra.mxu0 0
  %2549 = vmatprep.subr.bf16.mxu0 0
  %2550 = vmatpush1.bf16.msra.mxu0 0
  %2551 = vmatprep.subr.bf16.mxu0 0
  %2552 = vmatpush1.bf16.msra.mxu0 0
  %2553 = vmatprep.subr.bf16.mxu0 0
  %2554 = vmatpush1.bf16.msra.mxu0 0
  %2555 = vmatprep.subr.bf16.mxu0 0
  %2556 = vmatpush1.bf16.msra.mxu0 0
  %2557 = vmatprep.subr.bf16.mxu0 0
  %2558 = vmatpush1.bf16.msra.mxu0 0
  %2559 = vmatprep.subr.bf16.mxu0 0
  %2560 = vmatpush1.bf16.msra.mxu0 0
  %2561 = vmatprep.subr.bf16.mxu0 0
  %2562 = vmatpush1.bf16.msra.mxu0 0
  %2563 = vmatprep.subr.bf16.mxu0 0
  %2564 = vmatpush1.bf16.msra.mxu0 0
  %2565 = vmatprep.subr.bf16.mxu0 0
  %2566 = vmatpush1.bf16.msra.mxu0 0
  %2567 = vmatprep.subr.bf16.mxu0 0
  %2568 = vmatpush1.bf16.msra.mxu0 0
  %2569 = vmatprep.subr.bf16.mxu0 0
  %2570 = vmatpush1.bf16.msra.mxu0 0
  %2571 = vmatprep.subr.bf16.mxu0 0
  %2572 = vmatpush1.bf16.msra.mxu0 0
  %2573 = vmatprep.mubr.bf16.mxu0 0
  %2574 = vmatmul.mubr.bf16.gmra.mrb[0].mxu0 %v1010
  %v2575 = vpop.f32.mrb[0].mxu0
  %v2576 = vadd.f32 0.0, %v2575
  %v2577 = vpop.f32.mrb[0].mxu0
  %v2578 = vpop.f32.mrb[0].mxu0
  %v2579 = vadd.f32 0.0, %v2578
  %v2580 = vpop.f32.mrb[0].mxu0
  %2581 = vmatprep.mubr.bf16.mxu0 0
  %2582 = vmatmul.mubr.bf16.gmra.mrb[0].mxu0 %v1013
  %v2583 = vpop.f32.mrb[0].mxu0
  %v2584 = vadd.f32 0.0, %v2583
  %v2585 = vpop.f32.mrb[0].mxu0
  %v2586 = vpop.f32.mrb[0].mxu0
  %v2587 = vadd.f32 0.0, %v2586
  %v2588 = vpop.f32.mrb[0].mxu0
  %2589 = vmatprep.mubr.bf16.mxu0 0
  %2590 = vmatmul.mubr.bf16.gmra.mrb[0].mxu0 %v1016
  %v2591 = vpop.f32.mrb[0].mxu0
  %v2592 = vadd.f32 0.0, %v2591
  %v2593 = vpop.f32.mrb[0].mxu0
  %v2594 = vpop.f32.mrb[0].mxu0
  %v2595 = vadd.f32 0.0, %v2594
  %v2596 = vpop.f32.mrb[0].mxu0
  %2597 = vmatprep.mubr.bf16.mxu0 0
  %2598 = vmatmul.mubr.bf16.gmra.mrb[0].mxu0 %v1019
  %v2599 = vpop.f32.mrb[0].mxu0
  %v2600 = vadd.f32 0.0, %v2599
  %v2601 = vpop.f32.mrb[0].mxu0
  %v2602 = vpop.f32.mrb[0].mxu0
  %v2603 = vpop.f32.mrb[0].mxu0
  %2604 = vdwg.mxu0
  %v2605 = vsub.f32 %v2447, %v2576
  %v2606 = vsub.f32 %v2448, %v2579
  %v2607 = vsub.f32 %v2449, %v2584
  %v2608 = vsub.f32 %v2450, %v2587
  %v2609 = vsub.f32 %v2451, %v2592
  %v2610 = vsub.f32 %v2452, %v2595
  %v2611 = vsub.f32 %v2453, %v2600
  %v2612 = vmul.f32 %v2605, 1.442695
  %v2613 = vpow.pop %v2612
  %v2614 = vmul.f32 %v2606, 1.442695
  %v2615 = vpow.pop %v2614
  %v2616 = vmul.f32 %v2607, 1.442695
  %v2617 = vpow.pop %v2616
  %v2618 = vmul.f32 %v2608, 1.442695
  %v2619 = vpow.pop %v2618
  %v2620 = vmul.f32 %v2609, 1.442695
  %v2621 = vpow.pop %v2620
  %v2622 = vmul.f32 %v2610, 1.442695
  %v2623 = vpow.pop %v2622
  %v2624 = vmul.f32 %v2611, 1.442695
  %v2625 = vpow.pop %v2624
  %2627 = vset.pattern.permute.xlu0 0
  %2628 = vperm.xlu0 %2627, %v2613
  %v2629 = vpop.permute.xlu0 %2628
  %2632 = vset.pattern.permute.xlu0 0
  %2633 = vperm.xlu0 %2632, %v2615
  %v2634 = vpop.permute.xlu0 %2633
  %2637 = vset.pattern.permute.xlu0 0
  %2638 = vperm.xlu0 %2637, %v2617
  %v2639 = vpop.permute.xlu0 %2638
  %2642 = vset.pattern.permute.xlu0 0
  %2643 = vperm.xlu0 %2642, %v2619
  %v2644 = vpop.permute.xlu0 %2643
  %2647 = vset.pattern.permute.xlu0 0
  %2648 = vperm.xlu0 %2647, %v2621
  %v2649 = vpop.permute.xlu0 %2648
  %2652 = vset.pattern.permute.xlu0 0
  %2653 = vperm.xlu0 %2652, %v2623
  %v2654 = vpop.permute.xlu0 %2653
  %2657 = vset.pattern.permute.xlu0 0
  %2658 = vperm.xlu0 %2657, %v2625
  %v2659 = vpop.permute.xlu0 %2658
  %v2661 = vmul.f32 %v2629, %v2231
  %v2662 = vmul.f32 %v2634, %v2234
  %v2663 = vmul.f32 %v2639, %v2239
  %v2664 = vmul.f32 %v2644, %v2242
  %v2665 = vmul.f32 %v2649, %v2247
  %v2666 = vmul.f32 %v2654, %v2250
  %v2667 = vmul.f32 %v2659, %v2255
  %v2668 = vpack.c.bf16 %v2662, %v2661
  %v2669 = vpack.c.bf16 %v2664, %v2663
  %v2670 = vpack.c.bf16 %v2666, %v2665
  %v2671 = vpack.c.bf16 %v2667, %v2667
  %v2672 = vpack.c.bf16 %v2615, %v2613
  %v2673 = vpack.c.bf16 %v2619, %v2617
  %v2674 = vpack.c.bf16 %v2623, %v2621
  %v2675 = vpack.c.bf16 %v2625, %v2625
  %2677 = vset.pattern.permute.xlu0 0
  %2678 = vperm.xlu0 %2677, %v2537
  %v2679 = vpop.permute.xlu0 %2678
  %v2681 = vmul.f32 %v2679, %v2119
  %v2683 = vsel %vm700, %v2671, 0
  %2685 = vmatprep.subr.bf16.mxu0 0
  %2686 = vmatpush1.bf16.msra.mxu0 %v2668
  %2687 = vmatprep.subr.bf16.mxu0 0
  %2688 = vmatpush1.bf16.msra.mxu0 %v2669
  %2689 = vmatprep.subr.bf16.mxu0 0
  %2690 = vmatpush1.bf16.msra.mxu0 %v2670
  %2691 = vmatprep.subr.bf16.mxu0 0
  %2692 = vmatpush1.bf16.msra.mxu0 %v2683
  %2693 = vmatprep.subr.bf16.mxu0 0
  %2694 = vmatpush1.bf16.msra.mxu0 0
  %2695 = vmatprep.subr.bf16.mxu0 0
  %2696 = vmatpush1.bf16.msra.mxu0 0
  %2697 = vmatprep.subr.bf16.mxu0 0
  %2698 = vmatpush1.bf16.msra.mxu0 0
  %2699 = vmatprep.subr.bf16.mxu0 0
  %2700 = vmatpush1.bf16.msra.mxu0 0
  %2701 = vmatprep.subr.bf16.mxu0 0
  %2702 = vmatpush1.bf16.msra.mxu0 0
  %2703 = vmatprep.subr.bf16.mxu0 0
  %2704 = vmatpush1.bf16.msra.mxu0 0
  %2705 = vmatprep.subr.bf16.mxu0 0
  %2706 = vmatpush1.bf16.msra.mxu0 0
  %2707 = vmatprep.subr.bf16.mxu0 0
  %2708 = vmatpush1.bf16.msra.mxu0 0
  %2709 = vmatprep.subr.bf16.mxu0 0
  %2710 = vmatpush1.bf16.msra.mxu0 0
  %2711 = vmatprep.subr.bf16.mxu0 0
  %2712 = vmatpush1.bf16.msra.mxu0 0
  %2713 = vmatprep.subr.bf16.mxu0 0
  %2714 = vmatpush1.bf16.msra.mxu0 0
  %2715 = vmatprep.subr.bf16.mxu0 0
  %2716 = vmatpush1.bf16.msra.mxu0 0
  %2717 = vmatprep.mubr.bf16.mxu0 0
  %2718 = vmatmul.mubr.bf16.gmra.mrb[0].mxu0 %v698
  %v2719 = vpop.f32.mrb[0].mxu0
  %v2720 = vadd.f32 %v2681, %v2719
  %v2721 = vpop.f32.mrb[0].mxu0
  %v2722 = vpop.f32.mrb[0].mxu0
  %v2723 = vpop.f32.mrb[0].mxu0
  %2724 = vdwg.mxu0
  %v2726 = vsel %vm700, %v2675, 0
  %2728 = vmatprep.subr.bf16.mxu0 0
  %2729 = vmatpush1.bf16.msra.mxu0 %v2672
  %2730 = vmatprep.subr.bf16.mxu0 0
  %2731 = vmatpush1.bf16.msra.mxu0 %v2673
  %2732 = vmatprep.subr.bf16.mxu0 0
  %2733 = vmatpush1.bf16.msra.mxu0 %v2674
  %2734 = vmatprep.subr.bf16.mxu0 0
  %2735 = vmatpush1.bf16.msra.mxu0 %v2726
  %2736 = vmatprep.subr.bf16.mxu0 0
  %2737 = vmatpush1.bf16.msra.mxu0 0
  %2738 = vmatprep.subr.bf16.mxu0 0
  %2739 = vmatpush1.bf16.msra.mxu0 0
  %2740 = vmatprep.subr.bf16.mxu0 0
  %2741 = vmatpush1.bf16.msra.mxu0 0
  %2742 = vmatprep.subr.bf16.mxu0 0
  %2743 = vmatpush1.bf16.msra.mxu0 0
  %2744 = vmatprep.subr.bf16.mxu0 0
  %2745 = vmatpush1.bf16.msra.mxu0 0
  %2746 = vmatprep.subr.bf16.mxu0 0
  %2747 = vmatpush1.bf16.msra.mxu0 0
  %2748 = vmatprep.subr.bf16.mxu0 0
  %2749 = vmatpush1.bf16.msra.mxu0 0
  %2750 = vmatprep.subr.bf16.mxu0 0
  %2751 = vmatpush1.bf16.msra.mxu0 0
  %2752 = vmatprep.subr.bf16.mxu0 0
  %2753 = vmatpush1.bf16.msra.mxu0 0
  %2754 = vmatprep.subr.bf16.mxu0 0
  %2755 = vmatpush1.bf16.msra.mxu0 0
  %2756 = vmatprep.subr.bf16.mxu0 0
  %2757 = vmatpush1.bf16.msra.mxu0 0
  %2758 = vmatprep.subr.bf16.mxu0 0
  %2759 = vmatpush1.bf16.msra.mxu0 0
  %2760 = vmatprep.mubr.bf16.mxu0 0
  %2761 = vmatmul.mubr.bf16.gmra.mrb[0].mxu0 %v698
  %v2762 = vpop.f32.mrb[0].mxu0
  %v2763 = vadd.f32 %v2537, %v2762
  %v2764 = vpop.f32.mrb[0].mxu0
  %v2765 = vpop.f32.mrb[0].mxu0
  %v2766 = vpop.f32.mrb[0].mxu0
  %2767 = vdwg.mxu0
  %v2768 = vrcp.pop %v2763
  %2770 = vset.pattern.permute.xlu0 0
  %2771 = vperm.xlu0 %2770, %v2768
  %v2772 = vpop.permute.xlu0 %2771
  %v2774 = vmul.f32 %v2720, %v2772
  %v2775 = vlaneseq
  %v2776 = vshrl.u32 %v2775, 7
  %v2777 = vsub.s32 6, %v2776
  %v2778 = vrot.slane %v54, %v2777
  %v2779 = vadd.f32 %v2774, %v2778
  %vm2780 = vcmp.ge.f32.partialorder %v2779, 0.0
  %v2781 = vmul.f32 %v2779, 0.1
  %v2782 = vsel %vm2780, %v2779, %v2781
  %v2783 = vsel %vm215, %v2782, 0.0
  %2784 = vadd.xlane.f32.xlu0 %v2783
  %v2785 = vpop.xlane.xlu0 %2784
  %v2786 = vmul.f32 %v2785, %v219
  %v2787 = vsub.f32 %v2782, %v2786
  %v2788 = vmul.f32 %v2787, %v2787
  %v2789 = vsel %vm215, %v2788, 0.0
  %2790 = vadd.xlane.f32.xlu0 %v2789
  %v2791 = vpop.xlane.xlu0 %2790
  %v2792 = vmul.f32 %v2791, %v219
  %v2793 = vadd.f32 %v2792, 1e-05
  %v2794 = vrsqrt.pop %v2793
  %v2795 = vmul.f32 %v2787, %v2794
  %v2796 = vlaneseq
  %v2797 = vshrl.u32 %v2796, 7
  %v2798 = vsub.s32 7, %v2797
  %v2799 = vrot.slane %v54, %v2798
  %v2800 = vmul.f32 %v2795, %v2799
  %v2801 = vlaneseq
  %v2802 = vshrl.u32 %v2801, 7
  %v2803 = vsub.s32 0, %v2802
  %v2804 = vrot.slane %v56, %v2803
  %v2805 = vadd.f32 %v2800, %v2804
  %v2806 = vld [vmem:[%s12] sm:$0xff]
  %v2807 = vld [vmem:[%s12 + $0x8] sm:$0xff]
  %v2808 = vld [vmem:[%s12 + $0x10] sm:$0xff]
  %v2809 = vld [vmem:[%s12 + $0x18] sm:$0xff]
  %v2810 = vld [vmem:[%s12 + $0x20] sm:$0xff]
  %v2811 = vld [vmem:[%s12 + $0x28] sm:$0xff]
  %v2812 = vld [vmem:[%s12 + $0x30] sm:$0xff]
  %v2813 = vld [vmem:[%s12 + $0x38] sm:$0xff]
  %v2815 = vsel %vm215, %v2805, 0
  %2817 = vmatprep.subr.mxu0 0.0
  %2818 = vmatpush1.msra.mxu0 %v2806
  %2819 = vmatprep.subr.mxu0 0.0
  %2820 = vmatpush1.msra.mxu0 %v2807
  %2821 = vmatprep.subr.mxu0 0.0
  %2822 = vmatpush1.msra.mxu0 %v2808
  %2823 = vmatprep.subr.mxu0 0.0
  %2824 = vmatpush1.msra.mxu0 %v2809
  %2825 = vmatprep.subr.mxu0 0.0
  %2826 = vmatpush1.msra.mxu0 %v2810
  %2827 = vmatprep.subr.mxu0 0.0
  %2828 = vmatpush1.msra.mxu0 %v2811
  %2829 = vmatprep.subr.mxu0 0.0
  %2830 = vmatpush1.msra.mxu0 %v2812
  %2831 = vmatprep.subr.mxu0 0.0
  %2832 = vmatpush1.msra.mxu0 %v2813
  %2833 = vmatprep.subr.mxu0 0.0
  %2834 = vmatpush1.msra.mxu0 0.0
  %2835 = vmatprep.subr.mxu0 0.0
  %2836 = vmatpush1.msra.mxu0 0.0
  %2837 = vmatprep.subr.mxu0 0.0
  %2838 = vmatpush1.msra.mxu0 0.0
  %2839 = vmatprep.subr.mxu0 0.0
  %2840 = vmatpush1.msra.mxu0 0.0
  %2841 = vmatprep.subr.mxu0 0.0
  %2842 = vmatpush1.msra.mxu0 0.0
  %2843 = vmatprep.subr.mxu0 0.0
  %2844 = vmatpush1.msra.mxu0 0.0
  %2845 = vmatprep.subr.mxu0 0.0
  %2846 = vmatpush1.msra.mxu0 0.0
  %2847 = vmatprep.subr.mxu0 0.0
  %2848 = vmatpush1.msra.mxu0 0.0
  %2849 = vmatprep.subr.mxu0 0.0
  %2850 = vmatpush1.msra.mxu0 0.0
  %2851 = vmatprep.subr.mxu0 0.0
  %2852 = vmatpush1.msra.mxu0 0.0
  %2853 = vmatprep.subr.mxu0 0.0
  %2854 = vmatpush1.msra.mxu0 0.0
  %2855 = vmatprep.subr.mxu0 0.0
  %2856 = vmatpush1.msra.mxu0 0.0
  %2857 = vmatprep.subr.mxu0 0.0
  %2858 = vmatpush1.msra.mxu0 0.0
  %2859 = vmatprep.subr.mxu0 0.0
  %2860 = vmatpush1.msra.mxu0 0.0
  %2861 = vmatprep.subr.mxu0 0.0
  %2862 = vmatpush1.msra.mxu0 0.0
  %2863 = vmatprep.subr.mxu0 0.0
  %2864 = vmatpush1.msra.mxu0 0.0
  %2865 = vmatprep.subr.mxu0 0.0
  %2866 = vmatpush1.msra.mxu0 0.0
  %2867 = vmatprep.subr.mxu0 0.0
  %2868 = vmatpush1.msra.mxu0 0.0
  %2869 = vmatprep.subr.mxu0 0.0
  %2870 = vmatpush1.msra.mxu0 0.0
  %2871 = vmatprep.subr.mxu0 0.0
  %2872 = vmatpush1.msra.mxu0 0.0
  %2873 = vmatprep.subr.mxu0 0.0
  %2874 = vmatpush1.msra.mxu0 0.0
  %2875 = vmatprep.subr.mxu0 0.0
  %2876 = vmatpush1.msra.mxu0 0.0
  %2877 = vmatprep.subr.mxu0 0.0
  %2878 = vmatpush1.msra.mxu0 0.0
  %2879 = vmatprep.subr.mxu0 0.0
  %2880 = vmatpush1.msra.mxu0 0.0
  %2881 = vmatprep.mubr.f32.mxu0 0.0
  %2882 = vmatmul.mubr.f32.gmra.mrb[0].mxu0 %v2815
  %v2883 = vpop.f32.mrb[0].mxu0
  %v2884 = vadd.f32 0.0, %v2883
  %v2885 = vpop.f32.mrb[0].mxu0
  %2886 = vdwg.mxu0
  %v2887 = vld [vmem:[%s12 + $0x40] sm:$0xff]
  %v2888 = vld [vmem:[%s12 + $0x48] sm:$0xff]
  %v2889 = vld [vmem:[%s12 + $0x50] sm:$0xff]
  %v2890 = vld [vmem:[%s12 + $0x58] sm:$0xff]
  %v2891 = vld [vmem:[%s12 + $0x60] sm:$0xff]
  %v2892 = vld [vmem:[%s12 + $0x68] sm:$0xff]
  %v2893 = vld [vmem:[%s12 + $0x70] sm:$0xff]
  %v2894 = vld [vmem:[%s12 + $0x78] sm:$0xff]
  %2895 = vmatprep.subr.mxu0 0.0
  %2896 = vmatpush1.msra.mxu0 %v2887
  %2897 = vmatprep.subr.mxu0 0.0
  %2898 = vmatpush1.msra.mxu0 %v2888
  %2899 = vmatprep.subr.mxu0 0.0
  %2900 = vmatpush1.msra.mxu0 %v2889
  %2901 = vmatprep.subr.mxu0 0.0
  %2902 = vmatpush1.msra.mxu0 %v2890
  %2903 = vmatprep.subr.mxu0 0.0
  %2904 = vmatpush1.msra.mxu0 %v2891
  %2905 = vmatprep.subr.mxu0 0.0
  %2906 = vmatpush1.msra.mxu0 %v2892
  %2907 = vmatprep.subr.mxu0 0.0
  %2908 = vmatpush1.msra.mxu0 %v2893
  %2909 = vmatprep.subr.mxu0 0.0
  %2910 = vmatpush1.msra.mxu0 %v2894
  %2911 = vmatprep.subr.mxu0 0.0
  %2912 = vmatpush1.msra.mxu0 0.0
  %2913 = vmatprep.subr.mxu0 0.0
  %2914 = vmatpush1.msra.mxu0 0.0
  %2915 = vmatprep.subr.mxu0 0.0
  %2916 = vmatpush1.msra.mxu0 0.0
  %2917 = vmatprep.subr.mxu0 0.0
  %2918 = vmatpush1.msra.mxu0 0.0
  %2919 = vmatprep.subr.mxu0 0.0
  %2920 = vmatpush1.msra.mxu0 0.0
  %2921 = vmatprep.subr.mxu0 0.0
  %2922 = vmatpush1.msra.mxu0 0.0
  %2923 = vmatprep.subr.mxu0 0.0
  %2924 = vmatpush1.msra.mxu0 0.0
  %2925 = vmatprep.subr.mxu0 0.0
  %2926 = vmatpush1.msra.mxu0 0.0
  %2927 = vmatprep.subr.mxu0 0.0
  %2928 = vmatpush1.msra.mxu0 0.0
  %2929 = vmatprep.subr.mxu0 0.0
  %2930 = vmatpush1.msra.mxu0 0.0
  %2931 = vmatprep.subr.mxu0 0.0
  %2932 = vmatpush1.msra.mxu0 0.0
  %2933 = vmatprep.subr.mxu0 0.0
  %2934 = vmatpush1.msra.mxu0 0.0
  %2935 = vmatprep.subr.mxu0 0.0
  %2936 = vmatpush1.msra.mxu0 0.0
  %2937 = vmatprep.subr.mxu0 0.0
  %2938 = vmatpush1.msra.mxu0 0.0
  %2939 = vmatprep.subr.mxu0 0.0
  %2940 = vmatpush1.msra.mxu0 0.0
  %2941 = vmatprep.subr.mxu0 0.0
  %2942 = vmatpush1.msra.mxu0 0.0
  %2943 = vmatprep.subr.mxu0 0.0
  %2944 = vmatpush1.msra.mxu0 0.0
  %2945 = vmatprep.subr.mxu0 0.0
  %2946 = vmatpush1.msra.mxu0 0.0
  %2947 = vmatprep.subr.mxu0 0.0
  %2948 = vmatpush1.msra.mxu0 0.0
  %2949 = vmatprep.subr.mxu0 0.0
  %2950 = vmatpush1.msra.mxu0 0.0
  %2951 = vmatprep.subr.mxu0 0.0
  %2952 = vmatpush1.msra.mxu0 0.0
  %2953 = vmatprep.subr.mxu0 0.0
  %2954 = vmatpush1.msra.mxu0 0.0
  %2955 = vmatprep.subr.mxu0 0.0
  %2956 = vmatpush1.msra.mxu0 0.0
  %2957 = vmatprep.subr.mxu0 0.0
  %2958 = vmatpush1.msra.mxu0 0.0
  %2959 = vmatprep.mubr.f32.mxu0 0.0
  %2960 = vmatmul.mubr.f32.gmra.mrb[0].mxu0 %v2815
  %v2961 = vpop.f32.mrb[0].mxu0
  %v2962 = vadd.f32 0.0, %v2961
  %v2963 = vpop.f32.mrb[0].mxu0
  %2964 = vdwg.mxu0
  %v2965 = vld [vmem:[%s12 + $0x80] sm:$0xff]
  %v2966 = vld [vmem:[%s12 + $0x88] sm:$0xff]
  %2967 = vmatprep.subr.mxu0 0.0
  %2968 = vmatpush1.msra.mxu0 %v2965
  %2969 = vmatprep.subr.mxu0 0.0
  %2970 = vmatpush1.msra.mxu0 %v2966
  %2971 = vmatprep.subr.mxu0 0.0
  %2972 = vmatpush1.msra.mxu0 0.0
  %2973 = vmatprep.subr.mxu0 0.0
  %2974 = vmatpush1.msra.mxu0 0.0
  %2975 = vmatprep.subr.mxu0 0.0
  %2976 = vmatpush1.msra.mxu0 0.0
  %2977 = vmatprep.subr.mxu0 0.0
  %2978 = vmatpush1.msra.mxu0 0.0
  %2979 = vmatprep.subr.mxu0 0.0
  %2980 = vmatpush1.msra.mxu0 0.0
  %2981 = vmatprep.subr.mxu0 0.0
  %2982 = vmatpush1.msra.mxu0 0.0
  %2983 = vmatprep.subr.mxu0 0.0
  %2984 = vmatpush1.msra.mxu0 0.0
  %2985 = vmatprep.subr.mxu0 0.0
  %2986 = vmatpush1.msra.mxu0 0.0
  %2987 = vmatprep.subr.mxu0 0.0
  %2988 = vmatpush1.msra.mxu0 0.0
  %2989 = vmatprep.subr.mxu0 0.0
  %2990 = vmatpush1.msra.mxu0 0.0
  %2991 = vmatprep.subr.mxu0 0.0
  %2992 = vmatpush1.msra.mxu0 0.0
  %2993 = vmatprep.subr.mxu0 0.0
  %2994 = vmatpush1.msra.mxu0 0.0
  %2995 = vmatprep.subr.mxu0 0.0
  %2996 = vmatpush1.msra.mxu0 0.0
  %2997 = vmatprep.subr.mxu0 0.0
  %2998 = vmatpush1.msra.mxu0 0.0
  %2999 = vmatprep.subr.mxu0 0.0
  %3000 = vmatpush1.msra.mxu0 0.0
  %3001 = vmatprep.subr.mxu0 0.0
  %3002 = vmatpush1.msra.mxu0 0.0
  %3003 = vmatprep.subr.mxu0 0.0
  %3004 = vmatpush1.msra.mxu0 0.0
  %3005 = vmatprep.subr.mxu0 0.0
  %3006 = vmatpush1.msra.mxu0 0.0
  %3007 = vmatprep.subr.mxu0 0.0
  %3008 = vmatpush1.msra.mxu0 0.0
  %3009 = vmatprep.subr.mxu0 0.0
  %3010 = vmatpush1.msra.mxu0 0.0
  %3011 = vmatprep.subr.mxu0 0.0
  %3012 = vmatpush1.msra.mxu0 0.0
  %3013 = vmatprep.subr.mxu0 0.0
  %3014 = vmatpush1.msra.mxu0 0.0
  %3015 = vmatprep.subr.mxu0 0.0
  %3016 = vmatpush1.msra.mxu0 0.0
  %3017 = vmatprep.subr.mxu0 0.0
  %3018 = vmatpush1.msra.mxu0 0.0
  %3019 = vmatprep.subr.mxu0 0.0
  %3020 = vmatpush1.msra.mxu0 0.0
  %3021 = vmatprep.subr.mxu0 0.0
  %3022 = vmatpush1.msra.mxu0 0.0
  %3023 = vmatprep.subr.mxu0 0.0
  %3024 = vmatpush1.msra.mxu0 0.0
  %3025 = vmatprep.subr.mxu0 0.0
  %3026 = vmatpush1.msra.mxu0 0.0
  %3027 = vmatprep.subr.mxu0 0.0
  %3028 = vmatpush1.msra.mxu0 0.0
  %3029 = vmatprep.subr.mxu0 0.0
  %3030 = vmatpush1.msra.mxu0 0.0
  %3031 = vmatprep.mubr.f32.mxu0 0.0
  %3032 = vmatmul.mubr.f32.gmra.mrb[0].mxu0 %v573
  %v3033 = vpop.f32.mrb[0].mxu0
  %v3034 = vadd.f32 0.0, %v3033
  %v3035 = vpop.f32.mrb[0].mxu0
  %3036 = vmatprep.mubr.f32.mxu0 0.0
  %3037 = vmatmul.mubr.f32.gmra.mrb[0].mxu0 %v576
  %v3038 = vpop.f32.mrb[0].mxu0
  %v3039 = vadd.f32 0.0, %v3038
  %v3040 = vpop.f32.mrb[0].mxu0
  %3041 = vmatprep.mubr.f32.mxu0 0.0
  %3042 = vmatmul.mubr.f32.gmra.mrb[0].mxu0 %v579
  %v3043 = vpop.f32.mrb[0].mxu0
  %v3044 = vadd.f32 0.0, %v3043
  %v3045 = vpop.f32.mrb[0].mxu0
  %3046 = vmatprep.mubr.f32.mxu0 0.0
  %3047 = vmatmul.mubr.f32.gmra.mrb[0].mxu0 %v582
  %v3048 = vpop.f32.mrb[0].mxu0
  %v3049 = vadd.f32 0.0, %v3048
  %v3050 = vpop.f32.mrb[0].mxu0
  %3051 = vmatprep.mubr.f32.mxu0 0.0
  %3052 = vmatmul.mubr.f32.gmra.mrb[0].mxu0 %v585
  %v3053 = vpop.f32.mrb[0].mxu0
  %v3054 = vadd.f32 0.0, %v3053
  %v3055 = vpop.f32.mrb[0].mxu0
  %3056 = vmatprep.mubr.f32.mxu0 0.0
  %3057 = vmatmul.mubr.f32.gmra.mrb[0].mxu0 %v588
  %v3058 = vpop.f32.mrb[0].mxu0
  %v3059 = vadd.f32 0.0, %v3058
  %v3060 = vpop.f32.mrb[0].mxu0
  %3061 = vmatprep.mubr.f32.mxu0 0.0
  %3062 = vmatmul.mubr.f32.gmra.mrb[0].mxu0 %v591
  %v3063 = vpop.f32.mrb[0].mxu0
  %v3064 = vadd.f32 0.0, %v3063
  %v3065 = vpop.f32.mrb[0].mxu0
  %3066 = vdwg.mxu0
  %v3067 = vpack.c.bf16 %v2884, %v2884
  %v3068 = vpack.c.bf16 %v2962, %v2962
  %v3070 = vsel %vm700, %v3068, 0
  %3072 = vmatprep.subr.bf16.mxu0 0
  %3073 = vmatpush1.bf16.msra.mxu0 %v3070
  %3074 = vmatprep.subr.bf16.mxu0 0
  %3075 = vmatpush1.bf16.msra.mxu0 0
  %3076 = vmatprep.subr.bf16.mxu0 0
  %3077 = vmatpush1.bf16.msra.mxu0 0
  %3078 = vmatprep.subr.bf16.mxu0 0
  %3079 = vmatpush1.bf16.msra.mxu0 0
  %3080 = vmatprep.subr.bf16.mxu0 0
  %3081 = vmatpush1.bf16.msra.mxu0 0
  %3082 = vmatprep.subr.bf16.mxu0 0
  %3083 = vmatpush1.bf16.msra.mxu0 0
  %3084 = vmatprep.subr.bf16.mxu0 0
  %3085 = vmatpush1.bf16.msra.mxu0 0
  %3086 = vmatprep.subr.bf16.mxu0 0
  %3087 = vmatpush1.bf16.msra.mxu0 0
  %3088 = vmatprep.subr.bf16.mxu0 0
  %3089 = vmatpush1.bf16.msra.mxu0 0
  %3090 = vmatprep.subr.bf16.mxu0 0
  %3091 = vmatpush1.bf16.msra.mxu0 0
  %3092 = vmatprep.subr.bf16.mxu0 0
  %3093 = vmatpush1.bf16.msra.mxu0 0
  %3094 = vmatprep.subr.bf16.mxu0 0
  %3095 = vmatpush1.bf16.msra.mxu0 0
  %3096 = vmatprep.subr.bf16.mxu0 0
  %3097 = vmatpush1.bf16.msra.mxu0 0
  %3098 = vmatprep.subr.bf16.mxu0 0
  %3099 = vmatpush1.bf16.msra.mxu0 0
  %3100 = vmatprep.subr.bf16.mxu0 0
  %3101 = vmatpush1.bf16.msra.mxu0 0
  %3102 = vmatprep.subr.bf16.mxu0 0
  %3103 = vmatpush1.bf16.msra.mxu0 0
  %3104 = vmatprep.mubr.bf16.mxu0 0
  %3105 = vmatmul.mubr.bf16.gmra.mrb[0].mxu0 %v1010
  %v3106 = vpop.f32.mrb[0].mxu0
  %v3107 = vadd.f32 0.0, %v3106
  %v3108 = vpop.f32.mrb[0].mxu0
  %v3109 = vpop.f32.mrb[0].mxu0
  %v3110 = vadd.f32 0.0, %v3109
  %v3111 = vpop.f32.mrb[0].mxu0
  %3112 = vmatprep.mubr.bf16.mxu0 0
  %3113 = vmatmul.mubr.bf16.gmra.mrb[0].mxu0 %v1013
  %v3114 = vpop.f32.mrb[0].mxu0
  %v3115 = vadd.f32 0.0, %v3114
  %v3116 = vpop.f32.mrb[0].mxu0
  %v3117 = vpop.f32.mrb[0].mxu0
  %v3118 = vadd.f32 0.0, %v3117
  %v3119 = vpop.f32.mrb[0].mxu0
  %3120 = vmatprep.mubr.bf16.mxu0 0
  %3121 = vmatmul.mubr.bf16.gmra.mrb[0].mxu0 %v1016
  %v3122 = vpop.f32.mrb[0].mxu0
  %v3123 = vadd.f32 0.0, %v3122
  %v3124 = vpop.f32.mrb[0].mxu0
  %v3125 = vpop.f32.mrb[0].mxu0
  %v3126 = vadd.f32 0.0, %v3125
  %v3127 = vpop.f32.mrb[0].mxu0
  %3128 = vmatprep.mubr.bf16.mxu0 0
  %3129 = vmatmul.mubr.bf16.gmra.mrb[0].mxu0 %v1019
  %v3130 = vpop.f32.mrb[0].mxu0
  %v3131 = vadd.f32 0.0, %v3130
  %v3132 = vpop.f32.mrb[0].mxu0
  %v3133 = vpop.f32.mrb[0].mxu0
  %v3134 = vpop.f32.mrb[0].mxu0
  %3135 = vdwg.mxu0
  %v3137 = vsel %vm700, %v3067, 0
  %3139 = vmatprep.subr.bf16.mxu0 0
  %3140 = vmatpush1.bf16.msra.mxu0 %v3137
  %3141 = vmatprep.subr.bf16.mxu0 0
  %3142 = vmatpush1.bf16.msra.mxu0 0
  %3143 = vmatprep.subr.bf16.mxu0 0
  %3144 = vmatpush1.bf16.msra.mxu0 0
  %3145 = vmatprep.subr.bf16.mxu0 0
  %3146 = vmatpush1.bf16.msra.mxu0 0
  %3147 = vmatprep.subr.bf16.mxu0 0
  %3148 = vmatpush1.bf16.msra.mxu0 0
  %3149 = vmatprep.subr.bf16.mxu0 0
  %3150 = vmatpush1.bf16.msra.mxu0 0
  %3151 = vmatprep.subr.bf16.mxu0 0
  %3152 = vmatpush1.bf16.msra.mxu0 0
  %3153 = vmatprep.subr.bf16.mxu0 0
  %3154 = vmatpush1.bf16.msra.mxu0 0
  %3155 = vmatprep.subr.bf16.mxu0 0
  %3156 = vmatpush1.bf16.msra.mxu0 0
  %3157 = vmatprep.subr.bf16.mxu0 0
  %3158 = vmatpush1.bf16.msra.mxu0 0
  %3159 = vmatprep.subr.bf16.mxu0 0
  %3160 = vmatpush1.bf16.msra.mxu0 0
  %3161 = vmatprep.subr.bf16.mxu0 0
  %3162 = vmatpush1.bf16.msra.mxu0 0
  %3163 = vmatprep.subr.bf16.mxu0 0
  %3164 = vmatpush1.bf16.msra.mxu0 0
  %3165 = vmatprep.subr.bf16.mxu0 0
  %3166 = vmatpush1.bf16.msra.mxu0 0
  %3167 = vmatprep.subr.bf16.mxu0 0
  %3168 = vmatpush1.bf16.msra.mxu0 0
  %3169 = vmatprep.subr.bf16.mxu0 0
  %3170 = vmatpush1.bf16.msra.mxu0 0
  %3171 = vmatprep.mubr.bf16.mxu0 0
  %3172 = vmatmul.mubr.bf16.gmra.mrb[0].mxu0 %v917
  %v3173 = vpop.f32.mrb[0].mxu0
  %v3174 = vadd.f32 %v3107, %v3173
  %v3175 = vpop.f32.mrb[0].mxu0
  %v3176 = vpop.f32.mrb[0].mxu0
  %v3177 = vadd.f32 %v3110, %v3176
  %v3178 = vpop.f32.mrb[0].mxu0
  %3179 = vmatprep.mubr.bf16.mxu0 0
  %3180 = vmatmul.mubr.bf16.gmra.mrb[0].mxu0 %v920
  %v3181 = vpop.f32.mrb[0].mxu0
  %v3182 = vadd.f32 %v3115, %v3181
  %v3183 = vpop.f32.mrb[0].mxu0
  %v3184 = vpop.f32.mrb[0].mxu0
  %v3185 = vadd.f32 %v3118, %v3184
  %v3186 = vpop.f32.mrb[0].mxu0
  %3187 = vmatprep.mubr.bf16.mxu0 0
  %3188 = vmatmul.mubr.bf16.gmra.mrb[0].mxu0 %v923
  %v3189 = vpop.f32.mrb[0].mxu0
  %v3190 = vadd.f32 %v3123, %v3189
  %v3191 = vpop.f32.mrb[0].mxu0
  %v3192 = vpop.f32.mrb[0].mxu0
  %v3193 = vadd.f32 %v3126, %v3192
  %v3194 = vpop.f32.mrb[0].mxu0
  %3195 = vmatprep.mubr.bf16.mxu0 0
  %3196 = vmatmul.mubr.bf16.gmra.mrb[0].mxu0 %v926
  %v3197 = vpop.f32.mrb[0].mxu0
  %v3198 = vadd.f32 %v3131, %v3197
  %v3199 = vpop.f32.mrb[0].mxu0
  %v3200 = vpop.f32.mrb[0].mxu0
  %v3201 = vpop.f32.mrb[0].mxu0
  %3202 = vdwg.mxu0
  %v3203 = vadd.f32 %v3174, %v3034
  %v3204 = vadd.f32 %v3177, %v3039
  %v3205 = vadd.f32 %v3182, %v3044
  %v3206 = vadd.f32 %v3185, %v3049
  %v3207 = vadd.f32 %v3190, %v3054
  %v3208 = vadd.f32 %v3193, %v3059
  %v3209 = vadd.f32 %v3198, %v3064
  %v3210 = vlaneseq
  %v3211 = vshrl.u32 %v3210, 7
  %v3212 = vsub.s32 1, %v3211
  %v3213 = vrot.slane %v56, %v3212
  %v3214 = vadd.f32 %v3203, %v3213
  %v3215 = vadd.f32 %v3204, %v3213
  %v3216 = vadd.f32 %v3205, %v3213
  %v3217 = vadd.f32 %v3206, %v3213
  %v3218 = vadd.f32 %v3207, %v3213
  %v3219 = vadd.f32 %v3208, %v3213
  %v3220 = vadd.f32 %v3209, %v3213
  %vm3221 = vcmp.ge.f32.partialorder %v3214, 0.0
  %vm3222 = vcmp.ge.f32.partialorder %v3215, 0.0
  %vm3223 = vcmp.ge.f32.partialorder %v3216, 0.0
  %vm3224 = vcmp.ge.f32.partialorder %v3217, 0.0
  %vm3225 = vcmp.ge.f32.partialorder %v3218, 0.0
  %vm3226 = vcmp.ge.f32.partialorder %v3219, 0.0
  %vm3227 = vcmp.ge.f32.partialorder %v3220, 0.0
  %v3228 = vmul.f32 %v3214, 0.1
  %v3229 = vmul.f32 %v3215, 0.1
  %v3230 = vmul.f32 %v3216, 0.1
  %v3231 = vmul.f32 %v3217, 0.1
  %v3232 = vmul.f32 %v3218, 0.1
  %v3233 = vmul.f32 %v3219, 0.1
  %v3234 = vmul.f32 %v3220, 0.1
  %v3235 = vsel %vm3221, %v3214, %v3228
  %v3236 = vsel %vm3222, %v3215, %v3229
  %v3237 = vsel %vm3223, %v3216, %v3230
  %v3238 = vsel %vm3224, %v3217, %v3231
  %v3239 = vsel %vm3225, %v3218, %v3232
  %v3240 = vsel %vm3226, %v3219, %v3233
  %v3241 = vsel %vm3227, %v3220, %v3234
  %v3242 = vld [vmem:[%s13] sm:$0xff]
  %v3243 = vld [vmem:[%s13 + $0x8] sm:$0xff]
  %v3244 = vld [vmem:[%s13 + $0x10] sm:$0xff]
  %v3245 = vld [vmem:[%s13 + $0x18] sm:$0xff]
  %v3246 = vld [vmem:[%s13 + $0x20] sm:$0xff]
  %v3247 = vld [vmem:[%s13 + $0x28] sm:$0xff]
  %v3248 = vld [vmem:[%s13 + $0x30] sm:$0xff]
  %v3249 = vld [vmem:[%s13 + $0x38] sm:$0xff]
  %v3251 = vrot.slane %v56, 7
  %s3252 = vtos %v3251
  %v3253 = vstv %s3252
  %v3256 = vsel %vm215, %v3235, 0
  %v3259 = vsel %vm215, %v3236, 0
  %v3262 = vsel %vm215, %v3237, 0
  %v3265 = vsel %vm215, %v3238, 0
  %v3268 = vsel %vm215, %v3239, 0
  %v3271 = vsel %vm215, %v3240, 0
  %v3274 = vsel %vm215, %v3241, 0
  %3276 = vmatprep.subr.mxu0 0.0
  %3277 = vmatpush1.msra.mxu0 %v3242
  %3278 = vmatprep.subr.mxu0 0.0
  %3279 = vmatpush1.msra.mxu0 %v3243
  %3280 = vmatprep.subr.mxu0 0.0
  %3281 = vmatpush1.msra.mxu0 %v3244
  %3282 = vmatprep.subr.mxu0 0.0
  %3283 = vmatpush1.msra.mxu0 %v3245
  %3284 = vmatprep.subr.mxu0 0.0
  %3285 = vmatpush1.msra.mxu0 %v3246
  %3286 = vmatprep.subr.mxu0 0.0
  %3287 = vmatpush1.msra.mxu0 %v3247
  %3288 = vmatprep.subr.mxu0 0.0
  %3289 = vmatpush1.msra.mxu0 %v3248
  %3290 = vmatprep.subr.mxu0 0.0
  %3291 = vmatpush1.msra.mxu0 %v3249
  %3292 = vmatprep.subr.mxu0 0.0
  %3293 = vmatpush1.msra.mxu0 0.0
  %3294 = vmatprep.subr.mxu0 0.0
  %3295 = vmatpush1.msra.mxu0 0.0
  %3296 = vmatprep.subr.mxu0 0.0
  %3297 = vmatpush1.msra.mxu0 0.0
  %3298 = vmatprep.subr.mxu0 0.0
  %3299 = vmatpush1.msra.mxu0 0.0
  %3300 = vmatprep.subr.mxu0 0.0
  %3301 = vmatpush1.msra.mxu0 0.0
  %3302 = vmatprep.subr.mxu0 0.0
  %3303 = vmatpush1.msra.mxu0 0.0
  %3304 = vmatprep.subr.mxu0 0.0
  %3305 = vmatpush1.msra.mxu0 0.0
  %3306 = vmatprep.subr.mxu0 0.0
  %3307 = vmatpush1.msra.mxu0 0.0
  %3308 = vmatprep.subr.mxu0 0.0
  %3309 = vmatpush1.msra.mxu0 0.0
  %3310 = vmatprep.subr.mxu0 0.0
  %3311 = vmatpush1.msra.mxu0 0.0
  %3312 = vmatprep.subr.mxu0 0.0
  %3313 = vmatpush1.msra.mxu0 0.0
  %3314 = vmatprep.subr.mxu0 0.0
  %3315 = vmatpush1.msra.mxu0 0.0
  %3316 = vmatprep.subr.mxu0 0.0
  %3317 = vmatpush1.msra.mxu0 0.0
  %3318 = vmatprep.subr.mxu0 0.0
  %3319 = vmatpush1.msra.mxu0 0.0
  %3320 = vmatprep.subr.mxu0 0.0
  %3321 = vmatpush1.msra.mxu0 0.0
  %3322 = vmatprep.subr.mxu0 0.0
  %3323 = vmatpush1.msra.mxu0 0.0
  %3324 = vmatprep.subr.mxu0 0.0
  %3325 = vmatpush1.msra.mxu0 0.0
  %3326 = vmatprep.subr.mxu0 0.0
  %3327 = vmatpush1.msra.mxu0 0.0
  %3328 = vmatprep.subr.mxu0 0.0
  %3329 = vmatpush1.msra.mxu0 0.0
  %3330 = vmatprep.subr.mxu0 0.0
  %3331 = vmatpush1.msra.mxu0 0.0
  %3332 = vmatprep.subr.mxu0 0.0
  %3333 = vmatpush1.msra.mxu0 0.0
  %3334 = vmatprep.subr.mxu0 0.0
  %3335 = vmatpush1.msra.mxu0 0.0
  %3336 = vmatprep.subr.mxu0 0.0
  %3337 = vmatpush1.msra.mxu0 0.0
  %3338 = vmatprep.subr.mxu0 0.0
  %3339 = vmatpush1.msra.mxu0 0.0
  %3340 = vmatprep.mubr.f32.mxu0 0.0
  %3341 = vmatmul.mubr.f32.gmra.mrb[0].mxu0 %v3256
  %v3342 = vpop.f32.mrb[0].mxu0
  %v3343 = vadd.f32 %v3253, %v3342
  %v3344 = vpop.f32.mrb[0].mxu0
  %3345 = vmatprep.mubr.f32.mxu0 0.0
  %3346 = vmatmul.mubr.f32.gmra.mrb[0].mxu0 %v3259
  %v3347 = vpop.f32.mrb[0].mxu0
  %v3348 = vadd.f32 %v3253, %v3347
  %v3349 = vpop.f32.mrb[0].mxu0
  %3350 = vmatprep.mubr.f32.mxu0 0.0
  %3351 = vmatmul.mubr.f32.gmra.mrb[0].mxu0 %v3262
  %v3352 = vpop.f32.mrb[0].mxu0
  %v3353 = vadd.f32 %v3253, %v3352
  %v3354 = vpop.f32.mrb[0].mxu0
  %3355 = vmatprep.mubr.f32.mxu0 0.0
  %3356 = vmatmul.mubr.f32.gmra.mrb[0].mxu0 %v3265
  %v3357 = vpop.f32.mrb[0].mxu0
  %v3358 = vadd.f32 %v3253, %v3357
  %v3359 = vpop.f32.mrb[0].mxu0
  %3360 = vmatprep.mubr.f32.mxu0 0.0
  %3361 = vmatmul.mubr.f32.gmra.mrb[0].mxu0 %v3268
  %v3362 = vpop.f32.mrb[0].mxu0
  %v3363 = vadd.f32 %v3253, %v3362
  %v3364 = vpop.f32.mrb[0].mxu0
  %3365 = vmatprep.mubr.f32.mxu0 0.0
  %3366 = vmatmul.mubr.f32.gmra.mrb[0].mxu0 %v3271
  %v3367 = vpop.f32.mrb[0].mxu0
  %v3368 = vadd.f32 %v3253, %v3367
  %v3369 = vpop.f32.mrb[0].mxu0
  %3370 = vmatprep.mubr.f32.mxu0 0.0
  %3371 = vmatmul.mubr.f32.gmra.mrb[0].mxu0 %v3274
  %v3372 = vpop.f32.mrb[0].mxu0
  %v3373 = vadd.f32 %v3253, %v3372
  %v3374 = vpop.f32.mrb[0].mxu0
  %3375 = vdwg.mxu0
  %3376 = vst [vmem:[%s16] sm:$0xff] %v3343
  %3377 = vst [vmem:[%s16 + $0x8] sm:$0xff] %v3348
  %3378 = vst [vmem:[%s16 + $0x10] sm:$0xff] %v3353
  %3379 = vst [vmem:[%s16 + $0x18] sm:$0xff] %v3358
  %3380 = vst [vmem:[%s16 + $0x20] sm:$0xff] %v3363
  %3381 = vst [vmem:[%s16 + $0x28] sm:$0xff] %v3368
  %3382 = vst [vmem:[%s16 + $0x30] sm:$0xff] %v3373
  // Predicated region
  $region66: #{tsp_gnn_forward.1} parent=0 // pred_check
    _
  $region67: #{tsp_gnn_forward.1} parent=0 // pred_check_branch
    %3384 = sbr.rel (0) target = $region69
  $region68: #{tsp_gnn_forward.1} parent=0 // pred_region
    _
  $region69: #{tsp_gnn_forward.1} parent=0 // pred_fallthru
    _
  // Predicated region
  $region70: #{tsp_gnn_forward.1} parent=0 // pred_check
    _
  $region71: #{tsp_gnn_forward.1} parent=0 // pred_check_branch
    %3386 = sbr.rel (0) target = $region73
  $region72: #{tsp_gnn_forward.1} parent=0 // pred_region
    _
  $region73: #{tsp_gnn_forward.1} parent=0 // pred_fallthru
    _

</llo_original>
